<compile_context>
chip_gen: v6e
topology: v6e:2x2x1
jax: 0.10.0
libtpu: 0.0.40
codegen_flags: <defaults>
</compile_context>

<pallas_src>
import math

import numpy as np
import jax
import jax.numpy as jnp
from jax.experimental import pallas as pl
from jax.experimental.pallas import tpu as pltpu

# --- M5 architecture constants (PyTorch module defaults) ---
N_INPUT = 1
N_OUTPUT = 35
N_CHANNEL = 32
STRIDE = 16
K1 = 80           # conv1 kernel size
K = 3             # conv2..4 kernel size
POOL = 4
BN_EPS = 1e-5


def _rup8(n):
    return -(-n // 8) * 8


def _geometry(B, L, stride=STRIDE):
    """Static per-layer lengths for waveform length L and batch B."""
    assert L % stride == 0 and K1 % stride == 0
    Lr = L // stride
    nphase = K1 // stride
    geom = []
    Lout = Lr - (nphase - 1)            # conv1 output length (stride folded)
    for li in range(4):
        Lp = Lout // POOL               # MaxPool1d(4) floor-truncates
        assert Lp >= 1, "waveform too short for M5"
        geom.append(dict(Lout=Lout, Lp=Lp,
                         win=B * Lout - (POOL - 1), ncols=B * Lp))
        if li < 3:
            Lout = Lp - (K - 1)
    return geom


# --------------------------------- kernel -----------------------------------

def _m5_kernel(x_ref, wts_ref, pvec_ref, sels_ref, o_ref):
    # x_ref   : (B, stride, L//stride) f32   phase-major waveform
    # wts_ref : (5, 64, 192) bf16            padded slabs: conv1 flat, conv2..4
    #                                        K-fused flats, FC weight
    # pvec_ref: (64, 9) f32                  cols: g1,b1,g2,b2,g3,b3,g4,b4,fc_b
    # sels_ref: (sum_i rup8(win_i), max ncols) bf16   pool select matrices
    # o_ref   : (N_OUTPUT, B) f32            per-class log-probs (transposed)
    f32, bf16 = jnp.float32, jnp.bfloat16
    B = x_ref.shape[0]
    stride = x_ref.shape[1]
    Lr = x_ref.shape[2]
    nphase = K1 // stride
    C2 = 2 * N_CHANNEL

    # ---- unpack packed parameter buffers (static sub-slabs) ----
    w1 = wts_ref[0][:N_CHANNEL, :K1]              # (32, 80)   bf16
    w2 = wts_ref[1][:N_CHANNEL, :K * N_CHANNEL]   # (32, 96)
    w3 = wts_ref[2][:C2, :K * N_CHANNEL]          # (64, 96)
    w4 = wts_ref[3][:C2, :K * C2]                 # (64, 192)
    wf = wts_ref[4][:N_OUTPUT, :C2]               # (35, 64)
    pv = pvec_ref[...]                            # (64, 9) f32
    chans = (N_CHANNEL, N_CHANNEL, C2, C2)
    gammas = [pv[:chans[i], 2 * i:2 * i + 1] for i in range(4)]
    betas = [pv[:chans[i], 2 * i + 1:2 * i + 2] for i in range(4)]
    fc_bias = pv[:N_OUTPUT, 8:9]                  # (35, 1)

    def bn_relu_pool(y, li, sel_off, Lout):
        """Train-mode BN + ReLU + MaxPool1d(4), batch-fused along lanes.

        y: (C, B*Lout) f32 conv pre-activation.  Returns (C, B*(Lout//4)) f32.
        Cross-batch contamination of the windowed max only happens at lanes
        the (block-structured) select matrix never picks, so the batch-fused
        pool is exact.
        """
        ntot = y.shape[1]                          # B*Lout
        inv_n = 1.0 / ntot
        tot = jnp.sum(y, axis=1, keepdims=True)
        tot2 = jnp.sum(y * y, axis=1, keepdims=True)
        mean = tot * inv_n
        var = jnp.maximum(tot2 * inv_n - mean * mean, 0.0)   # biased variance
        scale = gammas[li] * jax.lax.rsqrt(var + BN_EPS)
        shift = betas[li] - mean * scale
        a = jnp.maximum(y * scale + shift, 0.0)              # BN + ReLU (f32)
        win = ntot - (POOL - 1)
        ncols = B * (Lout // POOL)
        m = a[:, 0:win]                                      # windowed max
        for j in range(1, POOL):
            m = jnp.maximum(m, a[:, j:j + win])
        sel = sels_ref[sel_off:sel_off + win, 0:ncols]       # bf16 0/1
        return jnp.dot(m.astype(bf16), sel, preferred_element_type=f32)

    # ---- conv1: K=80, stride=16 as ONE (32,80)x(80,B*Lout) matmul ----------
    Lout = Lr - (nphase - 1)
    parts = []
    for b in range(B):
        xb = x_ref[b].astype(bf16)                           # (stride, Lr)
        parts.append(jnp.concatenate(
            [xb[:, j:j + Lout] for j in range(nphase)], axis=0))   # (80, Lout)
    rhs = jnp.concatenate(parts, axis=1)                     # (80, B*Lout)
    y = jnp.dot(w1, rhs, preferred_element_type=f32)         # (32, B*Lout)

    sel_off = 0
    acts = bn_relu_pool(y, 0, sel_off, Lout)
    sel_off += _rup8(B * Lout - (POOL - 1))
    Lp = Lout // POOL

    # ---- conv2..4: K taps fused into contraction, batch fused into lanes ---
    for li, w in ((1, w2), (2, w3), (3, w4)):
        Lin = Lp
        Lout = Lin - (K - 1)
        parts = []
        for b in range(B):
            xb = acts[:, b * Lin:(b + 1) * Lin].astype(bf16)     # (Cin, Lin)
            parts.append(jnp.concatenate(
                [xb[:, k:k + Lout] for k in range(K)], axis=0))  # (K*Cin, Lout)
        rhs = jnp.concatenate(parts, axis=1)                 # (K*Cin, B*Lout)
        y = jnp.dot(w, rhs, preferred_element_type=f32)      # (Cout, B*Lout)
        acts = bn_relu_pool(y, li, sel_off, Lout)
        sel_off += _rup8(B * Lout - (POOL - 1))
        Lp = Lout // POOL

    # ---- head: global avg pool + Linear + log_softmax, both batches at once
    zs = [jnp.mean(acts[:, b * Lp:(b + 1) * Lp], axis=1, keepdims=True)
          for b in range(B)]
    z = jnp.concatenate(zs, axis=1)                          # (C2, B) f32
    logits = jnp.dot(wf, z.astype(bf16),
                     preferred_element_type=f32) + fc_bias   # (N_OUTPUT, B)
    mx = jnp.max(logits, axis=0, keepdims=True)
    lse = mx + jnp.log(jnp.sum(jnp.exp(logits - mx), axis=0, keepdims=True))
    o_ref[...] = logits - lse


# ------------------------------ wrappers -------------------------------------

def pack_params(params, B, L, stride=STRIDE):
    """Repack PyTorch-layout params + pool selectors into 3 kernel buffers.

    Done once, outside the per-forward path.  (The pool-selector buffer depends
    on the static batch size B and waveform length L.)
    """
    def flat_k(w):                       # (Cout, Cin, K) -> (Cout, K*Cin)
        w = np.asarray(w, np.float32)
        return np.transpose(w, (0, 2, 1)).reshape(w.shape[0], -1)

    w1 = np.asarray(params["conv1"][0], np.float32)
    assert w1.shape[1] == N_INPUT, "conv1 expects n_input == 1"
    mats = [w1.reshape(w1.shape[0], -1),               # (32, 80)
            flat_k(params["conv2"][0]),                # (32, 96)
            flat_k(params["conv3"][0]),                # (64, 96)
            flat_k(params["conv4"][0]),                # (64, 192)
            np.asarray(params["fc1"][0], np.float32)]  # (35, 64)
    R = max(m.shape[0] for m in mats)
    Ccol = max(m.shape[1] for m in mats)
    wts = np.zeros((len(mats), R, Ccol), np.float32)
    for i, m in enumerate(mats):
        wts[i, :m.shape[0], :m.shape[1]] = m

    # f32 vector params as sublane columns: BN gammas/betas + FC bias.
    # Conv biases are intentionally dropped: they cancel exactly under
    # train-mode BatchNorm mean subtraction.
    cols = []
    for name in ("bn1", "bn2", "bn3", "bn4"):
        g, bta = params[name]
        cols += [np.asarray(g, np.float32), np.asarray(bta, np.float32)]
    cols.append(np.asarray(params["fc1"][1], np.float32))
    Rp = max(c.shape[0] for c in cols)
    pvec = np.zeros((Rp, len(cols)), np.float32)
    for j, c in enumerate(cols):
        pvec[:c.shape[0], j] = c

    # MaxPool1d(4) stride-4 selection matrices over the batch-fused lane axis
    # (block structure per batch), sublane-stacked with 8-aligned starts.
    geom = _geometry(B, L, stride)
    rows = sum(_rup8(g["win"]) for g in geom)
    cols_max = max(g["ncols"] for g in geom)
    sels = np.zeros((rows, cols_max), np.float32)
    off = 0
    for g in geom:
        Lout, Lp = g["Lout"], g["Lp"]
        for b in range(B):
            for j in range(Lp):
                sels[off + b * Lout + POOL * j, b * Lp + j] = 1.0
        off += _rup8(g["win"])

    return {"wts": jnp.asarray(wts, jnp.bfloat16),
            "pvec": jnp.asarray(pvec, jnp.float32),
            "sels": jnp.asarray(sels, jnp.bfloat16)}


def m5_forward(packed, x_ncl):
    # x_ncl: (B, 1, L), PyTorch NCL layout.
    x = x_ncl.astype(jnp.float32)
    B, cin, L = x.shape
    assert cin == N_INPUT and L % STRIDE == 0
    Lr = L // STRIDE
    # Phase-major layout: x_t[b, i, r] = x[b, 0, r*STRIDE + i]  -> (B, 16, Lr)
    x_t = jnp.transpose(x.reshape(B, Lr, STRIDE), (0, 2, 1))

    out = pl.pallas_call(
        _m5_kernel,
        out_shape=jax.ShapeDtypeStruct((N_OUTPUT, B), jnp.float32),
        in_specs=[pl.BlockSpec(memory_space=pltpu.MemorySpace.VMEM)] * 4,
        out_specs=pl.BlockSpec(memory_space=pltpu.MemorySpace.VMEM),
    )(x_t, packed["wts"], packed["pvec"], packed["sels"])
    # PyTorch: avg_pool -> permute(0,2,1) -> Linear -> log_softmax => (B,1,35)
    return jnp.transpose(out)[:, None, :]


# --------------------------- pure-JAX reference -------------------------------

def m5_reference(params, x):
    """f32 reference of the PyTorch module (train-mode BatchNorm)."""
    def bn_relu(h, g, b):
        mean = jnp.mean(h, axis=(0, 2), keepdims=True)
        var = jnp.mean((h - mean) ** 2, axis=(0, 2), keepdims=True)
        h = (h - mean) * jax.lax.rsqrt(var + BN_EPS)
        return jnp.maximum(h * g[None, :, None] + b[None, :, None], 0.0)

    def pool(h):
        Bn, C, Lh = h.shape
        Lp = Lh // POOL
        return jnp.max(h[:, :, :Lp * POOL].reshape(Bn, C, Lp, POOL), axis=-1)

    h = x
    for i, name in enumerate(("conv1", "conv2", "conv3", "conv4")):
        w, b = params[name]
        h = jax.lax.conv_general_dilated(
            h, w, (STRIDE if i == 0 else 1,), "VALID",
            dimension_numbers=("NCH", "OIH", "NCH")) + b[None, :, None]
        h = bn_relu(h, *params["bn%d" % (i + 1)])
        h = pool(h)
    z = jnp.mean(h, axis=-1)                                  # (B, C4)
    logits = z @ params["fc1"][0].T + params["fc1"][1]
    return jax.nn.log_softmax(logits, axis=-1)[:, None, :]


# --------------------------- parameter init ---------------------------------

def init_params(key, n_input=N_INPUT, n_output=N_OUTPUT, n_channel=N_CHANNEL):
    def conv_init(k, cout, cin, ksz):
        fan_in = cin * ksz
        bound = 1.0 / math.sqrt(fan_in)
        kw, kb = jax.random.split(k)
        w = jax.random.uniform(kw, (cout, cin, ksz), jnp.float32, -bound, bound)
        b = jax.random.uniform(kb, (cout,), jnp.float32, -bound, bound)
        return w, b

    keys = jax.random.split(key, 5)
    p = {}
    p["conv1"] = conv_init(keys[0], n_channel, n_input, K1)
    p["conv2"] = conv_init(keys[1], n_channel, n_channel, K)
    p["conv3"] = conv_init(keys[2], 2 * n_channel, n_channel, K)
    p["conv4"] = conv_init(keys[3], 2 * n_channel, 2 * n_channel, K)

    kw, kb = jax.random.split(keys[4])
    fan_in = 2 * n_channel
    bound = 1.0 / math.sqrt(fan_in)
    p["fc1"] = (jax.random.uniform(kw, (n_output, fan_in), jnp.float32, -bound, bound),
                jax.random.uniform(kb, (n_output,), jnp.float32, -bound, bound))

    # BatchNorm affine params (PyTorch defaults: weight=1, bias=0).
    p["bn1"] = (jnp.ones((n_channel,), jnp.float32), jnp.zeros((n_channel,), jnp.float32))
    p["bn2"] = (jnp.ones((n_channel,), jnp.float32), jnp.zeros((n_channel,), jnp.float32))
    p["bn3"] = (jnp.ones((2 * n_channel,), jnp.float32), jnp.zeros((2 * n_channel,), jnp.float32))
    p["bn4"] = (jnp.ones((2 * n_channel,), jnp.float32), jnp.zeros((2 * n_channel,), jnp.float32))
    return p


# --------------------------------- main --------------------------------------

if __name__ == "__main__":
    key = jax.random.PRNGKey(0)
    pkey, xkey = jax.random.split(key)
    params = init_params(pkey)

    # Smallest convenient waveform length that survives all 4 conv/pool stages:
    # 8000 -> conv1:496 -> pool:124 -> conv2:122 -> pool:30 -> conv3:28
    #      -> pool:7 -> conv4:5 -> pool:1 -> avg_pool:1
    B, L = 2, 8000
    packed = pack_params(params, B=B, L=L)     # host-side repacking, done once
    x = jax.random.normal(xkey, (B, N_INPUT, L), jnp.float32)  # (B, Cin, L)

    y = jax.jit(m5_forward)(packed, x)
    jax.block_until_ready(y)
    assert y.shape == (B, 1, N_OUTPUT), y.shape
    # log-softmax rows must (exp-)sum to ~1
    assert jnp.allclose(jnp.sum(jnp.exp(y), axis=-1), 1.0, atol=1e-4)
    # Compare against the f32 pure-JAX reference (bf16 MXU path -> loose tol).
    y_ref = jax.jit(m5_reference)(params, x)
    assert jnp.allclose(y, y_ref, atol=0.1), float(jnp.max(jnp.abs(y - y_ref)))
    print("KERNEL_OK")
</pallas_src>

<mosaic_0001>
module attributes {stable_mosaic.version = 11 : i64} {
  func.func @_m5_kernel(%arg0: memref<2x16x500xf32, #tpu.memory_space<vmem>>, %arg1: memref<5x64x192xbf16, #tpu.memory_space<vmem>>, %arg2: memref<64x9xf32, #tpu.memory_space<vmem>>, %arg3: memref<1304x248xbf16, #tpu.memory_space<vmem>>, %arg4: memref<35x2xf32, #tpu.memory_space<vmem>>) attributes {dimension_semantics = [], scalar_prefetch = 0 : i64, scratch_operands = 0 : i64, tpu.core_type = #tpu.core_type<tc>} {
    %c0 = arith.constant 0 : index
    %c0_0 = arith.constant 0 : index
    %c0_1 = arith.constant 0 : index
    %0 = vector.load %arg1[%c0, %c0_0, %c0_1] : memref<5x64x192xbf16, #tpu.memory_space<vmem>>, vector<1x64x192xbf16>
    %1 = vector.shape_cast %0 : vector<1x64x192xbf16> to vector<64x192xbf16>
    %2 = vector.extract_strided_slice %1 {offsets = [0, 0], sizes = [32, 80], strides = [1, 1]} : vector<64x192xbf16> to vector<32x80xbf16>
    %c1 = arith.constant 1 : index
    %c0_2 = arith.constant 0 : index
    %c0_3 = arith.constant 0 : index
    %3 = vector.load %arg1[%c1, %c0_2, %c0_3] : memref<5x64x192xbf16, #tpu.memory_space<vmem>>, vector<1x64x192xbf16>
    %4 = vector.shape_cast %3 : vector<1x64x192xbf16> to vector<64x192xbf16>
    %5 = vector.extract_strided_slice %4 {offsets = [0, 0], sizes = [32, 96], strides = [1, 1]} : vector<64x192xbf16> to vector<32x96xbf16>
    %c2 = arith.constant 2 : index
    %c0_4 = arith.constant 0 : index
    %c0_5 = arith.constant 0 : index
    %6 = vector.load %arg1[%c2, %c0_4, %c0_5] : memref<5x64x192xbf16, #tpu.memory_space<vmem>>, vector<1x64x192xbf16>
    %7 = vector.shape_cast %6 : vector<1x64x192xbf16> to vector<64x192xbf16>
    %8 = vector.extract_strided_slice %7 {offsets = [0, 0], sizes = [64, 96], strides = [1, 1]} : vector<64x192xbf16> to vector<64x96xbf16>
    %c3 = arith.constant 3 : index
    %c0_6 = arith.constant 0 : index
    %c0_7 = arith.constant 0 : index
    %9 = vector.load %arg1[%c3, %c0_6, %c0_7] : memref<5x64x192xbf16, #tpu.memory_space<vmem>>, vector<1x64x192xbf16>
    %10 = vector.shape_cast %9 : vector<1x64x192xbf16> to vector<64x192xbf16>
    %c4 = arith.constant 4 : index
    %c0_8 = arith.constant 0 : index
    %c0_9 = arith.constant 0 : index
    %11 = vector.load %arg1[%c4, %c0_8, %c0_9] : memref<5x64x192xbf16, #tpu.memory_space<vmem>>, vector<1x64x192xbf16>
    %12 = vector.shape_cast %11 : vector<1x64x192xbf16> to vector<64x192xbf16>
    %13 = vector.extract_strided_slice %12 {offsets = [0, 0], sizes = [35, 64], strides = [1, 1]} : vector<64x192xbf16> to vector<35x64xbf16>
    %c0_10 = arith.constant 0 : index
    %c0_11 = arith.constant 0 : index
    %14 = vector.load %arg2[%c0_10, %c0_11] : memref<64x9xf32, #tpu.memory_space<vmem>>, vector<64x9xf32>
    %15 = vector.extract_strided_slice %14 {offsets = [0, 0], sizes = [32, 1], strides = [1, 1]} : vector<64x9xf32> to vector<32x1xf32>
    %16 = vector.extract_strided_slice %14 {offsets = [0, 2], sizes = [32, 1], strides = [1, 1]} : vector<64x9xf32> to vector<32x1xf32>
    %17 = vector.extract_strided_slice %14 {offsets = [0, 4], sizes = [64, 1], strides = [1, 1]} : vector<64x9xf32> to vector<64x1xf32>
    %18 = vector.extract_strided_slice %14 {offsets = [0, 6], sizes = [64, 1], strides = [1, 1]} : vector<64x9xf32> to vector<64x1xf32>
    %19 = vector.extract_strided_slice %14 {offsets = [0, 1], sizes = [32, 1], strides = [1, 1]} : vector<64x9xf32> to vector<32x1xf32>
    %20 = vector.extract_strided_slice %14 {offsets = [0, 3], sizes = [32, 1], strides = [1, 1]} : vector<64x9xf32> to vector<32x1xf32>
    %21 = vector.extract_strided_slice %14 {offsets = [0, 5], sizes = [64, 1], strides = [1, 1]} : vector<64x9xf32> to vector<64x1xf32>
    %22 = vector.extract_strided_slice %14 {offsets = [0, 7], sizes = [64, 1], strides = [1, 1]} : vector<64x9xf32> to vector<64x1xf32>
    %23 = vector.extract_strided_slice %14 {offsets = [0, 8], sizes = [35, 1], strides = [1, 1]} : vector<64x9xf32> to vector<35x1xf32>
    %c0_12 = arith.constant 0 : index
    %c0_13 = arith.constant 0 : index
    %c0_14 = arith.constant 0 : index
    %24 = vector.load %arg0[%c0_12, %c0_13, %c0_14] : memref<2x16x500xf32, #tpu.memory_space<vmem>>, vector<1x16x500xf32>
    %25 = vector.shape_cast %24 : vector<1x16x500xf32> to vector<16x500xf32>
    %26 = arith.truncf %25 : vector<16x500xf32> to vector<16x500xbf16>
    %27 = vector.extract_strided_slice %26 {offsets = [0, 0], sizes = [16, 496], strides = [1, 1]} : vector<16x500xbf16> to vector<16x496xbf16>
    %28 = vector.extract_strided_slice %26 {offsets = [0, 1], sizes = [16, 496], strides = [1, 1]} : vector<16x500xbf16> to vector<16x496xbf16>
    %29 = vector.extract_strided_slice %26 {offsets = [0, 2], sizes = [16, 496], strides = [1, 1]} : vector<16x500xbf16> to vector<16x496xbf16>
    %30 = vector.extract_strided_slice %26 {offsets = [0, 3], sizes = [16, 496], strides = [1, 1]} : vector<16x500xbf16> to vector<16x496xbf16>
    %31 = vector.extract_strided_slice %26 {offsets = [0, 4], sizes = [16, 496], strides = [1, 1]} : vector<16x500xbf16> to vector<16x496xbf16>
    %32 = tpu.concatenate %27, %28, %29, %30, %31 in 0 : vector<16x496xbf16>, vector<16x496xbf16>, vector<16x496xbf16>, vector<16x496xbf16>, vector<16x496xbf16> -> vector<80x496xbf16>
    %c1_15 = arith.constant 1 : index
    %c0_16 = arith.constant 0 : index
    %c0_17 = arith.constant 0 : index
    %33 = vector.load %arg0[%c1_15, %c0_16, %c0_17] : memref<2x16x500xf32, #tpu.memory_space<vmem>>, vector<1x16x500xf32>
    %34 = vector.shape_cast %33 : vector<1x16x500xf32> to vector<16x500xf32>
    %35 = arith.truncf %34 : vector<16x500xf32> to vector<16x500xbf16>
    %36 = vector.extract_strided_slice %35 {offsets = [0, 0], sizes = [16, 496], strides = [1, 1]} : vector<16x500xbf16> to vector<16x496xbf16>
    %37 = vector.extract_strided_slice %35 {offsets = [0, 1], sizes = [16, 496], strides = [1, 1]} : vector<16x500xbf16> to vector<16x496xbf16>
    %38 = vector.extract_strided_slice %35 {offsets = [0, 2], sizes = [16, 496], strides = [1, 1]} : vector<16x500xbf16> to vector<16x496xbf16>
    %39 = vector.extract_strided_slice %35 {offsets = [0, 3], sizes = [16, 496], strides = [1, 1]} : vector<16x500xbf16> to vector<16x496xbf16>
    %40 = vector.extract_strided_slice %35 {offsets = [0, 4], sizes = [16, 496], strides = [1, 1]} : vector<16x500xbf16> to vector<16x496xbf16>
    %41 = tpu.concatenate %36, %37, %38, %39, %40 in 0 : vector<16x496xbf16>, vector<16x496xbf16>, vector<16x496xbf16>, vector<16x496xbf16>, vector<16x496xbf16> -> vector<80x496xbf16>
    %42 = tpu.concatenate %32, %41 in 1 : vector<80x496xbf16>, vector<80x496xbf16> -> vector<80x992xbf16>
    %cst = arith.constant dense<0.000000e+00> : vector<32x992xf32>
    %43 = tpu.matmul %2, %42, %cst {dimension_numbers = #tpu.dot_dimension_numbers<[1], [0], [0], [1], [0, 0, 1, 1], [], []>} : vector<32x80xbf16>, vector<80x992xbf16>, vector<32x992xf32> -> vector<32x992xf32>
    %cst_18 = arith.constant dense<0.000000e+00> : vector<32xf32>
    %44 = vector.multi_reduction <add>, %43, %cst_18 [1] : vector<32x992xf32> to vector<32xf32>
    %45 = vector.shape_cast %44 : vector<32xf32> to vector<32x1xf32>
    %46 = arith.mulf %43, %43 : vector<32x992xf32>
    %cst_19 = arith.constant dense<0.000000e+00> : vector<32xf32>
    %47 = vector.multi_reduction <add>, %46, %cst_19 [1] : vector<32x992xf32> to vector<32xf32>
    %48 = vector.shape_cast %47 : vector<32xf32> to vector<32x1xf32>
    %cst_20 = arith.constant 0.00100806449 : f32
    %49 = vector.broadcast %cst_20 : f32 to vector<32x1xf32>
    %50 = arith.mulf %45, %49 : vector<32x1xf32>
    %cst_21 = arith.constant 0.00100806449 : f32
    %51 = vector.broadcast %cst_21 : f32 to vector<32x1xf32>
    %52 = arith.mulf %48, %51 : vector<32x1xf32>
    %53 = arith.mulf %50, %50 : vector<32x1xf32>
    %54 = arith.subf %52, %53 : vector<32x1xf32>
    %cst_22 = arith.constant 0.000000e+00 : f32
    %55 = vector.broadcast %cst_22 : f32 to vector<32x1xf32>
    %56 = arith.maximumf %54, %55 : vector<32x1xf32>
    %cst_23 = arith.constant 9.99999974E-6 : f32
    %57 = vector.broadcast %cst_23 : f32 to vector<32x1xf32>
    %58 = arith.addf %56, %57 : vector<32x1xf32>
    %59 = math.rsqrt %58 : vector<32x1xf32>
    %60 = arith.mulf %15, %59 : vector<32x1xf32>
    %61 = arith.mulf %50, %60 : vector<32x1xf32>
    %62 = arith.subf %19, %61 : vector<32x1xf32>
    %63 = vector.broadcast %60 : vector<32x1xf32> to vector<32x992xf32>
    %64 = arith.mulf %43, %63 : vector<32x992xf32>
    %65 = vector.broadcast %62 : vector<32x1xf32> to vector<32x992xf32>
    %66 = arith.addf %64, %65 : vector<32x992xf32>
    %cst_24 = arith.constant 0.000000e+00 : f32
    %67 = vector.broadcast %cst_24 : f32 to vector<32x992xf32>
    %68 = arith.maximumf %66, %67 : vector<32x992xf32>
    %69 = vector.extract_strided_slice %68 {offsets = [0, 0], sizes = [32, 989], strides = [1, 1]} : vector<32x992xf32> to vector<32x989xf32>
    %70 = vector.extract_strided_slice %68 {offsets = [0, 1], sizes = [32, 989], strides = [1, 1]} : vector<32x992xf32> to vector<32x989xf32>
    %71 = arith.maximumf %69, %70 : vector<32x989xf32>
    %72 = vector.extract_strided_slice %68 {offsets = [0, 2], sizes = [32, 989], strides = [1, 1]} : vector<32x992xf32> to vector<32x989xf32>
    %73 = arith.maximumf %71, %72 : vector<32x989xf32>
    %74 = vector.extract_strided_slice %68 {offsets = [0, 3], sizes = [32, 989], strides = [1, 1]} : vector<32x992xf32> to vector<32x989xf32>
    %75 = arith.maximumf %73, %74 : vector<32x989xf32>
    %c0_25 = arith.constant 0 : index
    %c0_26 = arith.constant 0 : index
    %76 = vector.load %arg3[%c0_25, %c0_26] : memref<1304x248xbf16, #tpu.memory_space<vmem>>, vector<989x248xbf16>
    %77 = arith.truncf %75 : vector<32x989xf32> to vector<32x989xbf16>
    %cst_27 = arith.constant dense<0.000000e+00> : vector<32x248xf32>
    %78 = tpu.matmul %77, %76, %cst_27 {dimension_numbers = #tpu.dot_dimension_numbers<[1], [0], [0], [1], [0, 0, 1, 1], [], []>} : vector<32x989xbf16>, vector<989x248xbf16>, vector<32x248xf32> -> vector<32x248xf32>
    %79 = vector.extract_strided_slice %78 {offsets = [0, 0], sizes = [32, 124], strides = [1, 1]} : vector<32x248xf32> to vector<32x124xf32>
    %80 = arith.truncf %79 : vector<32x124xf32> to vector<32x124xbf16>
    %81 = vector.extract_strided_slice %80 {offsets = [0, 0], sizes = [32, 122], strides = [1, 1]} : vector<32x124xbf16> to vector<32x122xbf16>
    %82 = vector.extract_strided_slice %80 {offsets = [0, 1], sizes = [32, 122], strides = [1, 1]} : vector<32x124xbf16> to vector<32x122xbf16>
    %83 = vector.extract_strided_slice %80 {offsets = [0, 2], sizes = [32, 122], strides = [1, 1]} : vector<32x124xbf16> to vector<32x122xbf16>
    %84 = tpu.concatenate %81, %82, %83 in 0 : vector<32x122xbf16>, vector<32x122xbf16>, vector<32x122xbf16> -> vector<96x122xbf16>
    %85 = vector.extract_strided_slice %78 {offsets = [0, 124], sizes = [32, 124], strides = [1, 1]} : vector<32x248xf32> to vector<32x124xf32>
    %86 = arith.truncf %85 : vector<32x124xf32> to vector<32x124xbf16>
    %87 = vector.extract_strided_slice %86 {offsets = [0, 0], sizes = [32, 122], strides = [1, 1]} : vector<32x124xbf16> to vector<32x122xbf16>
    %88 = vector.extract_strided_slice %86 {offsets = [0, 1], sizes = [32, 122], strides = [1, 1]} : vector<32x124xbf16> to vector<32x122xbf16>
    %89 = vector.extract_strided_slice %86 {offsets = [0, 2], sizes = [32, 122], strides = [1, 1]} : vector<32x124xbf16> to vector<32x122xbf16>
    %90 = tpu.concatenate %87, %88, %89 in 0 : vector<32x122xbf16>, vector<32x122xbf16>, vector<32x122xbf16> -> vector<96x122xbf16>
    %91 = tpu.concatenate %84, %90 in 1 : vector<96x122xbf16>, vector<96x122xbf16> -> vector<96x244xbf16>
    %cst_28 = arith.constant dense<0.000000e+00> : vector<32x244xf32>
    %92 = tpu.matmul %5, %91, %cst_28 {dimension_numbers = #tpu.dot_dimension_numbers<[1], [0], [0], [1], [0, 0, 1, 1], [], []>} : vector<32x96xbf16>, vector<96x244xbf16>, vector<32x244xf32> -> vector<32x244xf32>
    %cst_29 = arith.constant dense<0.000000e+00> : vector<32xf32>
    %93 = vector.multi_reduction <add>, %92, %cst_29 [1] : vector<32x244xf32> to vector<32xf32>
    %94 = vector.shape_cast %93 : vector<32xf32> to vector<32x1xf32>
    %95 = arith.mulf %92, %92 : vector<32x244xf32>
    %cst_30 = arith.constant dense<0.000000e+00> : vector<32xf32>
    %96 = vector.multi_reduction <add>, %95, %cst_30 [1] : vector<32x244xf32> to vector<32xf32>
    %97 = vector.shape_cast %96 : vector<32xf32> to vector<32x1xf32>
    %cst_31 = arith.constant 0.00409836043 : f32
    %98 = vector.broadcast %cst_31 : f32 to vector<32x1xf32>
    %99 = arith.mulf %94, %98 : vector<32x1xf32>
    %cst_32 = arith.constant 0.00409836043 : f32
    %100 = vector.broadcast %cst_32 : f32 to vector<32x1xf32>
    %101 = arith.mulf %97, %100 : vector<32x1xf32>
    %102 = arith.mulf %99, %99 : vector<32x1xf32>
    %103 = arith.subf %101, %102 : vector<32x1xf32>
    %cst_33 = arith.constant 0.000000e+00 : f32
    %104 = vector.broadcast %cst_33 : f32 to vector<32x1xf32>
    %105 = arith.maximumf %103, %104 : vector<32x1xf32>
    %cst_34 = arith.constant 9.99999974E-6 : f32
    %106 = vector.broadcast %cst_34 : f32 to vector<32x1xf32>
    %107 = arith.addf %105, %106 : vector<32x1xf32>
    %108 = math.rsqrt %107 : vector<32x1xf32>
    %109 = arith.mulf %16, %108 : vector<32x1xf32>
    %110 = arith.mulf %99, %109 : vector<32x1xf32>
    %111 = arith.subf %20, %110 : vector<32x1xf32>
    %112 = vector.broadcast %109 : vector<32x1xf32> to vector<32x244xf32>
    %113 = arith.mulf %92, %112 : vector<32x244xf32>
    %114 = vector.broadcast %111 : vector<32x1xf32> to vector<32x244xf32>
    %115 = arith.addf %113, %114 : vector<32x244xf32>
    %cst_35 = arith.constant 0.000000e+00 : f32
    %116 = vector.broadcast %cst_35 : f32 to vector<32x244xf32>
    %117 = arith.maximumf %115, %116 : vector<32x244xf32>
    %118 = vector.extract_strided_slice %117 {offsets = [0, 0], sizes = [32, 241], strides = [1, 1]} : vector<32x244xf32> to vector<32x241xf32>
    %119 = vector.extract_strided_slice %117 {offsets = [0, 1], sizes = [32, 241], strides = [1, 1]} : vector<32x244xf32> to vector<32x241xf32>
    %120 = arith.maximumf %118, %119 : vector<32x241xf32>
    %121 = vector.extract_strided_slice %117 {offsets = [0, 2], sizes = [32, 241], strides = [1, 1]} : vector<32x244xf32> to vector<32x241xf32>
    %122 = arith.maximumf %120, %121 : vector<32x241xf32>
    %123 = vector.extract_strided_slice %117 {offsets = [0, 3], sizes = [32, 241], strides = [1, 1]} : vector<32x244xf32> to vector<32x241xf32>
    %124 = arith.maximumf %122, %123 : vector<32x241xf32>
    %c992 = arith.constant 992 : index
    %c0_36 = arith.constant 0 : index
    %125 = vector.load %arg3[%c992, %c0_36] : memref<1304x248xbf16, #tpu.memory_space<vmem>>, vector<241x60xbf16>
    %126 = arith.truncf %124 : vector<32x241xf32> to vector<32x241xbf16>
    %cst_37 = arith.constant dense<0.000000e+00> : vector<32x60xf32>
    %127 = tpu.matmul %126, %125, %cst_37 {dimension_numbers = #tpu.dot_dimension_numbers<[1], [0], [0], [1], [0, 0, 1, 1], [], []>} : vector<32x241xbf16>, vector<241x60xbf16>, vector<32x60xf32> -> vector<32x60xf32>
    %128 = vector.extract_strided_slice %127 {offsets = [0, 0], sizes = [32, 30], strides = [1, 1]} : vector<32x60xf32> to vector<32x30xf32>
    %129 = arith.truncf %128 : vector<32x30xf32> to vector<32x30xbf16>
    %130 = vector.extract_strided_slice %129 {offsets = [0, 0], sizes = [32, 28], strides = [1, 1]} : vector<32x30xbf16> to vector<32x28xbf16>
    %131 = vector.extract_strided_slice %129 {offsets = [0, 1], sizes = [32, 28], strides = [1, 1]} : vector<32x30xbf16> to vector<32x28xbf16>
    %132 = vector.extract_strided_slice %129 {offsets = [0, 2], sizes = [32, 28], strides = [1, 1]} : vector<32x30xbf16> to vector<32x28xbf16>
    %133 = tpu.concatenate %130, %131, %132 in 0 : vector<32x28xbf16>, vector<32x28xbf16>, vector<32x28xbf16> -> vector<96x28xbf16>
    %134 = vector.extract_strided_slice %127 {offsets = [0, 30], sizes = [32, 30], strides = [1, 1]} : vector<32x60xf32> to vector<32x30xf32>
    %135 = arith.truncf %134 : vector<32x30xf32> to vector<32x30xbf16>
    %136 = vector.extract_strided_slice %135 {offsets = [0, 0], sizes = [32, 28], strides = [1, 1]} : vector<32x30xbf16> to vector<32x28xbf16>
    %137 = vector.extract_strided_slice %135 {offsets = [0, 1], sizes = [32, 28], strides = [1, 1]} : vector<32x30xbf16> to vector<32x28xbf16>
    %138 = vector.extract_strided_slice %135 {offsets = [0, 2], sizes = [32, 28], strides = [1, 1]} : vector<32x30xbf16> to vector<32x28xbf16>
    %139 = tpu.concatenate %136, %137, %138 in 0 : vector<32x28xbf16>, vector<32x28xbf16>, vector<32x28xbf16> -> vector<96x28xbf16>
    %140 = tpu.concatenate %133, %139 in 1 : vector<96x28xbf16>, vector<96x28xbf16> -> vector<96x56xbf16>
    %cst_38 = arith.constant dense<0.000000e+00> : vector<64x56xf32>
    %141 = tpu.matmul %8, %140, %cst_38 {dimension_numbers = #tpu.dot_dimension_numbers<[1], [0], [0], [1], [0, 0, 1, 1], [], []>} : vector<64x96xbf16>, vector<96x56xbf16>, vector<64x56xf32> -> vector<64x56xf32>
    %cst_39 = arith.constant dense<0.000000e+00> : vector<64xf32>
    %142 = vector.multi_reduction <add>, %141, %cst_39 [1] : vector<64x56xf32> to vector<64xf32>
    %143 = vector.shape_cast %142 : vector<64xf32> to vector<64x1xf32>
    %144 = arith.mulf %141, %141 : vector<64x56xf32>
    %cst_40 = arith.constant dense<0.000000e+00> : vector<64xf32>
    %145 = vector.multi_reduction <add>, %144, %cst_40 [1] : vector<64x56xf32> to vector<64xf32>
    %146 = vector.shape_cast %145 : vector<64xf32> to vector<64x1xf32>
    %cst_41 = arith.constant 0.0178571437 : f32
    %147 = vector.broadcast %cst_41 : f32 to vector<64x1xf32>
    %148 = arith.mulf %143, %147 : vector<64x1xf32>
    %cst_42 = arith.constant 0.0178571437 : f32
    %149 = vector.broadcast %cst_42 : f32 to vector<64x1xf32>
    %150 = arith.mulf %146, %149 : vector<64x1xf32>
    %151 = arith.mulf %148, %148 : vector<64x1xf32>
    %152 = arith.subf %150, %151 : vector<64x1xf32>
    %cst_43 = arith.constant 0.000000e+00 : f32
    %153 = vector.broadcast %cst_43 : f32 to vector<64x1xf32>
    %154 = arith.maximumf %152, %153 : vector<64x1xf32>
    %cst_44 = arith.constant 9.99999974E-6 : f32
    %155 = vector.broadcast %cst_44 : f32 to vector<64x1xf32>
    %156 = arith.addf %154, %155 : vector<64x1xf32>
    %157 = math.rsqrt %156 : vector<64x1xf32>
    %158 = arith.mulf %17, %157 : vector<64x1xf32>
    %159 = arith.mulf %148, %158 : vector<64x1xf32>
    %160 = arith.subf %21, %159 : vector<64x1xf32>
    %161 = vector.broadcast %158 : vector<64x1xf32> to vector<64x56xf32>
    %162 = arith.mulf %141, %161 : vector<64x56xf32>
    %163 = vector.broadcast %160 : vector<64x1xf32> to vector<64x56xf32>
    %164 = arith.addf %162, %163 : vector<64x56xf32>
    %cst_45 = arith.constant 0.000000e+00 : f32
    %165 = vector.broadcast %cst_45 : f32 to vector<64x56xf32>
    %166 = arith.maximumf %164, %165 : vector<64x56xf32>
    %167 = vector.extract_strided_slice %166 {offsets = [0, 0], sizes = [64, 53], strides = [1, 1]} : vector<64x56xf32> to vector<64x53xf32>
    %168 = vector.extract_strided_slice %166 {offsets = [0, 1], sizes = [64, 53], strides = [1, 1]} : vector<64x56xf32> to vector<64x53xf32>
    %169 = arith.maximumf %167, %168 : vector<64x53xf32>
    %170 = vector.extract_strided_slice %166 {offsets = [0, 2], sizes = [64, 53], strides = [1, 1]} : vector<64x56xf32> to vector<64x53xf32>
    %171 = arith.maximumf %169, %170 : vector<64x53xf32>
    %172 = vector.extract_strided_slice %166 {offsets = [0, 3], sizes = [64, 53], strides = [1, 1]} : vector<64x56xf32> to vector<64x53xf32>
    %173 = arith.maximumf %171, %172 : vector<64x53xf32>
    %c1240 = arith.constant 1240 : index
    %c0_46 = arith.constant 0 : index
    %174 = vector.load %arg3[%c1240, %c0_46] : memref<1304x248xbf16, #tpu.memory_space<vmem>>, vector<53x14xbf16>
    %175 = arith.truncf %173 : vector<64x53xf32> to vector<64x53xbf16>
    %cst_47 = arith.constant dense<0.000000e+00> : vector<64x14xf32>
    %176 = tpu.matmul %175, %174, %cst_47 {dimension_numbers = #tpu.dot_dimension_numbers<[1], [0], [0], [1], [0, 0, 1, 1], [], []>} : vector<64x53xbf16>, vector<53x14xbf16>, vector<64x14xf32> -> vector<64x14xf32>
    %177 = vector.extract_strided_slice %176 {offsets = [0, 0], sizes = [64, 7], strides = [1, 1]} : vector<64x14xf32> to vector<64x7xf32>
    %178 = arith.truncf %177 : vector<64x7xf32> to vector<64x7xbf16>
    %179 = vector.extract_strided_slice %178 {offsets = [0, 0], sizes = [64, 5], strides = [1, 1]} : vector<64x7xbf16> to vector<64x5xbf16>
    %180 = vector.extract_strided_slice %178 {offsets = [0, 1], sizes = [64, 5], strides = [1, 1]} : vector<64x7xbf16> to vector<64x5xbf16>
    %181 = vector.extract_strided_slice %178 {offsets = [0, 2], sizes = [64, 5], strides = [1, 1]} : vector<64x7xbf16> to vector<64x5xbf16>
    %182 = tpu.concatenate %179, %180, %181 in 0 : vector<64x5xbf16>, vector<64x5xbf16>, vector<64x5xbf16> -> vector<192x5xbf16>
    %183 = vector.extract_strided_slice %176 {offsets = [0, 7], sizes = [64, 7], strides = [1, 1]} : vector<64x14xf32> to vector<64x7xf32>
    %184 = arith.truncf %183 : vector<64x7xf32> to vector<64x7xbf16>
    %185 = vector.extract_strided_slice %184 {offsets = [0, 0], sizes = [64, 5], strides = [1, 1]} : vector<64x7xbf16> to vector<64x5xbf16>
    %186 = vector.extract_strided_slice %184 {offsets = [0, 1], sizes = [64, 5], strides = [1, 1]} : vector<64x7xbf16> to vector<64x5xbf16>
    %187 = vector.extract_strided_slice %184 {offsets = [0, 2], sizes = [64, 5], strides = [1, 1]} : vector<64x7xbf16> to vector<64x5xbf16>
    %188 = tpu.concatenate %185, %186, %187 in 0 : vector<64x5xbf16>, vector<64x5xbf16>, vector<64x5xbf16> -> vector<192x5xbf16>
    %189 = tpu.concatenate %182, %188 in 1 : vector<192x5xbf16>, vector<192x5xbf16> -> vector<192x10xbf16>
    %cst_48 = arith.constant dense<0.000000e+00> : vector<64x10xf32>
    %190 = tpu.matmul %10, %189, %cst_48 {dimension_numbers = #tpu.dot_dimension_numbers<[1], [0], [0], [1], [0, 0, 1, 1], [], []>} : vector<64x192xbf16>, vector<192x10xbf16>, vector<64x10xf32> -> vector<64x10xf32>
    %cst_49 = arith.constant dense<0.000000e+00> : vector<64xf32>
    %191 = vector.multi_reduction <add>, %190, %cst_49 [1] : vector<64x10xf32> to vector<64xf32>
    %192 = vector.shape_cast %191 : vector<64xf32> to vector<64x1xf32>
    %193 = arith.mulf %190, %190 : vector<64x10xf32>
    %cst_50 = arith.constant dense<0.000000e+00> : vector<64xf32>
    %194 = vector.multi_reduction <add>, %193, %cst_50 [1] : vector<64x10xf32> to vector<64xf32>
    %195 = vector.shape_cast %194 : vector<64xf32> to vector<64x1xf32>
    %cst_51 = arith.constant 1.000000e-01 : f32
    %196 = vector.broadcast %cst_51 : f32 to vector<64x1xf32>
    %197 = arith.mulf %192, %196 : vector<64x1xf32>
    %cst_52 = arith.constant 1.000000e-01 : f32
    %198 = vector.broadcast %cst_52 : f32 to vector<64x1xf32>
    %199 = arith.mulf %195, %198 : vector<64x1xf32>
    %200 = arith.mulf %197, %197 : vector<64x1xf32>
    %201 = arith.subf %199, %200 : vector<64x1xf32>
    %cst_53 = arith.constant 0.000000e+00 : f32
    %202 = vector.broadcast %cst_53 : f32 to vector<64x1xf32>
    %203 = arith.maximumf %201, %202 : vector<64x1xf32>
    %cst_54 = arith.constant 9.99999974E-6 : f32
    %204 = vector.broadcast %cst_54 : f32 to vector<64x1xf32>
    %205 = arith.addf %203, %204 : vector<64x1xf32>
    %206 = math.rsqrt %205 : vector<64x1xf32>
    %207 = arith.mulf %18, %206 : vector<64x1xf32>
    %208 = arith.mulf %197, %207 : vector<64x1xf32>
    %209 = arith.subf %22, %208 : vector<64x1xf32>
    %210 = vector.broadcast %207 : vector<64x1xf32> to vector<64x10xf32>
    %211 = arith.mulf %190, %210 : vector<64x10xf32>
    %212 = vector.broadcast %209 : vector<64x1xf32> to vector<64x10xf32>
    %213 = arith.addf %211, %212 : vector<64x10xf32>
    %cst_55 = arith.constant 0.000000e+00 : f32
    %214 = vector.broadcast %cst_55 : f32 to vector<64x10xf32>
    %215 = arith.maximumf %213, %214 : vector<64x10xf32>
    %216 = vector.extract_strided_slice %215 {offsets = [0, 0], sizes = [64, 7], strides = [1, 1]} : vector<64x10xf32> to vector<64x7xf32>
    %217 = vector.extract_strided_slice %215 {offsets = [0, 1], sizes = [64, 7], strides = [1, 1]} : vector<64x10xf32> to vector<64x7xf32>
    %218 = arith.maximumf %216, %217 : vector<64x7xf32>
    %219 = vector.extract_strided_slice %215 {offsets = [0, 2], sizes = [64, 7], strides = [1, 1]} : vector<64x10xf32> to vector<64x7xf32>
    %220 = arith.maximumf %218, %219 : vector<64x7xf32>
    %221 = vector.extract_strided_slice %215 {offsets = [0, 3], sizes = [64, 7], strides = [1, 1]} : vector<64x10xf32> to vector<64x7xf32>
    %222 = arith.maximumf %220, %221 : vector<64x7xf32>
    %c1296 = arith.constant 1296 : index
    %c0_56 = arith.constant 0 : index
    %223 = vector.load %arg3[%c1296, %c0_56] : memref<1304x248xbf16, #tpu.memory_space<vmem>>, vector<7x2xbf16>
    %224 = arith.truncf %222 : vector<64x7xf32> to vector<64x7xbf16>
    %cst_57 = arith.constant dense<0.000000e+00> : vector<64x2xf32>
    %225 = tpu.matmul %224, %223, %cst_57 {dimension_numbers = #tpu.dot_dimension_numbers<[1], [0], [0], [1], [0, 0, 1, 1], [], []>} : vector<64x7xbf16>, vector<7x2xbf16>, vector<64x2xf32> -> vector<64x2xf32>
    %226 = vector.extract_strided_slice %225 {offsets = [0, 0], sizes = [64, 1], strides = [1, 1]} : vector<64x2xf32> to vector<64x1xf32>
    %cst_58 = arith.constant dense<0.000000e+00> : vector<64xf32>
    %227 = vector.multi_reduction <add>, %226, %cst_58 [1] : vector<64x1xf32> to vector<64xf32>
    %228 = vector.shape_cast %227 : vector<64xf32> to vector<64x1xf32>
    %cst_59 = arith.constant 1.000000e+00 : f32
    %229 = vector.broadcast %cst_59 : f32 to vector<64x1xf32>
    %230 = arith.divf %228, %229 : vector<64x1xf32>
    %231 = vector.extract_strided_slice %225 {offsets = [0, 1], sizes = [64, 1], strides = [1, 1]} : vector<64x2xf32> to vector<64x1xf32>
    %cst_60 = arith.constant dense<0.000000e+00> : vector<64xf32>
    %232 = vector.multi_reduction <add>, %231, %cst_60 [1] : vector<64x1xf32> to vector<64xf32>
    %233 = vector.shape_cast %232 : vector<64xf32> to vector<64x1xf32>
    %cst_61 = arith.constant 1.000000e+00 : f32
    %234 = vector.broadcast %cst_61 : f32 to vector<64x1xf32>
    %235 = arith.divf %233, %234 : vector<64x1xf32>
    %236 = tpu.concatenate %230, %235 in 1 : vector<64x1xf32>, vector<64x1xf32> -> vector<64x2xf32>
    %237 = arith.truncf %236 : vector<64x2xf32> to vector<64x2xbf16>
    %cst_62 = arith.constant dense<0.000000e+00> : vector<35x2xf32>
    %238 = tpu.matmul %13, %237, %cst_62 {dimension_numbers = #tpu.dot_dimension_numbers<[1], [0], [0], [1], [0, 0, 1, 1], [], []>} : vector<35x64xbf16>, vector<64x2xbf16>, vector<35x2xf32> -> vector<35x2xf32>
    %239 = vector.broadcast %23 : vector<35x1xf32> to vector<35x2xf32>
    %240 = arith.addf %238, %239 : vector<35x2xf32>
    %cst_63 = arith.constant dense<0xFF800000> : vector<2xf32>
    %241 = vector.multi_reduction <maximumf>, %240, %cst_63 [0] : vector<35x2xf32> to vector<2xf32>
    %242 = vector.shape_cast %241 : vector<2xf32> to vector<1x2xf32>
    %243 = vector.broadcast %242 : vector<1x2xf32> to vector<35x2xf32>
    %244 = arith.subf %240, %243 : vector<35x2xf32>
    %245 = math.exp %244 : vector<35x2xf32>
    %cst_64 = arith.constant dense<0.000000e+00> : vector<2xf32>
    %246 = vector.multi_reduction <add>, %245, %cst_64 [0] : vector<35x2xf32> to vector<2xf32>
    %247 = vector.shape_cast %246 : vector<2xf32> to vector<1x2xf32>
    %248 = math.log %247 : vector<1x2xf32>
    %249 = arith.addf %242, %248 : vector<1x2xf32>
    %250 = vector.broadcast %249 : vector<1x2xf32> to vector<35x2xf32>
    %251 = arith.subf %240, %250 : vector<35x2xf32>
    %c0_65 = arith.constant 0 : index
    %c0_66 = arith.constant 0 : index
    %252 = vector.load %arg4[%c0_65, %c0_66] : memref<35x2xf32, #tpu.memory_space<vmem>>, vector<35x2xf32>
    tpu.vector_store %arg4[%c0_65, %c0_66], %251 {strides = array<i32>} : memref<35x2xf32, #tpu.memory_space<vmem>>, vector<35x2xf32>,
    return
  }
}

</mosaic_0001>

<llo_original>
// kernel: m5_forward.1
$region0: #{m5_forward.1}
  #allocation0 [shape = 'u32[]', space=smem, size = 0x4, offset = 0x4, fixed_abs, tag = 'smem constant byte address 0x4 - core index']
  #allocation1 [shape = 'u32[144,128]{1,0:T(1,128)}', space=vmem, size = 0x12000, scoped, tag = 'internal scratch']
  %s0 = inlined_call_operand.vmem [shape: f32[2,16,500], index: 0, kind: input, shape index: {}]
  %s1 = inlined_call_operand.vmem [shape: bf16[5,64,192], index: 1, kind: input, shape index: {}]
  %s2 = inlined_call_operand.vmem [shape: f32[64,9], index: 2, kind: input, shape index: {}]
  %s3 = inlined_call_operand.vmem [shape: bf16[1304,248], index: 3, kind: input, shape index: {}]
  %s4 = inlined_call_operand.vmem [shape: f32[35,2], index: 4, kind: output, shape index: {}]
  %s5 = sld [smem:[#allocation0]]
  $region26: #{m5_forward.1} parent=0
    _
  %s7 = ssub.s32 1, %s5
  %s8 = scalar_select 0, %s7, %s5
  // Predicated region
  $region2: #{m5_forward.1} parent=0 // pred_check
    _
  $region3: #{m5_forward.1} parent=0 // pred_check_branch
    %10 = sbr.rel (0) target = $region5
  $region4: #{m5_forward.1} parent=0 // pred_region
    _
  $region5: #{m5_forward.1} parent=0 // pred_fallthru
    _
  // Predicated region
  $region6: #{m5_forward.1} parent=0 // pred_check
    _
  $region7: #{m5_forward.1} parent=0 // pred_check_branch
    %12 = sbr.rel (0) target = $region9
  $region8: #{m5_forward.1} parent=0 // pred_region
    _
  $region9: #{m5_forward.1} parent=0 // pred_fallthru
    _
  // Predicated region
  $region10: #{m5_forward.1} parent=0 // pred_check
    _
  $region11: #{m5_forward.1} parent=0 // pred_check_branch
    %14 = sbr.rel (0) target = $region13
  $region12: #{m5_forward.1} parent=0 // pred_region
    _
  $region13: #{m5_forward.1} parent=0 // pred_fallthru
    _
  // Predicated region
  $region14: #{m5_forward.1} parent=0 // pred_check
    _
  $region15: #{m5_forward.1} parent=0 // pred_check_branch
    %16 = sbr.rel (0) target = $region17
  $region16: #{m5_forward.1} parent=0 // pred_region
    _
  $region17: #{m5_forward.1} parent=0 // pred_fallthru
    _
  %v18 = vld [vmem:[%s1] sm:$0xff]
  %v19 = vld [vmem:[%s1 + $0x8] sm:$0xff]
  %v20 = vld [vmem:[%s1 + $0x10] sm:$0xff]
  %v21 = vld [vmem:[%s1 + $0x18] sm:$0xff]
  %s22 = scalar_lea.vmem %s1, 64
  %v23 = vld [vmem:[%s22] sm:$0xff]
  %v24 = vld [vmem:[%s22 + $0x8] sm:$0xff]
  %v25 = vld [vmem:[%s22 + $0x10] sm:$0xff]
  %v26 = vld [vmem:[%s22 + $0x18] sm:$0xff]
  %s27 = scalar_lea.vmem %s1, 128
  %v28 = vld [vmem:[%s27] sm:$0xff]
  %v29 = vld [vmem:[%s27 + $0x8] sm:$0xff]
  %v30 = vld [vmem:[%s27 + $0x10] sm:$0xff]
  %v31 = vld [vmem:[%s27 + $0x18] sm:$0xff]
  %v32 = vld [vmem:[%s27 + $0x20] sm:$0xff]
  %v33 = vld [vmem:[%s27 + $0x28] sm:$0xff]
  %v34 = vld [vmem:[%s27 + $0x30] sm:$0xff]
  %v35 = vld [vmem:[%s27 + $0x38] sm:$0xff]
  %s36 = scalar_lea.vmem %s1, 192
  %v37 = vld [vmem:[%s36] sm:$0xff]
  %v38 = vld [vmem:[%s36 + $0x8] sm:$0xff]
  %v39 = vld [vmem:[%s36 + $0x10] sm:$0xff]
  %v40 = vld [vmem:[%s36 + $0x18] sm:$0xff]
  %v41 = vld [vmem:[%s36 + $0x20] sm:$0xff]
  %v42 = vld [vmem:[%s36 + $0x28] sm:$0xff]
  %v43 = vld [vmem:[%s36 + $0x30] sm:$0xff]
  %v44 = vld [vmem:[%s36 + $0x38] sm:$0xff]
  %s45 = scalar_lea.vmem %s1, 256
  %v46 = vld [vmem:[%s45] sm:$0xff]
  %v47 = vld [vmem:[%s45 + $0x8] sm:$0xff]
  %v48 = vld [vmem:[%s45 + $0x10] sm:$0xff]
  %v49 = vld [vmem:[%s45 + $0x18] sm:$0xff]
  %v50 = vld [vmem:[%s45 + $0x20] sm:$0xff]
  %v51 = vld [vmem:[%s2] sm:$0xff]
  %v52 = vld [vmem:[%s2 + $0x8] sm:$0xff]
  %v53 = vld [vmem:[%s2 + $0x10] sm:$0xff]
  %v54 = vld [vmem:[%s2 + $0x18] sm:$0xff]
  %v55 = vld [vmem:[%s2 + $0x20] sm:$0xff]
  %v56 = vld [vmem:[%s2 + $0x28] sm:$0xff]
  %v57 = vld [vmem:[%s2 + $0x30] sm:$0xff]
  %v58 = vld [vmem:[%s2 + $0x38] sm:$0xff]
  %v59 = vld [vmem:[%s0] sm:$0xff]
  %v60 = vld [vmem:[%s0 + $0x8] sm:$0xff]
  %v61 = vld [vmem:[%s0 + $0x10] sm:$0xff]
  %v62 = vld [vmem:[%s0 + $0x18] sm:$0xff]
  %v63 = vld [vmem:[%s0 + $0x20] sm:$0xff]
  %v64 = vld [vmem:[%s0 + $0x28] sm:$0xff]
  %v65 = vld [vmem:[%s0 + $0x30] sm:$0xff]
  %v66 = vld [vmem:[%s0 + $0x38] sm:$0xff]
  %v67 = vpack.c.bf16 %v63, %v59
  %v68 = vpack.c.bf16 %v64, %v60
  %v69 = vpack.c.bf16 %v65, %v61
  %v70 = vpack.c.bf16 %v66, %v62
  %75 = vrot.lane.b32.xlu0 %v67, 127
  %v76 = vpop.permute.xlu0 %75
  %77 = vrot.lane.b32.xlu0 %v68, 127
  %v78 = vpop.permute.xlu0 %77
  %79 = vrot.lane.b32.xlu0 %v69, 127
  %v80 = vpop.permute.xlu0 %79
  %81 = vrot.lane.b32.xlu0 %v70, 127
  %v82 = vpop.permute.xlu0 %81
  %vm83 = vcmask 1039360
  %v84 = vsel %vm83, %v76, %v78
  %v85 = vsel %vm83, %v78, %v80
  %v86 = vsel %vm83, %v80, %v82
  %90 = vrot.lane.b32.xlu0 %v67, 126
  %v91 = vpop.permute.xlu0 %90
  %92 = vrot.lane.b32.xlu0 %v68, 126
  %v93 = vpop.permute.xlu0 %92
  %94 = vrot.lane.b32.xlu0 %v69, 126
  %v95 = vpop.permute.xlu0 %94
  %96 = vrot.lane.b32.xlu0 %v70, 126
  %v97 = vpop.permute.xlu0 %96
  %vm98 = vcmask 1031168
  %v99 = vsel %vm98, %v91, %v93
  %v100 = vsel %vm98, %v93, %v95
  %v101 = vsel %vm98, %v95, %v97
  %105 = vrot.lane.b32.xlu0 %v67, 125
  %v106 = vpop.permute.xlu0 %105
  %107 = vrot.lane.b32.xlu0 %v68, 125
  %v108 = vpop.permute.xlu0 %107
  %109 = vrot.lane.b32.xlu0 %v69, 125
  %v110 = vpop.permute.xlu0 %109
  %111 = vrot.lane.b32.xlu0 %v70, 125
  %v112 = vpop.permute.xlu0 %111
  %vm113 = vcmask 1022976
  %v114 = vsel %vm113, %v106, %v108
  %v115 = vsel %vm113, %v108, %v110
  %v116 = vsel %vm113, %v110, %v112
  %120 = vrot.lane.b32.xlu0 %v67, 124
  %v121 = vpop.permute.xlu0 %120
  %122 = vrot.lane.b32.xlu0 %v68, 124
  %v123 = vpop.permute.xlu0 %122
  %124 = vrot.lane.b32.xlu0 %v69, 124
  %v125 = vpop.permute.xlu0 %124
  %126 = vrot.lane.b32.xlu0 %v70, 124
  %v127 = vpop.permute.xlu0 %126
  %vm128 = vcmask 1014784
  %v129 = vsel %vm128, %v121, %v123
  %v130 = vsel %vm128, %v123, %v125
  %v131 = vsel %vm128, %v125, %v127
  %s135 = scalar_lea.vmem %s0, 64
  %v136 = vld [vmem:[%s135] sm:$0xff]
  %v137 = vld [vmem:[%s135 + $0x8] sm:$0xff]
  %v138 = vld [vmem:[%s135 + $0x10] sm:$0xff]
  %v139 = vld [vmem:[%s135 + $0x18] sm:$0xff]
  %v140 = vld [vmem:[%s135 + $0x20] sm:$0xff]
  %v141 = vld [vmem:[%s135 + $0x28] sm:$0xff]
  %v142 = vld [vmem:[%s135 + $0x30] sm:$0xff]
  %v143 = vld [vmem:[%s135 + $0x38] sm:$0xff]
  %v144 = vpack.c.bf16 %v140, %v136
  %v145 = vpack.c.bf16 %v141, %v137
  %v146 = vpack.c.bf16 %v142, %v138
  %v147 = vpack.c.bf16 %v143, %v139
  %152 = vrot.lane.b32.xlu0 %v144, 127
  %v153 = vpop.permute.xlu0 %152
  %154 = vrot.lane.b32.xlu0 %v145, 127
  %v155 = vpop.permute.xlu0 %154
  %156 = vrot.lane.b32.xlu0 %v146, 127
  %v157 = vpop.permute.xlu0 %156
  %158 = vrot.lane.b32.xlu0 %v147, 127
  %v159 = vpop.permute.xlu0 %158
  %v160 = vsel %vm83, %v153, %v155
  %v161 = vsel %vm83, %v155, %v157
  %v162 = vsel %vm83, %v157, %v159
  %163 = vrot.lane.b32.xlu0 %v144, 126
  %v164 = vpop.permute.xlu0 %163
  %165 = vrot.lane.b32.xlu0 %v145, 126
  %v166 = vpop.permute.xlu0 %165
  %167 = vrot.lane.b32.xlu0 %v146, 126
  %v168 = vpop.permute.xlu0 %167
  %169 = vrot.lane.b32.xlu0 %v147, 126
  %v170 = vpop.permute.xlu0 %169
  %v171 = vsel %vm98, %v164, %v166
  %v172 = vsel %vm98, %v166, %v168
  %v173 = vsel %vm98, %v168, %v170
  %174 = vrot.lane.b32.xlu0 %v144, 125
  %v175 = vpop.permute.xlu0 %174
  %176 = vrot.lane.b32.xlu0 %v145, 125
  %v177 = vpop.permute.xlu0 %176
  %178 = vrot.lane.b32.xlu0 %v146, 125
  %v179 = vpop.permute.xlu0 %178
  %180 = vrot.lane.b32.xlu0 %v147, 125
  %v181 = vpop.permute.xlu0 %180
  %v182 = vsel %vm113, %v175, %v177
  %v183 = vsel %vm113, %v177, %v179
  %v184 = vsel %vm113, %v179, %v181
  %185 = vrot.lane.b32.xlu0 %v144, 124
  %v186 = vpop.permute.xlu0 %185
  %187 = vrot.lane.b32.xlu0 %v145, 124
  %v188 = vpop.permute.xlu0 %187
  %189 = vrot.lane.b32.xlu0 %v146, 124
  %v190 = vpop.permute.xlu0 %189
  %191 = vrot.lane.b32.xlu0 %v147, 124
  %v192 = vpop.permute.xlu0 %191
  %v193 = vsel %vm128, %v186, %v188
  %v194 = vsel %vm128, %v188, %v190
  %v195 = vsel %vm128, %v190, %v192
  %196 = vrot.lane.b32.xlu0 %v144, 112
  %v197 = vpop.permute.xlu0 %196
  %198 = vrot.lane.b32.xlu0 %v145, 112
  %v199 = vpop.permute.xlu0 %198
  %200 = vrot.lane.b32.xlu0 %v146, 112
  %v201 = vpop.permute.xlu0 %200
  %202 = vrot.lane.b32.xlu0 %v147, 112
  %v203 = vpop.permute.xlu0 %202
  %204 = vrot.lane.b32.xlu0 %v160, 112
  %v205 = vpop.permute.xlu0 %204
  %206 = vrot.lane.b32.xlu0 %v161, 112
  %v207 = vpop.permute.xlu0 %206
  %208 = vrot.lane.b32.xlu0 %v162, 112
  %v209 = vpop.permute.xlu0 %208
  %210 = vrot.lane.b32.xlu0 %v159, 112
  %v211 = vpop.permute.xlu0 %210
  %212 = vrot.lane.b32.xlu0 %v171, 112
  %v213 = vpop.permute.xlu0 %212
  %214 = vrot.lane.b32.xlu0 %v172, 112
  %v215 = vpop.permute.xlu0 %214
  %216 = vrot.lane.b32.xlu0 %v173, 112
  %v217 = vpop.permute.xlu0 %216
  %218 = vrot.lane.b32.xlu0 %v170, 112
  %v219 = vpop.permute.xlu0 %218
  %220 = vrot.lane.b32.xlu0 %v182, 112
  %v221 = vpop.permute.xlu0 %220
  %222 = vrot.lane.b32.xlu0 %v183, 112
  %v223 = vpop.permute.xlu0 %222
  %224 = vrot.lane.b32.xlu0 %v184, 112
  %v225 = vpop.permute.xlu0 %224
  %226 = vrot.lane.b32.xlu0 %v181, 112
  %v227 = vpop.permute.xlu0 %226
  %228 = vrot.lane.b32.xlu0 %v193, 112
  %v229 = vpop.permute.xlu0 %228
  %230 = vrot.lane.b32.xlu0 %v194, 112
  %v231 = vpop.permute.xlu0 %230
  %232 = vrot.lane.b32.xlu0 %v195, 112
  %v233 = vpop.permute.xlu0 %232
  %234 = vrot.lane.b32.xlu0 %v192, 112
  %v235 = vpop.permute.xlu0 %234
  %vm236 = vcmask 916480
  %v237 = vsel %vm236, %v197, %v199
  %v238 = vsel %vm236, %v199, %v201
  %v239 = vsel %vm236, %v201, %v203
  %v240 = vsel %vm236, %v205, %v207
  %v241 = vsel %vm236, %v207, %v209
  %v242 = vsel %vm236, %v209, %v211
  %v243 = vsel %vm236, %v213, %v215
  %v244 = vsel %vm236, %v215, %v217
  %v245 = vsel %vm236, %v217, %v219
  %v246 = vsel %vm236, %v221, %v223
  %v247 = vsel %vm236, %v223, %v225
  %v248 = vsel %vm236, %v225, %v227
  %v249 = vsel %vm236, %v229, %v231
  %v250 = vsel %vm236, %v231, %v233
  %v251 = vsel %vm236, %v233, %v235
  %vm272 = vcmask 916480
  %v275 = vsel %vm272, %v70, %v197
  %v279 = vsel %vm272, %v82, %v205
  %v283 = vsel %vm272, %v97, %v213
  %v287 = vsel %vm272, %v112, %v221
  %v291 = vsel %vm272, %v127, %v229
  %v297 = vunpack.c.l.b16 %v18
  %v298 = vunpack.c.l.b16 %v19
  %v299 = vunpack.c.l.b16 %v20
  %v300 = vunpack.c.l.b16 %v21
  %v301 = vpack.c.b16 %v298, %v297
  %v302 = vpack.c.b16 %v300, %v299
  %vm303 = vcmask 654336
  %v305 = vsel %vm303, %v301, 0
  %v308 = vsel %vm303, %v302, 0
  %310 = vmatprep.subr.bf16.mxu0 0
  %311 = vmatpush1.bf16.msra.mxu0 0
  %312 = vmatprep.subr.bf16.mxu0 0
  %313 = vmatpush1.bf16.msra.mxu0 0
  %314 = vmatprep.subr.bf16.mxu0 0
  %315 = vmatpush1.bf16.msra.mxu0 0
  %316 = vmatprep.subr.bf16.mxu0 %v130
  %317 = vmatpush1.bf16.msra.mxu0 %v129
  %318 = vmatprep.subr.bf16.mxu0 %v115
  %319 = vmatpush1.bf16.msra.mxu0 %v114
  %320 = vmatprep.subr.bf16.mxu0 %v100
  %321 = vmatpush1.bf16.msra.mxu0 %v99
  %322 = vmatprep.subr.bf16.mxu0 %v85
  %323 = vmatpush1.bf16.msra.mxu0 %v84
  %324 = vmatprep.subr.bf16.mxu0 %v68
  %325 = vmatpush1.bf16.msra.mxu0 %v67
  %326 = vmatprep.subr.bf16.mxu0 0
  %327 = vmatpush2.bf16.msra.mxu0 0
  %328 = vmatprep.subr.bf16.mxu0 0
  %329 = vmatpush2.bf16.msra.mxu0 0
  %330 = vmatprep.subr.bf16.mxu0 0
  %331 = vmatpush2.bf16.msra.mxu0 0
  %332 = vmatprep.subr.bf16.mxu0 0
  %333 = vmatpush2.bf16.msra.mxu0 0
  %334 = vmatprep.subr.bf16.mxu0 0
  %335 = vmatpush2.bf16.msra.mxu0 0
  %336 = vmatprep.subr.bf16.mxu0 0
  %337 = vmatpush2.bf16.msra.mxu0 0
  %338 = vmatprep.subr.bf16.mxu0 0
  %339 = vmatpush2.bf16.msra.mxu0 0
  %340 = vmatprep.subr.bf16.mxu0 0
  %341 = vmatpush2.bf16.msra.mxu0 0
  %342 = vmatprep.mubr.bf16.mxu0 0
  %343 = vmatmul.mubr.bf16.gmra.mxu0 %v305
  %v344 = vpop.f32.mrf.mxu0
  %v345 = vadd.f32 0.0, %v344
  %v346 = vpop.f32.mrf.mxu0
  %v347 = vadd.f32 0.0, %v346
  %v348 = vpop.f32.mrf.mxu0
  %v349 = vadd.f32 0.0, %v348
  %v350 = vpop.f32.mrf.mxu0
  %v351 = vadd.f32 0.0, %v350
  %352 = vmatprep.mubr.bf16.mxu0 0
  %353 = vmatmul.mubr.bf16.gmra.mxu0 %v308
  %v354 = vpop.f32.mrf.mxu0
  %v355 = vadd.f32 0.0, %v354
  %v356 = vpop.f32.mrf.mxu0
  %v357 = vadd.f32 0.0, %v356
  %v358 = vpop.f32.mrf.mxu0
  %v359 = vadd.f32 0.0, %v358
  %v360 = vpop.f32.mrf.mxu0
  %v361 = vadd.f32 0.0, %v360
  %362 = vdwg.mxu0
  %363 = vmatprep.subr.bf16.mxu0 0
  %364 = vmatpush1.bf16.msra.mxu0 0
  %365 = vmatprep.subr.bf16.mxu0 0
  %366 = vmatpush1.bf16.msra.mxu0 0
  %367 = vmatprep.subr.bf16.mxu0 0
  %368 = vmatpush1.bf16.msra.mxu0 0
  %369 = vmatprep.subr.bf16.mxu0 %v291
  %370 = vmatpush1.bf16.msra.mxu0 %v131
  %371 = vmatprep.subr.bf16.mxu0 %v287
  %372 = vmatpush1.bf16.msra.mxu0 %v116
  %373 = vmatprep.subr.bf16.mxu0 %v283
  %374 = vmatpush1.bf16.msra.mxu0 %v101
  %375 = vmatprep.subr.bf16.mxu0 %v279
  %376 = vmatpush1.bf16.msra.mxu0 %v86
  %377 = vmatprep.subr.bf16.mxu0 %v275
  %378 = vmatpush1.bf16.msra.mxu0 %v69
  %379 = vmatprep.subr.bf16.mxu0 0
  %380 = vmatpush2.bf16.msra.mxu0 0
  %381 = vmatprep.subr.bf16.mxu0 0
  %382 = vmatpush2.bf16.msra.mxu0 0
  %383 = vmatprep.subr.bf16.mxu0 0
  %384 = vmatpush2.bf16.msra.mxu0 0
  %385 = vmatprep.subr.bf16.mxu0 0
  %386 = vmatpush2.bf16.msra.mxu0 0
  %387 = vmatprep.subr.bf16.mxu0 0
  %388 = vmatpush2.bf16.msra.mxu0 0
  %389 = vmatprep.subr.bf16.mxu0 0
  %390 = vmatpush2.bf16.msra.mxu0 0
  %391 = vmatprep.subr.bf16.mxu0 0
  %392 = vmatpush2.bf16.msra.mxu0 0
  %393 = vmatprep.subr.bf16.mxu0 0
  %394 = vmatpush2.bf16.msra.mxu0 0
  %395 = vmatprep.mubr.bf16.mxu0 0
  %396 = vmatmul.mubr.bf16.gmra.mxu0 %v305
  %v397 = vpop.f32.mrf.mxu0
  %v398 = vadd.f32 0.0, %v397
  %v399 = vpop.f32.mrf.mxu0
  %v400 = vadd.f32 0.0, %v399
  %v401 = vpop.f32.mrf.mxu0
  %v402 = vadd.f32 0.0, %v401
  %v403 = vpop.f32.mrf.mxu0
  %v404 = vadd.f32 0.0, %v403
  %405 = vmatprep.mubr.bf16.mxu0 0
  %406 = vmatmul.mubr.bf16.gmra.mxu0 %v308
  %v407 = vpop.f32.mrf.mxu0
  %v408 = vadd.f32 0.0, %v407
  %v409 = vpop.f32.mrf.mxu0
  %v410 = vadd.f32 0.0, %v409
  %v411 = vpop.f32.mrf.mxu0
  %v412 = vadd.f32 0.0, %v411
  %v413 = vpop.f32.mrf.mxu0
  %v414 = vadd.f32 0.0, %v413
  %415 = vdwg.mxu0
  %416 = vmatprep.subr.bf16.mxu0 0
  %417 = vmatpush1.bf16.msra.mxu0 0
  %418 = vmatprep.subr.bf16.mxu0 0
  %419 = vmatpush1.bf16.msra.mxu0 0
  %420 = vmatprep.subr.bf16.mxu0 0
  %421 = vmatpush1.bf16.msra.mxu0 0
  %422 = vmatprep.subr.bf16.mxu0 %v250
  %423 = vmatpush1.bf16.msra.mxu0 %v249
  %424 = vmatprep.subr.bf16.mxu0 %v247
  %425 = vmatpush1.bf16.msra.mxu0 %v246
  %426 = vmatprep.subr.bf16.mxu0 %v244
  %427 = vmatpush1.bf16.msra.mxu0 %v243
  %428 = vmatprep.subr.bf16.mxu0 %v241
  %429 = vmatpush1.bf16.msra.mxu0 %v240
  %430 = vmatprep.subr.bf16.mxu0 %v238
  %431 = vmatpush1.bf16.msra.mxu0 %v237
  %432 = vmatprep.subr.bf16.mxu0 0
  %433 = vmatpush2.bf16.msra.mxu0 0
  %434 = vmatprep.subr.bf16.mxu0 0
  %435 = vmatpush2.bf16.msra.mxu0 0
  %436 = vmatprep.subr.bf16.mxu0 0
  %437 = vmatpush2.bf16.msra.mxu0 0
  %438 = vmatprep.subr.bf16.mxu0 0
  %439 = vmatpush2.bf16.msra.mxu0 0
  %440 = vmatprep.subr.bf16.mxu0 0
  %441 = vmatpush2.bf16.msra.mxu0 0
  %442 = vmatprep.subr.bf16.mxu0 0
  %443 = vmatpush2.bf16.msra.mxu0 0
  %444 = vmatprep.subr.bf16.mxu0 0
  %445 = vmatpush2.bf16.msra.mxu0 0
  %446 = vmatprep.subr.bf16.mxu0 0
  %447 = vmatpush2.bf16.msra.mxu0 0
  %448 = vmatprep.mubr.bf16.mxu0 0
  %449 = vmatmul.mubr.bf16.gmra.mxu0 %v305
  %v450 = vpop.f32.mrf.mxu0
  %v451 = vadd.f32 0.0, %v450
  %v452 = vpop.f32.mrf.mxu0
  %v453 = vadd.f32 0.0, %v452
  %v454 = vpop.f32.mrf.mxu0
  %v455 = vadd.f32 0.0, %v454
  %v456 = vpop.f32.mrf.mxu0
  %v457 = vadd.f32 0.0, %v456
  %458 = vmatprep.mubr.bf16.mxu0 0
  %459 = vmatmul.mubr.bf16.gmra.mxu0 %v308
  %v460 = vpop.f32.mrf.mxu0
  %v461 = vadd.f32 0.0, %v460
  %v462 = vpop.f32.mrf.mxu0
  %v463 = vadd.f32 0.0, %v462
  %v464 = vpop.f32.mrf.mxu0
  %v465 = vadd.f32 0.0, %v464
  %v466 = vpop.f32.mrf.mxu0
  %v467 = vadd.f32 0.0, %v466
  %468 = vdwg.mxu0
  %469 = vmatprep.subr.bf16.mxu0 0
  %470 = vmatpush1.bf16.msra.mxu0 0
  %471 = vmatprep.subr.bf16.mxu0 0
  %472 = vmatpush1.bf16.msra.mxu0 0
  %473 = vmatprep.subr.bf16.mxu0 0
  %474 = vmatpush1.bf16.msra.mxu0 0
  %475 = vmatprep.subr.bf16.mxu0 %v235
  %476 = vmatpush1.bf16.msra.mxu0 %v251
  %477 = vmatprep.subr.bf16.mxu0 %v227
  %478 = vmatpush1.bf16.msra.mxu0 %v248
  %479 = vmatprep.subr.bf16.mxu0 %v219
  %480 = vmatpush1.bf16.msra.mxu0 %v245
  %481 = vmatprep.subr.bf16.mxu0 %v211
  %482 = vmatpush1.bf16.msra.mxu0 %v242
  %483 = vmatprep.subr.bf16.mxu0 %v203
  %484 = vmatpush1.bf16.msra.mxu0 %v239
  %485 = vmatprep.subr.bf16.mxu0 0
  %486 = vmatpush2.bf16.msra.mxu0 0
  %487 = vmatprep.subr.bf16.mxu0 0
  %488 = vmatpush2.bf16.msra.mxu0 0
  %489 = vmatprep.subr.bf16.mxu0 0
  %490 = vmatpush2.bf16.msra.mxu0 0
  %491 = vmatprep.subr.bf16.mxu0 0
  %492 = vmatpush2.bf16.msra.mxu0 0
  %493 = vmatprep.subr.bf16.mxu0 0
  %494 = vmatpush2.bf16.msra.mxu0 0
  %495 = vmatprep.subr.bf16.mxu0 0
  %496 = vmatpush2.bf16.msra.mxu0 0
  %497 = vmatprep.subr.bf16.mxu0 0
  %498 = vmatpush2.bf16.msra.mxu0 0
  %499 = vmatprep.subr.bf16.mxu0 0
  %500 = vmatpush2.bf16.msra.mxu0 0
  %501 = vmatprep.mubr.bf16.mxu0 0
  %502 = vmatmul.mubr.bf16.gmra.mxu0 %v305
  %v503 = vpop.f32.mrf.mxu0
  %v504 = vadd.f32 0.0, %v503
  %v505 = vpop.f32.mrf.mxu0
  %v506 = vadd.f32 0.0, %v505
  %v507 = vpop.f32.mrf.mxu0
  %v508 = vadd.f32 0.0, %v507
  %v509 = vpop.f32.mrf.mxu0
  %v510 = vadd.f32 0.0, %v509
  %511 = vmatprep.mubr.bf16.mxu0 0
  %512 = vmatmul.mubr.bf16.gmra.mxu0 %v308
  %v513 = vpop.f32.mrf.mxu0
  %v514 = vadd.f32 0.0, %v513
  %v515 = vpop.f32.mrf.mxu0
  %v516 = vadd.f32 0.0, %v515
  %v517 = vpop.f32.mrf.mxu0
  %v518 = vadd.f32 0.0, %v517
  %v519 = vpop.f32.mrf.mxu0
  %v520 = vadd.f32 0.0, %v519
  %521 = vdwg.mxu0
  %v522 = vadd.f32 %v345, %v347
  %v523 = vadd.f32 %v522, %v398
  %v524 = vadd.f32 %v523, %v400
  %v525 = vadd.f32 %v524, %v451
  %v526 = vadd.f32 %v525, %v453
  %v527 = vadd.f32 %v526, %v504
  %vm528 = vcmask 785408
  %v529 = vsel %vm528, %v506, 0.0
  %v530 = vadd.f32 %v527, %v529
  %531 = vadd.xlane.f32.xlu0 %v530
  %v532 = vpop.xlane.xlu0 %531
  %v533 = vadd.f32 %v349, %v351
  %v534 = vadd.f32 %v533, %v402
  %v535 = vadd.f32 %v534, %v404
  %v536 = vadd.f32 %v535, %v455
  %v537 = vadd.f32 %v536, %v457
  %v538 = vadd.f32 %v537, %v508
  %v539 = vsel %vm528, %v510, 0.0
  %v540 = vadd.f32 %v538, %v539
  %541 = vadd.xlane.f32.xlu0 %v540
  %v542 = vpop.xlane.xlu0 %541
  %v543 = vadd.f32 %v355, %v357
  %v544 = vadd.f32 %v543, %v408
  %v545 = vadd.f32 %v544, %v410
  %v546 = vadd.f32 %v545, %v461
  %v547 = vadd.f32 %v546, %v463
  %v548 = vadd.f32 %v547, %v514
  %v549 = vsel %vm528, %v516, 0.0
  %v550 = vadd.f32 %v548, %v549
  %551 = vadd.xlane.f32.xlu0 %v550
  %v552 = vpop.xlane.xlu0 %551
  %v553 = vadd.f32 %v359, %v361
  %v554 = vadd.f32 %v553, %v412
  %v555 = vadd.f32 %v554, %v414
  %v556 = vadd.f32 %v555, %v465
  %v557 = vadd.f32 %v556, %v467
  %v558 = vadd.f32 %v557, %v518
  %v559 = vsel %vm528, %v520, 0.0
  %v560 = vadd.f32 %v558, %v559
  %561 = vadd.xlane.f32.xlu0 %v560
  %v562 = vpop.xlane.xlu0 %561
  %v563 = vmul.f32 %v345, %v345
  %v564 = vmul.f32 %v347, %v347
  %v565 = vmul.f32 %v398, %v398
  %v566 = vmul.f32 %v400, %v400
  %v567 = vmul.f32 %v451, %v451
  %v568 = vmul.f32 %v453, %v453
  %v569 = vmul.f32 %v504, %v504
  %v570 = vmul.f32 %v506, %v506
  %v571 = vmul.f32 %v349, %v349
  %v572 = vmul.f32 %v351, %v351
  %v573 = vmul.f32 %v402, %v402
  %v574 = vmul.f32 %v404, %v404
  %v575 = vmul.f32 %v455, %v455
  %v576 = vmul.f32 %v457, %v457
  %v577 = vmul.f32 %v508, %v508
  %v578 = vmul.f32 %v510, %v510
  %v579 = vmul.f32 %v355, %v355
  %v580 = vmul.f32 %v357, %v357
  %v581 = vmul.f32 %v408, %v408
  %v582 = vmul.f32 %v410, %v410
  %v583 = vmul.f32 %v461, %v461
  %v584 = vmul.f32 %v463, %v463
  %v585 = vmul.f32 %v514, %v514
  %v586 = vmul.f32 %v516, %v516
  %v587 = vmul.f32 %v359, %v359
  %v588 = vmul.f32 %v361, %v361
  %v589 = vmul.f32 %v412, %v412
  %v590 = vmul.f32 %v414, %v414
  %v591 = vmul.f32 %v465, %v465
  %v592 = vmul.f32 %v467, %v467
  %v593 = vmul.f32 %v518, %v518
  %v594 = vmul.f32 %v520, %v520
  %v595 = vadd.f32 %v563, %v564
  %v596 = vadd.f32 %v595, %v565
  %v597 = vadd.f32 %v596, %v566
  %v598 = vadd.f32 %v597, %v567
  %v599 = vadd.f32 %v598, %v568
  %v600 = vadd.f32 %v599, %v569
  %v601 = vsel %vm528, %v570, 0.0
  %v602 = vadd.f32 %v600, %v601
  %603 = vadd.xlane.f32.xlu0 %v602
  %v604 = vpop.xlane.xlu0 %603
  %v605 = vadd.f32 %v571, %v572
  %v606 = vadd.f32 %v605, %v573
  %v607 = vadd.f32 %v606, %v574
  %v608 = vadd.f32 %v607, %v575
  %v609 = vadd.f32 %v608, %v576
  %v610 = vadd.f32 %v609, %v577
  %v611 = vsel %vm528, %v578, 0.0
  %v612 = vadd.f32 %v610, %v611
  %613 = vadd.xlane.f32.xlu0 %v612
  %v614 = vpop.xlane.xlu0 %613
  %v615 = vadd.f32 %v579, %v580
  %v616 = vadd.f32 %v615, %v581
  %v617 = vadd.f32 %v616, %v582
  %v618 = vadd.f32 %v617, %v583
  %v619 = vadd.f32 %v618, %v584
  %v620 = vadd.f32 %v619, %v585
  %v621 = vsel %vm528, %v586, 0.0
  %v622 = vadd.f32 %v620, %v621
  %623 = vadd.xlane.f32.xlu0 %v622
  %v624 = vpop.xlane.xlu0 %623
  %v625 = vadd.f32 %v587, %v588
  %v626 = vadd.f32 %v625, %v589
  %v627 = vadd.f32 %v626, %v590
  %v628 = vadd.f32 %v627, %v591
  %v629 = vadd.f32 %v628, %v592
  %v630 = vadd.f32 %v629, %v593
  %v631 = vsel %vm528, %v594, 0.0
  %v632 = vadd.f32 %v630, %v631
  %633 = vadd.xlane.f32.xlu0 %v632
  %v634 = vpop.xlane.xlu0 %633
  %v635 = vmul.f32 %v532, 0.0010080645
  %v636 = vmul.f32 %v542, 0.0010080645
  %v637 = vmul.f32 %v552, 0.0010080645
  %v638 = vmul.f32 %v562, 0.0010080645
  %v639 = vmul.f32 %v604, 0.0010080645
  %v640 = vmul.f32 %v614, 0.0010080645
  %v641 = vmul.f32 %v624, 0.0010080645
  %v642 = vmul.f32 %v634, 0.0010080645
  %v643 = vmul.f32 %v635, %v635
  %v644 = vmul.f32 %v636, %v636
  %v645 = vmul.f32 %v637, %v637
  %v646 = vmul.f32 %v638, %v638
  %v647 = vsub.f32 %v639, %v643
  %v648 = vsub.f32 %v640, %v644
  %v649 = vsub.f32 %v641, %v645
  %v650 = vsub.f32 %v642, %v646
  %v651 = vmax.f32 %v647, 0.0
  %v652 = vmax.f32 %v648, 0.0
  %v653 = vmax.f32 %v649, 0.0
  %v654 = vmax.f32 %v650, 0.0
  %v655 = vadd.f32 %v651, 1e-05
  %v656 = vadd.f32 %v652, 1e-05
  %v657 = vadd.f32 %v653, 1e-05
  %v658 = vadd.f32 %v654, 1e-05
  %v659 = vrsqrt.pop %v655
  %v660 = vrsqrt.pop %v656
  %v661 = vrsqrt.pop %v657
  %v662 = vrsqrt.pop %v658
  %v663 = vmul.f32 %v51, %v659
  %v664 = vmul.f32 %v52, %v660
  %v665 = vmul.f32 %v53, %v661
  %v666 = vmul.f32 %v54, %v662
  %v667 = vmul.f32 %v635, %v663
  %v668 = vmul.f32 %v636, %v664
  %v669 = vmul.f32 %v637, %v665
  %v670 = vmul.f32 %v638, %v666
  %675 = vrot.lane.b32.xlu0 %v667, 1
  %v676 = vpop.permute.xlu0 %675
  %677 = vrot.lane.b32.xlu0 %v668, 1
  %v678 = vpop.permute.xlu0 %677
  %679 = vrot.lane.b32.xlu0 %v669, 1
  %v680 = vpop.permute.xlu0 %679
  %681 = vrot.lane.b32.xlu0 %v670, 1
  %v682 = vpop.permute.xlu0 %681
  %v687 = vsub.f32 %v51, %v676
  %v688 = vsub.f32 %v52, %v678
  %v689 = vsub.f32 %v53, %v680
  %v690 = vsub.f32 %v54, %v682
  %692 = vset.pattern.permute.xlu0 0
  %693 = vperm.xlu0 %692, %v663
  %v694 = vpop.permute.xlu0 %693
  %697 = vset.pattern.permute.xlu0 0
  %698 = vperm.xlu0 %697, %v664
  %v699 = vpop.permute.xlu0 %698
  %702 = vset.pattern.permute.xlu0 0
  %703 = vperm.xlu0 %702, %v665
  %v704 = vpop.permute.xlu0 %703
  %707 = vset.pattern.permute.xlu0 0
  %708 = vperm.xlu0 %707, %v666
  %v709 = vpop.permute.xlu0 %708
  %v711 = vmul.f32 %v345, %v694
  %v712 = vmul.f32 %v347, %v694
  %v713 = vmul.f32 %v398, %v694
  %v714 = vmul.f32 %v400, %v694
  %v715 = vmul.f32 %v451, %v694
  %v716 = vmul.f32 %v453, %v694
  %v717 = vmul.f32 %v504, %v694
  %v718 = vmul.f32 %v506, %v694
  %v719 = vmul.f32 %v349, %v699
  %v720 = vmul.f32 %v351, %v699
  %v721 = vmul.f32 %v402, %v699
  %v722 = vmul.f32 %v404, %v699
  %v723 = vmul.f32 %v455, %v699
  %v724 = vmul.f32 %v457, %v699
  %v725 = vmul.f32 %v508, %v699
  %v726 = vmul.f32 %v510, %v699
  %v727 = vmul.f32 %v355, %v704
  %v728 = vmul.f32 %v357, %v704
  %v729 = vmul.f32 %v408, %v704
  %v730 = vmul.f32 %v410, %v704
  %v731 = vmul.f32 %v461, %v704
  %v732 = vmul.f32 %v463, %v704
  %v733 = vmul.f32 %v514, %v704
  %v734 = vmul.f32 %v516, %v704
  %v735 = vmul.f32 %v359, %v709
  %v736 = vmul.f32 %v361, %v709
  %v737 = vmul.f32 %v412, %v709
  %v738 = vmul.f32 %v414, %v709
  %v739 = vmul.f32 %v465, %v709
  %v740 = vmul.f32 %v467, %v709
  %v741 = vmul.f32 %v518, %v709
  %v742 = vmul.f32 %v520, %v709
  %744 = vset.pattern.permute.xlu0 1
  %745 = vperm.xlu0 %744, %v687
  %v746 = vpop.permute.xlu0 %745
  %749 = vset.pattern.permute.xlu0 1
  %750 = vperm.xlu0 %749, %v688
  %v751 = vpop.permute.xlu0 %750
  %754 = vset.pattern.permute.xlu0 1
  %755 = vperm.xlu0 %754, %v689
  %v756 = vpop.permute.xlu0 %755
  %759 = vset.pattern.permute.xlu0 1
  %760 = vperm.xlu0 %759, %v690
  %v761 = vpop.permute.xlu0 %760
  %v763 = vadd.f32 %v711, %v746
  %v764 = vadd.f32 %v712, %v746
  %v765 = vadd.f32 %v713, %v746
  %v766 = vadd.f32 %v714, %v746
  %v767 = vadd.f32 %v715, %v746
  %v768 = vadd.f32 %v716, %v746
  %v769 = vadd.f32 %v717, %v746
  %v770 = vadd.f32 %v718, %v746
  %v771 = vadd.f32 %v719, %v751
  %v772 = vadd.f32 %v720, %v751
  %v773 = vadd.f32 %v721, %v751
  %v774 = vadd.f32 %v722, %v751
  %v775 = vadd.f32 %v723, %v751
  %v776 = vadd.f32 %v724, %v751
  %v777 = vadd.f32 %v725, %v751
  %v778 = vadd.f32 %v726, %v751
  %v779 = vadd.f32 %v727, %v756
  %v780 = vadd.f32 %v728, %v756
  %v781 = vadd.f32 %v729, %v756
  %v782 = vadd.f32 %v730, %v756
  %v783 = vadd.f32 %v731, %v756
  %v784 = vadd.f32 %v732, %v756
  %v785 = vadd.f32 %v733, %v756
  %v786 = vadd.f32 %v734, %v756
  %v787 = vadd.f32 %v735, %v761
  %v788 = vadd.f32 %v736, %v761
  %v789 = vadd.f32 %v737, %v761
  %v790 = vadd.f32 %v738, %v761
  %v791 = vadd.f32 %v739, %v761
  %v792 = vadd.f32 %v740, %v761
  %v793 = vadd.f32 %v741, %v761
  %v794 = vadd.f32 %v742, %v761
  %v795 = vmax.f32 %v763, 0.0
  %v796 = vmax.f32 %v764, 0.0
  %v797 = vmax.f32 %v765, 0.0
  %v798 = vmax.f32 %v766, 0.0
  %v799 = vmax.f32 %v767, 0.0
  %v800 = vmax.f32 %v768, 0.0
  %v801 = vmax.f32 %v769, 0.0
  %v802 = vmax.f32 %v770, 0.0
  %v803 = vmax.f32 %v771, 0.0
  %v804 = vmax.f32 %v772, 0.0
  %v805 = vmax.f32 %v773, 0.0
  %v806 = vmax.f32 %v774, 0.0
  %v807 = vmax.f32 %v775, 0.0
  %v808 = vmax.f32 %v776, 0.0
  %v809 = vmax.f32 %v777, 0.0
  %v810 = vmax.f32 %v778, 0.0
  %v811 = vmax.f32 %v779, 0.0
  %v812 = vmax.f32 %v780, 0.0
  %v813 = vmax.f32 %v781, 0.0
  %v814 = vmax.f32 %v782, 0.0
  %v815 = vmax.f32 %v783, 0.0
  %v816 = vmax.f32 %v784, 0.0
  %v817 = vmax.f32 %v785, 0.0
  %v818 = vmax.f32 %v786, 0.0
  %v819 = vmax.f32 %v787, 0.0
  %v820 = vmax.f32 %v788, 0.0
  %v821 = vmax.f32 %v789, 0.0
  %v822 = vmax.f32 %v790, 0.0
  %v823 = vmax.f32 %v791, 0.0
  %v824 = vmax.f32 %v792, 0.0
  %v825 = vmax.f32 %v793, 0.0
  %v826 = vmax.f32 %v794, 0.0
  %859 = vrot.lane.b32.xlu0 %v795, 127
  %v860 = vpop.permute.xlu0 %859
  %861 = vrot.lane.b32.xlu0 %v796, 127
  %v862 = vpop.permute.xlu0 %861
  %863 = vrot.lane.b32.xlu0 %v797, 127
  %v864 = vpop.permute.xlu0 %863
  %865 = vrot.lane.b32.xlu0 %v798, 127
  %v866 = vpop.permute.xlu0 %865
  %867 = vrot.lane.b32.xlu0 %v799, 127
  %v868 = vpop.permute.xlu0 %867
  %869 = vrot.lane.b32.xlu0 %v800, 127
  %v870 = vpop.permute.xlu0 %869
  %871 = vrot.lane.b32.xlu0 %v801, 127
  %v872 = vpop.permute.xlu0 %871
  %873 = vrot.lane.b32.xlu0 %v802, 127
  %v874 = vpop.permute.xlu0 %873
  %875 = vrot.lane.b32.xlu0 %v803, 127
  %v876 = vpop.permute.xlu0 %875
  %877 = vrot.lane.b32.xlu0 %v804, 127
  %v878 = vpop.permute.xlu0 %877
  %879 = vrot.lane.b32.xlu0 %v805, 127
  %v880 = vpop.permute.xlu0 %879
  %881 = vrot.lane.b32.xlu0 %v806, 127
  %v882 = vpop.permute.xlu0 %881
  %883 = vrot.lane.b32.xlu0 %v807, 127
  %v884 = vpop.permute.xlu0 %883
  %885 = vrot.lane.b32.xlu0 %v808, 127
  %v886 = vpop.permute.xlu0 %885
  %887 = vrot.lane.b32.xlu0 %v809, 127
  %v888 = vpop.permute.xlu0 %887
  %889 = vrot.lane.b32.xlu0 %v810, 127
  %v890 = vpop.permute.xlu0 %889
  %891 = vrot.lane.b32.xlu0 %v811, 127
  %v892 = vpop.permute.xlu0 %891
  %893 = vrot.lane.b32.xlu0 %v812, 127
  %v894 = vpop.permute.xlu0 %893
  %895 = vrot.lane.b32.xlu0 %v813, 127
  %v896 = vpop.permute.xlu0 %895
  %897 = vrot.lane.b32.xlu0 %v814, 127
  %v898 = vpop.permute.xlu0 %897
  %899 = vrot.lane.b32.xlu0 %v815, 127
  %v900 = vpop.permute.xlu0 %899
  %901 = vrot.lane.b32.xlu0 %v816, 127
  %v902 = vpop.permute.xlu0 %901
  %903 = vrot.lane.b32.xlu0 %v817, 127
  %v904 = vpop.permute.xlu0 %903
  %905 = vrot.lane.b32.xlu0 %v818, 127
  %v906 = vpop.permute.xlu0 %905
  %907 = vrot.lane.b32.xlu0 %v819, 127
  %v908 = vpop.permute.xlu0 %907
  %909 = vrot.lane.b32.xlu0 %v820, 127
  %v910 = vpop.permute.xlu0 %909
  %911 = vrot.lane.b32.xlu0 %v821, 127
  %v912 = vpop.permute.xlu0 %911
  %913 = vrot.lane.b32.xlu0 %v822, 127
  %v914 = vpop.permute.xlu0 %913
  %915 = vrot.lane.b32.xlu0 %v823, 127
  %v916 = vpop.permute.xlu0 %915
  %917 = vrot.lane.b32.xlu0 %v824, 127
  %v918 = vpop.permute.xlu0 %917
  %919 = vrot.lane.b32.xlu0 %v825, 127
  %v920 = vpop.permute.xlu0 %919
  %921 = vrot.lane.b32.xlu0 %v826, 127
  %v922 = vpop.permute.xlu0 %921
  %vm923 = vcmask 1039360
  %v924 = vsel %vm923, %v860, %v862
  %v925 = vsel %vm923, %v862, %v864
  %v926 = vsel %vm923, %v864, %v866
  %v927 = vsel %vm923, %v866, %v868
  %v928 = vsel %vm923, %v868, %v870
  %v929 = vsel %vm923, %v870, %v872
  %v930 = vsel %vm923, %v872, %v874
  %v931 = vsel %vm923, %v876, %v878
  %v932 = vsel %vm923, %v878, %v880
  %v933 = vsel %vm923, %v880, %v882
  %v934 = vsel %vm923, %v882, %v884
  %v935 = vsel %vm923, %v884, %v886
  %v936 = vsel %vm923, %v886, %v888
  %v937 = vsel %vm923, %v888, %v890
  %v938 = vsel %vm923, %v892, %v894
  %v939 = vsel %vm923, %v894, %v896
  %v940 = vsel %vm923, %v896, %v898
  %v941 = vsel %vm923, %v898, %v900
  %v942 = vsel %vm923, %v900, %v902
  %v943 = vsel %vm923, %v902, %v904
  %v944 = vsel %vm923, %v904, %v906
  %v945 = vsel %vm923, %v908, %v910
  %v946 = vsel %vm923, %v910, %v912
  %v947 = vsel %vm923, %v912, %v914
  %v948 = vsel %vm923, %v914, %v916
  %v949 = vsel %vm923, %v916, %v918
  %v950 = vsel %vm923, %v918, %v920
  %v951 = vsel %vm923, %v920, %v922
  %v984 = vmax.f32 %v795, %v924
  %v985 = vmax.f32 %v796, %v925
  %v986 = vmax.f32 %v797, %v926
  %v987 = vmax.f32 %v798, %v927
  %v988 = vmax.f32 %v799, %v928
  %v989 = vmax.f32 %v800, %v929
  %v990 = vmax.f32 %v801, %v930
  %v991 = vmax.f32 %v802, %v874
  %v992 = vmax.f32 %v803, %v931
  %v993 = vmax.f32 %v804, %v932
  %v994 = vmax.f32 %v805, %v933
  %v995 = vmax.f32 %v806, %v934
  %v996 = vmax.f32 %v807, %v935
  %v997 = vmax.f32 %v808, %v936
  %v998 = vmax.f32 %v809, %v937
  %v999 = vmax.f32 %v810, %v890
  %v1000 = vmax.f32 %v811, %v938
  %v1001 = vmax.f32 %v812, %v939
  %v1002 = vmax.f32 %v813, %v940
  %v1003 = vmax.f32 %v814, %v941
  %v1004 = vmax.f32 %v815, %v942
  %v1005 = vmax.f32 %v816, %v943
  %v1006 = vmax.f32 %v817, %v944
  %v1007 = vmax.f32 %v818, %v906
  %v1008 = vmax.f32 %v819, %v945
  %v1009 = vmax.f32 %v820, %v946
  %v1010 = vmax.f32 %v821, %v947
  %v1011 = vmax.f32 %v822, %v948
  %v1012 = vmax.f32 %v823, %v949
  %v1013 = vmax.f32 %v824, %v950
  %v1014 = vmax.f32 %v825, %v951
  %v1015 = vmax.f32 %v826, %v922
  %1016 = vrot.lane.b32.xlu0 %v795, 126
  %v1017 = vpop.permute.xlu0 %1016
  %1018 = vrot.lane.b32.xlu0 %v796, 126
  %v1019 = vpop.permute.xlu0 %1018
  %1020 = vrot.lane.b32.xlu0 %v797, 126
  %v1021 = vpop.permute.xlu0 %1020
  %1022 = vrot.lane.b32.xlu0 %v798, 126
  %v1023 = vpop.permute.xlu0 %1022
  %1024 = vrot.lane.b32.xlu0 %v799, 126
  %v1025 = vpop.permute.xlu0 %1024
  %1026 = vrot.lane.b32.xlu0 %v800, 126
  %v1027 = vpop.permute.xlu0 %1026
  %1028 = vrot.lane.b32.xlu0 %v801, 126
  %v1029 = vpop.permute.xlu0 %1028
  %1030 = vrot.lane.b32.xlu0 %v802, 126
  %v1031 = vpop.permute.xlu0 %1030
  %1032 = vrot.lane.b32.xlu0 %v803, 126
  %v1033 = vpop.permute.xlu0 %1032
  %1034 = vrot.lane.b32.xlu0 %v804, 126
  %v1035 = vpop.permute.xlu0 %1034
  %1036 = vrot.lane.b32.xlu0 %v805, 126
  %v1037 = vpop.permute.xlu0 %1036
  %1038 = vrot.lane.b32.xlu0 %v806, 126
  %v1039 = vpop.permute.xlu0 %1038
  %1040 = vrot.lane.b32.xlu0 %v807, 126
  %v1041 = vpop.permute.xlu0 %1040
  %1042 = vrot.lane.b32.xlu0 %v808, 126
  %v1043 = vpop.permute.xlu0 %1042
  %1044 = vrot.lane.b32.xlu0 %v809, 126
  %v1045 = vpop.permute.xlu0 %1044
  %1046 = vrot.lane.b32.xlu0 %v810, 126
  %v1047 = vpop.permute.xlu0 %1046
  %1048 = vrot.lane.b32.xlu0 %v811, 126
  %v1049 = vpop.permute.xlu0 %1048
  %1050 = vrot.lane.b32.xlu0 %v812, 126
  %v1051 = vpop.permute.xlu0 %1050
  %1052 = vrot.lane.b32.xlu0 %v813, 126
  %v1053 = vpop.permute.xlu0 %1052
  %1054 = vrot.lane.b32.xlu0 %v814, 126
  %v1055 = vpop.permute.xlu0 %1054
  %1056 = vrot.lane.b32.xlu0 %v815, 126
  %v1057 = vpop.permute.xlu0 %1056
  %1058 = vrot.lane.b32.xlu0 %v816, 126
  %v1059 = vpop.permute.xlu0 %1058
  %1060 = vrot.lane.b32.xlu0 %v817, 126
  %v1061 = vpop.permute.xlu0 %1060
  %1062 = vrot.lane.b32.xlu0 %v818, 126
  %v1063 = vpop.permute.xlu0 %1062
  %1064 = vrot.lane.b32.xlu0 %v819, 126
  %v1065 = vpop.permute.xlu0 %1064
  %1066 = vrot.lane.b32.xlu0 %v820, 126
  %v1067 = vpop.permute.xlu0 %1066
  %1068 = vrot.lane.b32.xlu0 %v821, 126
  %v1069 = vpop.permute.xlu0 %1068
  %1070 = vrot.lane.b32.xlu0 %v822, 126
  %v1071 = vpop.permute.xlu0 %1070
  %1072 = vrot.lane.b32.xlu0 %v823, 126
  %v1073 = vpop.permute.xlu0 %1072
  %1074 = vrot.lane.b32.xlu0 %v824, 126
  %v1075 = vpop.permute.xlu0 %1074
  %1076 = vrot.lane.b32.xlu0 %v825, 126
  %v1077 = vpop.permute.xlu0 %1076
  %1078 = vrot.lane.b32.xlu0 %v826, 126
  %v1079 = vpop.permute.xlu0 %1078
  %vm1080 = vcmask 1031168
  %v1081 = vsel %vm1080, %v1017, %v1019
  %v1082 = vsel %vm1080, %v1019, %v1021
  %v1083 = vsel %vm1080, %v1021, %v1023
  %v1084 = vsel %vm1080, %v1023, %v1025
  %v1085 = vsel %vm1080, %v1025, %v1027
  %v1086 = vsel %vm1080, %v1027, %v1029
  %v1087 = vsel %vm1080, %v1029, %v1031
  %v1088 = vsel %vm1080, %v1033, %v1035
  %v1089 = vsel %vm1080, %v1035, %v1037
  %v1090 = vsel %vm1080, %v1037, %v1039
  %v1091 = vsel %vm1080, %v1039, %v1041
  %v1092 = vsel %vm1080, %v1041, %v1043
  %v1093 = vsel %vm1080, %v1043, %v1045
  %v1094 = vsel %vm1080, %v1045, %v1047
  %v1095 = vsel %vm1080, %v1049, %v1051
  %v1096 = vsel %vm1080, %v1051, %v1053
  %v1097 = vsel %vm1080, %v1053, %v1055
  %v1098 = vsel %vm1080, %v1055, %v1057
  %v1099 = vsel %vm1080, %v1057, %v1059
  %v1100 = vsel %vm1080, %v1059, %v1061
  %v1101 = vsel %vm1080, %v1061, %v1063
  %v1102 = vsel %vm1080, %v1065, %v1067
  %v1103 = vsel %vm1080, %v1067, %v1069
  %v1104 = vsel %vm1080, %v1069, %v1071
  %v1105 = vsel %vm1080, %v1071, %v1073
  %v1106 = vsel %vm1080, %v1073, %v1075
  %v1107 = vsel %vm1080, %v1075, %v1077
  %v1108 = vsel %vm1080, %v1077, %v1079
  %v1141 = vmax.f32 %v984, %v1081
  %v1142 = vmax.f32 %v985, %v1082
  %v1143 = vmax.f32 %v986, %v1083
  %v1144 = vmax.f32 %v987, %v1084
  %v1145 = vmax.f32 %v988, %v1085
  %v1146 = vmax.f32 %v989, %v1086
  %v1147 = vmax.f32 %v990, %v1087
  %v1148 = vmax.f32 %v991, %v1031
  %v1149 = vmax.f32 %v992, %v1088
  %v1150 = vmax.f32 %v993, %v1089
  %v1151 = vmax.f32 %v994, %v1090
  %v1152 = vmax.f32 %v995, %v1091
  %v1153 = vmax.f32 %v996, %v1092
  %v1154 = vmax.f32 %v997, %v1093
  %v1155 = vmax.f32 %v998, %v1094
  %v1156 = vmax.f32 %v999, %v1047
  %v1157 = vmax.f32 %v1000, %v1095
  %v1158 = vmax.f32 %v1001, %v1096
  %v1159 = vmax.f32 %v1002, %v1097
  %v1160 = vmax.f32 %v1003, %v1098
  %v1161 = vmax.f32 %v1004, %v1099
  %v1162 = vmax.f32 %v1005, %v1100
  %v1163 = vmax.f32 %v1006, %v1101
  %v1164 = vmax.f32 %v1007, %v1063
  %v1165 = vmax.f32 %v1008, %v1102
  %v1166 = vmax.f32 %v1009, %v1103
  %v1167 = vmax.f32 %v1010, %v1104
  %v1168 = vmax.f32 %v1011, %v1105
  %v1169 = vmax.f32 %v1012, %v1106
  %v1170 = vmax.f32 %v1013, %v1107
  %v1171 = vmax.f32 %v1014, %v1108
  %v1172 = vmax.f32 %v1015, %v1079
  %1173 = vrot.lane.b32.xlu0 %v795, 125
  %v1174 = vpop.permute.xlu0 %1173
  %1175 = vrot.lane.b32.xlu0 %v796, 125
  %v1176 = vpop.permute.xlu0 %1175
  %1177 = vrot.lane.b32.xlu0 %v797, 125
  %v1178 = vpop.permute.xlu0 %1177
  %1179 = vrot.lane.b32.xlu0 %v798, 125
  %v1180 = vpop.permute.xlu0 %1179
  %1181 = vrot.lane.b32.xlu0 %v799, 125
  %v1182 = vpop.permute.xlu0 %1181
  %1183 = vrot.lane.b32.xlu0 %v800, 125
  %v1184 = vpop.permute.xlu0 %1183
  %1185 = vrot.lane.b32.xlu0 %v801, 125
  %v1186 = vpop.permute.xlu0 %1185
  %1187 = vrot.lane.b32.xlu0 %v802, 125
  %v1188 = vpop.permute.xlu0 %1187
  %1189 = vrot.lane.b32.xlu0 %v803, 125
  %v1190 = vpop.permute.xlu0 %1189
  %1191 = vrot.lane.b32.xlu0 %v804, 125
  %v1192 = vpop.permute.xlu0 %1191
  %1193 = vrot.lane.b32.xlu0 %v805, 125
  %v1194 = vpop.permute.xlu0 %1193
  %1195 = vrot.lane.b32.xlu0 %v806, 125
  %v1196 = vpop.permute.xlu0 %1195
  %1197 = vrot.lane.b32.xlu0 %v807, 125
  %v1198 = vpop.permute.xlu0 %1197
  %1199 = vrot.lane.b32.xlu0 %v808, 125
  %v1200 = vpop.permute.xlu0 %1199
  %1201 = vrot.lane.b32.xlu0 %v809, 125
  %v1202 = vpop.permute.xlu0 %1201
  %1203 = vrot.lane.b32.xlu0 %v810, 125
  %v1204 = vpop.permute.xlu0 %1203
  %1205 = vrot.lane.b32.xlu0 %v811, 125
  %v1206 = vpop.permute.xlu0 %1205
  %1207 = vrot.lane.b32.xlu0 %v812, 125
  %v1208 = vpop.permute.xlu0 %1207
  %1209 = vrot.lane.b32.xlu0 %v813, 125
  %v1210 = vpop.permute.xlu0 %1209
  %1211 = vrot.lane.b32.xlu0 %v814, 125
  %v1212 = vpop.permute.xlu0 %1211
  %1213 = vrot.lane.b32.xlu0 %v815, 125
  %v1214 = vpop.permute.xlu0 %1213
  %1215 = vrot.lane.b32.xlu0 %v816, 125
  %v1216 = vpop.permute.xlu0 %1215
  %1217 = vrot.lane.b32.xlu0 %v817, 125
  %v1218 = vpop.permute.xlu0 %1217
  %1219 = vrot.lane.b32.xlu0 %v818, 125
  %v1220 = vpop.permute.xlu0 %1219
  %1221 = vrot.lane.b32.xlu0 %v819, 125
  %v1222 = vpop.permute.xlu0 %1221
  %1223 = vrot.lane.b32.xlu0 %v820, 125
  %v1224 = vpop.permute.xlu0 %1223
  %1225 = vrot.lane.b32.xlu0 %v821, 125
  %v1226 = vpop.permute.xlu0 %1225
  %1227 = vrot.lane.b32.xlu0 %v822, 125
  %v1228 = vpop.permute.xlu0 %1227
  %1229 = vrot.lane.b32.xlu0 %v823, 125
  %v1230 = vpop.permute.xlu0 %1229
  %1231 = vrot.lane.b32.xlu0 %v824, 125
  %v1232 = vpop.permute.xlu0 %1231
  %1233 = vrot.lane.b32.xlu0 %v825, 125
  %v1234 = vpop.permute.xlu0 %1233
  %1235 = vrot.lane.b32.xlu0 %v826, 125
  %v1236 = vpop.permute.xlu0 %1235
  %vm1237 = vcmask 1022976
  %v1238 = vsel %vm1237, %v1174, %v1176
  %v1239 = vsel %vm1237, %v1176, %v1178
  %v1240 = vsel %vm1237, %v1178, %v1180
  %v1241 = vsel %vm1237, %v1180, %v1182
  %v1242 = vsel %vm1237, %v1182, %v1184
  %v1243 = vsel %vm1237, %v1184, %v1186
  %v1244 = vsel %vm1237, %v1186, %v1188
  %v1245 = vsel %vm1237, %v1190, %v1192
  %v1246 = vsel %vm1237, %v1192, %v1194
  %v1247 = vsel %vm1237, %v1194, %v1196
  %v1248 = vsel %vm1237, %v1196, %v1198
  %v1249 = vsel %vm1237, %v1198, %v1200
  %v1250 = vsel %vm1237, %v1200, %v1202
  %v1251 = vsel %vm1237, %v1202, %v1204
  %v1252 = vsel %vm1237, %v1206, %v1208
  %v1253 = vsel %vm1237, %v1208, %v1210
  %v1254 = vsel %vm1237, %v1210, %v1212
  %v1255 = vsel %vm1237, %v1212, %v1214
  %v1256 = vsel %vm1237, %v1214, %v1216
  %v1257 = vsel %vm1237, %v1216, %v1218
  %v1258 = vsel %vm1237, %v1218, %v1220
  %v1259 = vsel %vm1237, %v1222, %v1224
  %v1260 = vsel %vm1237, %v1224, %v1226
  %v1261 = vsel %vm1237, %v1226, %v1228
  %v1262 = vsel %vm1237, %v1228, %v1230
  %v1263 = vsel %vm1237, %v1230, %v1232
  %v1264 = vsel %vm1237, %v1232, %v1234
  %v1265 = vsel %vm1237, %v1234, %v1236
  %v1298 = vmax.f32 %v1141, %v1238
  %v1299 = vmax.f32 %v1142, %v1239
  %v1300 = vmax.f32 %v1143, %v1240
  %v1301 = vmax.f32 %v1144, %v1241
  %v1302 = vmax.f32 %v1145, %v1242
  %v1303 = vmax.f32 %v1146, %v1243
  %v1304 = vmax.f32 %v1147, %v1244
  %v1305 = vmax.f32 %v1148, %v1188
  %v1306 = vmax.f32 %v1149, %v1245
  %v1307 = vmax.f32 %v1150, %v1246
  %v1308 = vmax.f32 %v1151, %v1247
  %v1309 = vmax.f32 %v1152, %v1248
  %v1310 = vmax.f32 %v1153, %v1249
  %v1311 = vmax.f32 %v1154, %v1250
  %v1312 = vmax.f32 %v1155, %v1251
  %v1313 = vmax.f32 %v1156, %v1204
  %v1314 = vmax.f32 %v1157, %v1252
  %v1315 = vmax.f32 %v1158, %v1253
  %v1316 = vmax.f32 %v1159, %v1254
  %v1317 = vmax.f32 %v1160, %v1255
  %v1318 = vmax.f32 %v1161, %v1256
  %v1319 = vmax.f32 %v1162, %v1257
  %v1320 = vmax.f32 %v1163, %v1258
  %v1321 = vmax.f32 %v1164, %v1220
  %v1322 = vmax.f32 %v1165, %v1259
  %v1323 = vmax.f32 %v1166, %v1260
  %v1324 = vmax.f32 %v1167, %v1261
  %v1325 = vmax.f32 %v1168, %v1262
  %v1326 = vmax.f32 %v1169, %v1263
  %v1327 = vmax.f32 %v1170, %v1264
  %v1328 = vmax.f32 %v1171, %v1265
  %v1329 = vmax.f32 %v1172, %v1236
  %v1330 = vld [vmem:[%s3] sm:$0xff]
  %v1331 = vld [vmem:[%s3 + $0x8] sm:$0xff]
  %v1332 = vld [vmem:[%s3 + $0x10] sm:$0xff]
  %v1333 = vld [vmem:[%s3 + $0x18] sm:$0xff]
  %v1334 = vld [vmem:[%s3 + $0x20] sm:$0xff]
  %v1335 = vld [vmem:[%s3 + $0x28] sm:$0xff]
  %v1336 = vld [vmem:[%s3 + $0x30] sm:$0xff]
  %v1337 = vld [vmem:[%s3 + $0x38] sm:$0xff]
  %v1338 = vld [vmem:[%s3 + $0x40] sm:$0xff]
  %v1339 = vld [vmem:[%s3 + $0x48] sm:$0xff]
  %v1340 = vld [vmem:[%s3 + $0x50] sm:$0xff]
  %v1341 = vld [vmem:[%s3 + $0x58] sm:$0xff]
  %v1342 = vld [vmem:[%s3 + $0x60] sm:$0xff]
  %v1343 = vld [vmem:[%s3 + $0x68] sm:$0xff]
  %v1344 = vld [vmem:[%s3 + $0x70] sm:$0xff]
  %v1345 = vld [vmem:[%s3 + $0x78] sm:$0xff]
  %v1346 = vld [vmem:[%s3 + $0x80] sm:$0xff]
  %v1347 = vld [vmem:[%s3 + $0x88] sm:$0xff]
  %v1348 = vld [vmem:[%s3 + $0x90] sm:$0xff]
  %v1349 = vld [vmem:[%s3 + $0x98] sm:$0xff]
  %v1350 = vld [vmem:[%s3 + $0xa0] sm:$0xff]
  %v1351 = vld [vmem:[%s3 + $0xa8] sm:$0xff]
  %v1352 = vld [vmem:[%s3 + $0xb0] sm:$0xff]
  %v1353 = vld [vmem:[%s3 + $0xb8] sm:$0xff]
  %v1354 = vld [vmem:[%s3 + $0xc0] sm:$0xff]
  %v1355 = vld [vmem:[%s3 + $0xc8] sm:$0xff]
  %v1356 = vld [vmem:[%s3 + $0xd0] sm:$0xff]
  %v1357 = vld [vmem:[%s3 + $0xd8] sm:$0xff]
  %v1358 = vld [vmem:[%s3 + $0xe0] sm:$0xff]
  %v1359 = vld [vmem:[%s3 + $0xe8] sm:$0xff]
  %v1360 = vld [vmem:[%s3 + $0xf0] sm:$0xff]
  %v1361 = vld [vmem:[%s3 + $0xf8] sm:$0xff]
  %v1362 = vld [vmem:[%s3 + $0x100] sm:$0xff]
  %v1363 = vld [vmem:[%s3 + $0x108] sm:$0xff]
  %v1364 = vld [vmem:[%s3 + $0x110] sm:$0xff]
  %v1365 = vld [vmem:[%s3 + $0x118] sm:$0xff]
  %v1366 = vld [vmem:[%s3 + $0x120] sm:$0xff]
  %v1367 = vld [vmem:[%s3 + $0x128] sm:$0xff]
  %v1368 = vld [vmem:[%s3 + $0x130] sm:$0xff]
  %v1369 = vld [vmem:[%s3 + $0x138] sm:$0xff]
  %v1370 = vld [vmem:[%s3 + $0x140] sm:$0xff]
  %v1371 = vld [vmem:[%s3 + $0x148] sm:$0xff]
  %v1372 = vld [vmem:[%s3 + $0x150] sm:$0xff]
  %v1373 = vld [vmem:[%s3 + $0x158] sm:$0xff]
  %v1374 = vld [vmem:[%s3 + $0x160] sm:$0xff]
  %v1375 = vld [vmem:[%s3 + $0x168] sm:$0xff]
  %v1376 = vld [vmem:[%s3 + $0x170] sm:$0xff]
  %v1377 = vld [vmem:[%s3 + $0x178] sm:$0xff]
  %v1378 = vld [vmem:[%s3 + $0x180] sm:$0xff]
  %v1379 = vld [vmem:[%s3 + $0x188] sm:$0xff]
  %v1380 = vld [vmem:[%s3 + $0x190] sm:$0xff]
  %v1381 = vld [vmem:[%s3 + $0x198] sm:$0xff]
  %v1382 = vld [vmem:[%s3 + $0x1a0] sm:$0xff]
  %v1383 = vld [vmem:[%s3 + $0x1a8] sm:$0xff]
  %v1384 = vld [vmem:[%s3 + $0x1b0] sm:$0xff]
  %v1385 = vld [vmem:[%s3 + $0x1b8] sm:$0xff]
  %v1386 = vld [vmem:[%s3 + $0x1c0] sm:$0xff]
  %v1387 = vld [vmem:[%s3 + $0x1c8] sm:$0xff]
  %v1388 = vld [vmem:[%s3 + $0x1d0] sm:$0xff]
  %v1389 = vld [vmem:[%s3 + $0x1d8] sm:$0xff]
  %v1390 = vld [vmem:[%s3 + $0x1e0] sm:$0xff]
  %v1391 = vld [vmem:[%s3 + $0x1e8] sm:$0xff]
  %v1392 = vld [vmem:[%s3 + $0x1f0] sm:$0xff]
  %v1393 = vld [vmem:[%s3 + $0x1f8] sm:$0xff]
  %v1394 = vld [vmem:[%s3 + $0x200] sm:$0xff]
  %v1395 = vld [vmem:[%s3 + $0x208] sm:$0xff]
  %v1396 = vld [vmem:[%s3 + $0x210] sm:$0xff]
  %v1397 = vld [vmem:[%s3 + $0x218] sm:$0xff]
  %v1398 = vld [vmem:[%s3 + $0x220] sm:$0xff]
  %v1399 = vld [vmem:[%s3 + $0x228] sm:$0xff]
  %v1400 = vld [vmem:[%s3 + $0x230] sm:$0xff]
  %v1401 = vld [vmem:[%s3 + $0x238] sm:$0xff]
  %v1402 = vld [vmem:[%s3 + $0x240] sm:$0xff]
  %v1403 = vld [vmem:[%s3 + $0x248] sm:$0xff]
  %v1404 = vld [vmem:[%s3 + $0x250] sm:$0xff]
  %v1405 = vld [vmem:[%s3 + $0x258] sm:$0xff]
  %v1406 = vld [vmem:[%s3 + $0x260] sm:$0xff]
  %v1407 = vld [vmem:[%s3 + $0x268] sm:$0xff]
  %v1408 = vld [vmem:[%s3 + $0x270] sm:$0xff]
  %v1409 = vld [vmem:[%s3 + $0x278] sm:$0xff]
  %v1410 = vld [vmem:[%s3 + $0x280] sm:$0xff]
  %v1411 = vld [vmem:[%s3 + $0x288] sm:$0xff]
  %v1412 = vld [vmem:[%s3 + $0x290] sm:$0xff]
  %v1413 = vld [vmem:[%s3 + $0x298] sm:$0xff]
  %v1414 = vld [vmem:[%s3 + $0x2a0] sm:$0xff]
  %v1415 = vld [vmem:[%s3 + $0x2a8] sm:$0xff]
  %v1416 = vld [vmem:[%s3 + $0x2b0] sm:$0xff]
  %v1417 = vld [vmem:[%s3 + $0x2b8] sm:$0xff]
  %v1418 = vld [vmem:[%s3 + $0x2c0] sm:$0xff]
  %v1419 = vld [vmem:[%s3 + $0x2c8] sm:$0xff]
  %v1420 = vld [vmem:[%s3 + $0x2d0] sm:$0xff]
  %v1421 = vld [vmem:[%s3 + $0x2d8] sm:$0xff]
  %v1422 = vld [vmem:[%s3 + $0x2e0] sm:$0xff]
  %v1423 = vld [vmem:[%s3 + $0x2e8] sm:$0xff]
  %v1424 = vld [vmem:[%s3 + $0x2f0] sm:$0xff]
  %v1425 = vld [vmem:[%s3 + $0x2f8] sm:$0xff]
  %v1426 = vld [vmem:[%s3 + $0x300] sm:$0xff]
  %v1427 = vld [vmem:[%s3 + $0x308] sm:$0xff]
  %v1428 = vld [vmem:[%s3 + $0x310] sm:$0xff]
  %v1429 = vld [vmem:[%s3 + $0x318] sm:$0xff]
  %v1430 = vld [vmem:[%s3 + $0x320] sm:$0xff]
  %v1431 = vld [vmem:[%s3 + $0x328] sm:$0xff]
  %v1432 = vld [vmem:[%s3 + $0x330] sm:$0xff]
  %v1433 = vld [vmem:[%s3 + $0x338] sm:$0xff]
  %v1434 = vld [vmem:[%s3 + $0x340] sm:$0xff]
  %v1435 = vld [vmem:[%s3 + $0x348] sm:$0xff]
  %v1436 = vld [vmem:[%s3 + $0x350] sm:$0xff]
  %v1437 = vld [vmem:[%s3 + $0x358] sm:$0xff]
  %v1438 = vld [vmem:[%s3 + $0x360] sm:$0xff]
  %v1439 = vld [vmem:[%s3 + $0x368] sm:$0xff]
  %v1440 = vld [vmem:[%s3 + $0x370] sm:$0xff]
  %v1441 = vld [vmem:[%s3 + $0x378] sm:$0xff]
  %v1442 = vld [vmem:[%s3 + $0x380] sm:$0xff]
  %v1443 = vld [vmem:[%s3 + $0x388] sm:$0xff]
  %v1444 = vld [vmem:[%s3 + $0x390] sm:$0xff]
  %v1445 = vld [vmem:[%s3 + $0x398] sm:$0xff]
  %v1446 = vld [vmem:[%s3 + $0x3a0] sm:$0xff]
  %v1447 = vld [vmem:[%s3 + $0x3a8] sm:$0xff]
  %v1448 = vld [vmem:[%s3 + $0x3b0] sm:$0xff]
  %v1449 = vld [vmem:[%s3 + $0x3b8] sm:$0xff]
  %v1450 = vld [vmem:[%s3 + $0x3c0] sm:$0xff]
  %v1451 = vld [vmem:[%s3 + $0x3c8] sm:$0xff]
  %v1452 = vld [vmem:[%s3 + $0x3d0] sm:$0xff]
  %v1453 = vld [vmem:[%s3 + $0x3d8] sm:$0x77]
  %v1454 = vpack.c.bf16 %v1306, %v1298
  %v1455 = vpack.c.bf16 %v1307, %v1299
  %v1456 = vpack.c.bf16 %v1308, %v1300
  %v1457 = vpack.c.bf16 %v1309, %v1301
  %v1458 = vpack.c.bf16 %v1310, %v1302
  %v1459 = vpack.c.bf16 %v1311, %v1303
  %v1460 = vpack.c.bf16 %v1312, %v1304
  %v1461 = vpack.c.bf16 %v1313, %v1305
  %v1462 = vpack.c.bf16 %v1322, %v1314
  %v1463 = vpack.c.bf16 %v1323, %v1315
  %v1464 = vpack.c.bf16 %v1324, %v1316
  %v1465 = vpack.c.bf16 %v1325, %v1317
  %v1466 = vpack.c.bf16 %v1326, %v1318
  %v1467 = vpack.c.bf16 %v1327, %v1319
  %v1468 = vpack.c.bf16 %v1328, %v1320
  %v1469 = vpack.c.bf16 %v1329, %v1321
  %v1594 = vunpack.c.l.b16 %v1330
  %v1595 = vunpack.c.h.b16 %v1330
  %v1596 = vunpack.c.l.b16 %v1331
  %v1597 = vunpack.c.h.b16 %v1331
  %v1598 = vunpack.c.l.b16 %v1332
  %v1599 = vunpack.c.h.b16 %v1332
  %v1600 = vunpack.c.l.b16 %v1333
  %v1601 = vunpack.c.h.b16 %v1333
  %v1602 = vunpack.c.l.b16 %v1334
  %v1603 = vunpack.c.h.b16 %v1334
  %v1604 = vunpack.c.l.b16 %v1335
  %v1605 = vunpack.c.h.b16 %v1335
  %v1606 = vunpack.c.l.b16 %v1336
  %v1607 = vunpack.c.h.b16 %v1336
  %v1608 = vunpack.c.l.b16 %v1337
  %v1609 = vunpack.c.h.b16 %v1337
  %v1610 = vunpack.c.l.b16 %v1338
  %v1611 = vunpack.c.h.b16 %v1338
  %v1612 = vunpack.c.l.b16 %v1339
  %v1613 = vunpack.c.h.b16 %v1339
  %v1614 = vunpack.c.l.b16 %v1340
  %v1615 = vunpack.c.h.b16 %v1340
  %v1616 = vunpack.c.l.b16 %v1341
  %v1617 = vunpack.c.h.b16 %v1341
  %v1618 = vunpack.c.l.b16 %v1342
  %v1619 = vunpack.c.h.b16 %v1342
  %v1620 = vunpack.c.l.b16 %v1343
  %v1621 = vunpack.c.h.b16 %v1343
  %v1622 = vunpack.c.l.b16 %v1344
  %v1623 = vunpack.c.h.b16 %v1344
  %v1624 = vunpack.c.l.b16 %v1345
  %v1625 = vunpack.c.h.b16 %v1345
  %v1626 = vunpack.c.l.b16 %v1346
  %v1627 = vunpack.c.h.b16 %v1346
  %v1628 = vunpack.c.l.b16 %v1347
  %v1629 = vunpack.c.h.b16 %v1347
  %v1630 = vunpack.c.l.b16 %v1348
  %v1631 = vunpack.c.h.b16 %v1348
  %v1632 = vunpack.c.l.b16 %v1349
  %v1633 = vunpack.c.h.b16 %v1349
  %v1634 = vunpack.c.l.b16 %v1350
  %v1635 = vunpack.c.h.b16 %v1350
  %v1636 = vunpack.c.l.b16 %v1351
  %v1637 = vunpack.c.h.b16 %v1351
  %v1638 = vunpack.c.l.b16 %v1352
  %v1639 = vunpack.c.h.b16 %v1352
  %v1640 = vunpack.c.l.b16 %v1353
  %v1641 = vunpack.c.h.b16 %v1353
  %v1642 = vunpack.c.l.b16 %v1354
  %v1643 = vunpack.c.h.b16 %v1354
  %v1644 = vunpack.c.l.b16 %v1355
  %v1645 = vunpack.c.h.b16 %v1355
  %v1646 = vunpack.c.l.b16 %v1356
  %v1647 = vunpack.c.h.b16 %v1356
  %v1648 = vunpack.c.l.b16 %v1357
  %v1649 = vunpack.c.h.b16 %v1357
  %v1650 = vunpack.c.l.b16 %v1358
  %v1651 = vunpack.c.h.b16 %v1358
  %v1652 = vunpack.c.l.b16 %v1359
  %v1653 = vunpack.c.h.b16 %v1359
  %v1654 = vunpack.c.l.b16 %v1360
  %v1655 = vunpack.c.h.b16 %v1360
  %v1656 = vunpack.c.l.b16 %v1361
  %v1657 = vunpack.c.h.b16 %v1361
  %v1658 = vunpack.c.l.b16 %v1362
  %v1659 = vunpack.c.h.b16 %v1362
  %v1660 = vunpack.c.l.b16 %v1363
  %v1661 = vunpack.c.h.b16 %v1363
  %v1662 = vunpack.c.l.b16 %v1364
  %v1663 = vunpack.c.h.b16 %v1364
  %v1664 = vunpack.c.l.b16 %v1365
  %v1665 = vunpack.c.h.b16 %v1365
  %v1666 = vunpack.c.l.b16 %v1366
  %v1667 = vunpack.c.h.b16 %v1366
  %v1668 = vunpack.c.l.b16 %v1367
  %v1669 = vunpack.c.h.b16 %v1367
  %v1670 = vunpack.c.l.b16 %v1368
  %v1671 = vunpack.c.h.b16 %v1368
  %v1672 = vunpack.c.l.b16 %v1369
  %v1673 = vunpack.c.h.b16 %v1369
  %v1674 = vunpack.c.l.b16 %v1370
  %v1675 = vunpack.c.h.b16 %v1370
  %v1676 = vunpack.c.l.b16 %v1371
  %v1677 = vunpack.c.h.b16 %v1371
  %v1678 = vunpack.c.l.b16 %v1372
  %v1679 = vunpack.c.h.b16 %v1372
  %v1680 = vunpack.c.l.b16 %v1373
  %v1681 = vunpack.c.h.b16 %v1373
  %v1682 = vunpack.c.l.b16 %v1374
  %v1683 = vunpack.c.h.b16 %v1374
  %v1684 = vunpack.c.l.b16 %v1375
  %v1685 = vunpack.c.h.b16 %v1375
  %v1686 = vunpack.c.l.b16 %v1376
  %v1687 = vunpack.c.h.b16 %v1376
  %v1688 = vunpack.c.l.b16 %v1377
  %v1689 = vunpack.c.h.b16 %v1377
  %v1690 = vunpack.c.l.b16 %v1378
  %v1691 = vunpack.c.h.b16 %v1378
  %v1692 = vunpack.c.l.b16 %v1379
  %v1693 = vunpack.c.h.b16 %v1379
  %v1694 = vunpack.c.l.b16 %v1380
  %v1695 = vunpack.c.h.b16 %v1380
  %v1696 = vunpack.c.l.b16 %v1381
  %v1697 = vunpack.c.h.b16 %v1381
  %v1698 = vunpack.c.l.b16 %v1382
  %v1699 = vunpack.c.h.b16 %v1382
  %v1700 = vunpack.c.l.b16 %v1383
  %v1701 = vunpack.c.h.b16 %v1383
  %v1702 = vunpack.c.l.b16 %v1384
  %v1703 = vunpack.c.h.b16 %v1384
  %v1704 = vunpack.c.l.b16 %v1385
  %v1705 = vunpack.c.h.b16 %v1385
  %v1706 = vunpack.c.l.b16 %v1386
  %v1707 = vunpack.c.h.b16 %v1386
  %v1708 = vunpack.c.l.b16 %v1387
  %v1709 = vunpack.c.h.b16 %v1387
  %v1710 = vunpack.c.l.b16 %v1388
  %v1711 = vunpack.c.h.b16 %v1388
  %v1712 = vunpack.c.l.b16 %v1389
  %v1713 = vunpack.c.h.b16 %v1389
  %v1714 = vunpack.c.l.b16 %v1390
  %v1715 = vunpack.c.h.b16 %v1390
  %v1716 = vunpack.c.l.b16 %v1391
  %v1717 = vunpack.c.h.b16 %v1391
  %v1718 = vunpack.c.l.b16 %v1392
  %v1719 = vunpack.c.h.b16 %v1392
  %v1720 = vunpack.c.l.b16 %v1393
  %v1721 = vunpack.c.h.b16 %v1393
  %v1722 = vunpack.c.l.b16 %v1394
  %v1723 = vunpack.c.h.b16 %v1394
  %v1724 = vunpack.c.l.b16 %v1395
  %v1725 = vunpack.c.h.b16 %v1395
  %v1726 = vunpack.c.l.b16 %v1396
  %v1727 = vunpack.c.h.b16 %v1396
  %v1728 = vunpack.c.l.b16 %v1397
  %v1729 = vunpack.c.h.b16 %v1397
  %v1730 = vunpack.c.l.b16 %v1398
  %v1731 = vunpack.c.h.b16 %v1398
  %v1732 = vunpack.c.l.b16 %v1399
  %v1733 = vunpack.c.h.b16 %v1399
  %v1734 = vunpack.c.l.b16 %v1400
  %v1735 = vunpack.c.h.b16 %v1400
  %v1736 = vunpack.c.l.b16 %v1401
  %v1737 = vunpack.c.h.b16 %v1401
  %v1738 = vunpack.c.l.b16 %v1402
  %v1739 = vunpack.c.h.b16 %v1402
  %v1740 = vunpack.c.l.b16 %v1403
  %v1741 = vunpack.c.h.b16 %v1403
  %v1742 = vunpack.c.l.b16 %v1404
  %v1743 = vunpack.c.h.b16 %v1404
  %v1744 = vunpack.c.l.b16 %v1405
  %v1745 = vunpack.c.h.b16 %v1405
  %v1746 = vunpack.c.l.b16 %v1406
  %v1747 = vunpack.c.h.b16 %v1406
  %v1748 = vunpack.c.l.b16 %v1407
  %v1749 = vunpack.c.h.b16 %v1407
  %v1750 = vunpack.c.l.b16 %v1408
  %v1751 = vunpack.c.h.b16 %v1408
  %v1752 = vunpack.c.l.b16 %v1409
  %v1753 = vunpack.c.h.b16 %v1409
  %v1754 = vunpack.c.l.b16 %v1410
  %v1755 = vunpack.c.h.b16 %v1410
  %v1756 = vunpack.c.l.b16 %v1411
  %v1757 = vunpack.c.h.b16 %v1411
  %v1758 = vunpack.c.l.b16 %v1412
  %v1759 = vunpack.c.h.b16 %v1412
  %v1760 = vunpack.c.l.b16 %v1413
  %v1761 = vunpack.c.h.b16 %v1413
  %v1762 = vunpack.c.l.b16 %v1414
  %v1763 = vunpack.c.h.b16 %v1414
  %v1764 = vunpack.c.l.b16 %v1415
  %v1765 = vunpack.c.h.b16 %v1415
  %v1766 = vunpack.c.l.b16 %v1416
  %v1767 = vunpack.c.h.b16 %v1416
  %v1768 = vunpack.c.l.b16 %v1417
  %v1769 = vunpack.c.h.b16 %v1417
  %v1770 = vunpack.c.l.b16 %v1418
  %v1771 = vunpack.c.h.b16 %v1418
  %v1772 = vunpack.c.l.b16 %v1419
  %v1773 = vunpack.c.h.b16 %v1419
  %v1774 = vunpack.c.l.b16 %v1420
  %v1775 = vunpack.c.h.b16 %v1420
  %v1776 = vunpack.c.l.b16 %v1421
  %v1777 = vunpack.c.h.b16 %v1421
  %v1778 = vunpack.c.l.b16 %v1422
  %v1779 = vunpack.c.h.b16 %v1422
  %v1780 = vunpack.c.l.b16 %v1423
  %v1781 = vunpack.c.h.b16 %v1423
  %v1782 = vunpack.c.l.b16 %v1424
  %v1783 = vunpack.c.h.b16 %v1424
  %v1784 = vunpack.c.l.b16 %v1425
  %v1785 = vunpack.c.h.b16 %v1425
  %v1786 = vunpack.c.l.b16 %v1426
  %v1787 = vunpack.c.h.b16 %v1426
  %v1788 = vunpack.c.l.b16 %v1427
  %v1789 = vunpack.c.h.b16 %v1427
  %v1790 = vunpack.c.l.b16 %v1428
  %v1791 = vunpack.c.h.b16 %v1428
  %v1792 = vunpack.c.l.b16 %v1429
  %v1793 = vunpack.c.h.b16 %v1429
  %v1794 = vunpack.c.l.b16 %v1430
  %v1795 = vunpack.c.h.b16 %v1430
  %v1796 = vunpack.c.l.b16 %v1431
  %v1797 = vunpack.c.h.b16 %v1431
  %v1798 = vunpack.c.l.b16 %v1432
  %v1799 = vunpack.c.h.b16 %v1432
  %v1800 = vunpack.c.l.b16 %v1433
  %v1801 = vunpack.c.h.b16 %v1433
  %v1802 = vunpack.c.l.b16 %v1434
  %v1803 = vunpack.c.h.b16 %v1434
  %v1804 = vunpack.c.l.b16 %v1435
  %v1805 = vunpack.c.h.b16 %v1435
  %v1806 = vunpack.c.l.b16 %v1436
  %v1807 = vunpack.c.h.b16 %v1436
  %v1808 = vunpack.c.l.b16 %v1437
  %v1809 = vunpack.c.h.b16 %v1437
  %v1810 = vunpack.c.l.b16 %v1438
  %v1811 = vunpack.c.h.b16 %v1438
  %v1812 = vunpack.c.l.b16 %v1439
  %v1813 = vunpack.c.h.b16 %v1439
  %v1814 = vunpack.c.l.b16 %v1440
  %v1815 = vunpack.c.h.b16 %v1440
  %v1816 = vunpack.c.l.b16 %v1441
  %v1817 = vunpack.c.h.b16 %v1441
  %v1818 = vunpack.c.l.b16 %v1442
  %v1819 = vunpack.c.h.b16 %v1442
  %v1820 = vunpack.c.l.b16 %v1443
  %v1821 = vunpack.c.h.b16 %v1443
  %v1822 = vunpack.c.l.b16 %v1444
  %v1823 = vunpack.c.h.b16 %v1444
  %v1824 = vunpack.c.l.b16 %v1445
  %v1825 = vunpack.c.h.b16 %v1445
  %v1826 = vunpack.c.l.b16 %v1446
  %v1827 = vunpack.c.h.b16 %v1446
  %v1828 = vunpack.c.l.b16 %v1447
  %v1829 = vunpack.c.h.b16 %v1447
  %v1830 = vunpack.c.l.b16 %v1448
  %v1831 = vunpack.c.h.b16 %v1448
  %v1832 = vunpack.c.l.b16 %v1449
  %v1833 = vunpack.c.h.b16 %v1449
  %v1834 = vunpack.c.l.b16 %v1450
  %v1835 = vunpack.c.h.b16 %v1450
  %v1836 = vunpack.c.l.b16 %v1451
  %v1837 = vunpack.c.h.b16 %v1451
  %v1838 = vunpack.c.l.b16 %v1452
  %v1839 = vunpack.c.h.b16 %v1452
  %v1840 = vunpack.c.l.b16 %v1453
  %v1841 = vunpack.c.h.b16 %v1453
  %v1842 = vpack.c.b16 %v1596, %v1594
  %v1843 = vpack.c.b16 %v1597, %v1595
  %v1844 = vpack.c.b16 %v1600, %v1598
  %v1845 = vpack.c.b16 %v1601, %v1599
  %v1846 = vpack.c.b16 %v1604, %v1602
  %v1847 = vpack.c.b16 %v1605, %v1603
  %v1848 = vpack.c.b16 %v1608, %v1606
  %v1849 = vpack.c.b16 %v1609, %v1607
  %v1850 = vpack.c.b16 %v1612, %v1610
  %v1851 = vpack.c.b16 %v1613, %v1611
  %v1852 = vpack.c.b16 %v1616, %v1614
  %v1853 = vpack.c.b16 %v1617, %v1615
  %v1854 = vpack.c.b16 %v1620, %v1618
  %v1855 = vpack.c.b16 %v1621, %v1619
  %v1856 = vpack.c.b16 %v1624, %v1622
  %v1857 = vpack.c.b16 %v1625, %v1623
  %v1858 = vpack.c.b16 %v1628, %v1626
  %v1859 = vpack.c.b16 %v1629, %v1627
  %v1860 = vpack.c.b16 %v1632, %v1630
  %v1861 = vpack.c.b16 %v1633, %v1631
  %v1862 = vpack.c.b16 %v1636, %v1634
  %v1863 = vpack.c.b16 %v1637, %v1635
  %v1864 = vpack.c.b16 %v1640, %v1638
  %v1865 = vpack.c.b16 %v1641, %v1639
  %v1866 = vpack.c.b16 %v1644, %v1642
  %v1867 = vpack.c.b16 %v1645, %v1643
  %v1868 = vpack.c.b16 %v1648, %v1646
  %v1869 = vpack.c.b16 %v1649, %v1647
  %v1870 = vpack.c.b16 %v1652, %v1650
  %v1871 = vpack.c.b16 %v1653, %v1651
  %v1872 = vpack.c.b16 %v1656, %v1654
  %v1873 = vpack.c.b16 %v1657, %v1655
  %v1874 = vpack.c.b16 %v1660, %v1658
  %v1875 = vpack.c.b16 %v1661, %v1659
  %v1876 = vpack.c.b16 %v1664, %v1662
  %v1877 = vpack.c.b16 %v1665, %v1663
  %v1878 = vpack.c.b16 %v1668, %v1666
  %v1879 = vpack.c.b16 %v1669, %v1667
  %v1880 = vpack.c.b16 %v1672, %v1670
  %v1881 = vpack.c.b16 %v1673, %v1671
  %v1882 = vpack.c.b16 %v1676, %v1674
  %v1883 = vpack.c.b16 %v1677, %v1675
  %v1884 = vpack.c.b16 %v1680, %v1678
  %v1885 = vpack.c.b16 %v1681, %v1679
  %v1886 = vpack.c.b16 %v1684, %v1682
  %v1887 = vpack.c.b16 %v1685, %v1683
  %v1888 = vpack.c.b16 %v1688, %v1686
  %v1889 = vpack.c.b16 %v1689, %v1687
  %v1890 = vpack.c.b16 %v1692, %v1690
  %v1891 = vpack.c.b16 %v1693, %v1691
  %v1892 = vpack.c.b16 %v1696, %v1694
  %v1893 = vpack.c.b16 %v1697, %v1695
  %v1894 = vpack.c.b16 %v1700, %v1698
  %v1895 = vpack.c.b16 %v1701, %v1699
  %v1896 = vpack.c.b16 %v1704, %v1702
  %v1897 = vpack.c.b16 %v1705, %v1703
  %v1898 = vpack.c.b16 %v1708, %v1706
  %v1899 = vpack.c.b16 %v1709, %v1707
  %v1900 = vpack.c.b16 %v1712, %v1710
  %v1901 = vpack.c.b16 %v1713, %v1711
  %v1902 = vpack.c.b16 %v1716, %v1714
  %v1903 = vpack.c.b16 %v1717, %v1715
  %v1904 = vpack.c.b16 %v1720, %v1718
  %v1905 = vpack.c.b16 %v1721, %v1719
  %v1906 = vpack.c.b16 %v1724, %v1722
  %v1907 = vpack.c.b16 %v1725, %v1723
  %v1908 = vpack.c.b16 %v1728, %v1726
  %v1909 = vpack.c.b16 %v1729, %v1727
  %v1910 = vpack.c.b16 %v1732, %v1730
  %v1911 = vpack.c.b16 %v1733, %v1731
  %v1912 = vpack.c.b16 %v1736, %v1734
  %v1913 = vpack.c.b16 %v1737, %v1735
  %v1914 = vpack.c.b16 %v1740, %v1738
  %v1915 = vpack.c.b16 %v1741, %v1739
  %v1916 = vpack.c.b16 %v1744, %v1742
  %v1917 = vpack.c.b16 %v1745, %v1743
  %v1918 = vpack.c.b16 %v1748, %v1746
  %v1919 = vpack.c.b16 %v1749, %v1747
  %v1920 = vpack.c.b16 %v1752, %v1750
  %v1921 = vpack.c.b16 %v1753, %v1751
  %v1922 = vpack.c.b16 %v1756, %v1754
  %v1923 = vpack.c.b16 %v1757, %v1755
  %v1924 = vpack.c.b16 %v1760, %v1758
  %v1925 = vpack.c.b16 %v1761, %v1759
  %v1926 = vpack.c.b16 %v1764, %v1762
  %v1927 = vpack.c.b16 %v1765, %v1763
  %v1928 = vpack.c.b16 %v1768, %v1766
  %v1929 = vpack.c.b16 %v1769, %v1767
  %v1930 = vpack.c.b16 %v1772, %v1770
  %v1931 = vpack.c.b16 %v1773, %v1771
  %v1932 = vpack.c.b16 %v1776, %v1774
  %v1933 = vpack.c.b16 %v1777, %v1775
  %v1934 = vpack.c.b16 %v1780, %v1778
  %v1935 = vpack.c.b16 %v1781, %v1779
  %v1936 = vpack.c.b16 %v1784, %v1782
  %v1937 = vpack.c.b16 %v1785, %v1783
  %v1938 = vpack.c.b16 %v1788, %v1786
  %v1939 = vpack.c.b16 %v1789, %v1787
  %v1940 = vpack.c.b16 %v1792, %v1790
  %v1941 = vpack.c.b16 %v1793, %v1791
  %v1942 = vpack.c.b16 %v1796, %v1794
  %v1943 = vpack.c.b16 %v1797, %v1795
  %v1944 = vpack.c.b16 %v1800, %v1798
  %v1945 = vpack.c.b16 %v1801, %v1799
  %v1946 = vpack.c.b16 %v1804, %v1802
  %v1947 = vpack.c.b16 %v1805, %v1803
  %v1948 = vpack.c.b16 %v1808, %v1806
  %v1949 = vpack.c.b16 %v1809, %v1807
  %v1950 = vpack.c.b16 %v1812, %v1810
  %v1951 = vpack.c.b16 %v1813, %v1811
  %v1952 = vpack.c.b16 %v1816, %v1814
  %v1953 = vpack.c.b16 %v1817, %v1815
  %v1954 = vpack.c.b16 %v1820, %v1818
  %v1955 = vpack.c.b16 %v1821, %v1819
  %v1956 = vpack.c.b16 %v1824, %v1822
  %v1957 = vpack.c.b16 %v1825, %v1823
  %v1958 = vpack.c.b16 %v1828, %v1826
  %v1959 = vpack.c.b16 %v1829, %v1827
  %v1960 = vpack.c.b16 %v1832, %v1830
  %v1961 = vpack.c.b16 %v1833, %v1831
  %v1962 = vpack.c.b16 %v1836, %v1834
  %v1963 = vpack.c.b16 %v1837, %v1835
  %v1964 = vpack.c.b16 %v1840, %v1838
  %v1965 = vpack.c.b16 %v1841, %v1839
  %vm2088 = vcmask 760832
  %v2090 = vsel %vm2088, %v1461, 0
  %v2093 = vsel %vm2088, %v1469, 0
  %vm2095 = vcmask 1045504
  %vm2096 = vcmask 1046528
  %v2097 = vsel %vm2095, 4294967295, 65535
  %v2098 = vsel %vm2096, %v2097, 0
  %v2100 = vand.u32 %v1964, %v2098
  %v2103 = vand.u32 %v1965, %v2098
  %2105 = vmatprep.subr.bf16.mxu0 %v1857
  %2106 = vmatpush1.bf16.msra.mxu0 %v1856
  %2107 = vmatprep.subr.bf16.mxu0 %v1855
  %2108 = vmatpush1.bf16.msra.mxu0 %v1854
  %2109 = vmatprep.subr.bf16.mxu0 %v1853
  %2110 = vmatpush1.bf16.msra.mxu0 %v1852
  %2111 = vmatprep.subr.bf16.mxu0 %v1851
  %2112 = vmatpush1.bf16.msra.mxu0 %v1850
  %2113 = vmatprep.subr.bf16.mxu0 %v1849
  %2114 = vmatpush1.bf16.msra.mxu0 %v1848
  %2115 = vmatprep.subr.bf16.mxu0 %v1847
  %2116 = vmatpush1.bf16.msra.mxu0 %v1846
  %2117 = vmatprep.subr.bf16.mxu0 %v1845
  %2118 = vmatpush1.bf16.msra.mxu0 %v1844
  %2119 = vmatprep.subr.bf16.mxu0 %v1843
  %2120 = vmatpush1.bf16.msra.mxu0 %v1842
  %2121 = vmatprep.subr.bf16.mxu0 %v1873
  %2122 = vmatpush2.bf16.msra.mxu0 %v1872
  %2123 = vmatprep.subr.bf16.mxu0 %v1871
  %2124 = vmatpush2.bf16.msra.mxu0 %v1870
  %2125 = vmatprep.subr.bf16.mxu0 %v1869
  %2126 = vmatpush2.bf16.msra.mxu0 %v1868
  %2127 = vmatprep.subr.bf16.mxu0 %v1867
  %2128 = vmatpush2.bf16.msra.mxu0 %v1866
  %2129 = vmatprep.subr.bf16.mxu0 %v1865
  %2130 = vmatpush2.bf16.msra.mxu0 %v1864
  %2131 = vmatprep.subr.bf16.mxu0 %v1863
  %2132 = vmatpush2.bf16.msra.mxu0 %v1862
  %2133 = vmatprep.subr.bf16.mxu0 %v1861
  %2134 = vmatpush2.bf16.msra.mxu0 %v1860
  %2135 = vmatprep.subr.bf16.mxu0 %v1859
  %2136 = vmatpush2.bf16.msra.mxu0 %v1858
  %2137 = vmatprep.mubr.bf16.mxu0 %v1455
  %2138 = vmatmul.mubr.bf16.gmra.mxu0 %v1454
  %v2139 = vpop.f32.mrf.mxu0
  %v2140 = vadd.f32 0.0, %v2139
  %v2141 = vpop.f32.mrf.mxu0
  %v2142 = vadd.f32 0.0, %v2141
  %v2143 = vpop.f32.mrf.mxu0
  %v2144 = vadd.f32 0.0, %v2143
  %v2145 = vpop.f32.mrf.mxu0
  %v2146 = vadd.f32 0.0, %v2145
  %2147 = vmatprep.mubr.bf16.mxu0 %v1463
  %2148 = vmatmul.mubr.bf16.gmra.mxu0 %v1462
  %v2149 = vpop.f32.mrf.mxu0
  %v2150 = vadd.f32 0.0, %v2149
  %v2151 = vpop.f32.mrf.mxu0
  %v2152 = vadd.f32 0.0, %v2151
  %v2153 = vpop.f32.mrf.mxu0
  %v2154 = vadd.f32 0.0, %v2153
  %v2155 = vpop.f32.mrf.mxu0
  %v2156 = vadd.f32 0.0, %v2155
  %2157 = vdwg.mxu0
  %2158 = vmatprep.subr.bf16.mxu0 %v1889
  %2159 = vmatpush1.bf16.msra.mxu0 %v1888
  %2160 = vmatprep.subr.bf16.mxu0 %v1887
  %2161 = vmatpush1.bf16.msra.mxu0 %v1886
  %2162 = vmatprep.subr.bf16.mxu0 %v1885
  %2163 = vmatpush1.bf16.msra.mxu0 %v1884
  %2164 = vmatprep.subr.bf16.mxu0 %v1883
  %2165 = vmatpush1.bf16.msra.mxu0 %v1882
  %2166 = vmatprep.subr.bf16.mxu0 %v1881
  %2167 = vmatpush1.bf16.msra.mxu0 %v1880
  %2168 = vmatprep.subr.bf16.mxu0 %v1879
  %2169 = vmatpush1.bf16.msra.mxu0 %v1878
  %2170 = vmatprep.subr.bf16.mxu0 %v1877
  %2171 = vmatpush1.bf16.msra.mxu0 %v1876
  %2172 = vmatprep.subr.bf16.mxu0 %v1875
  %2173 = vmatpush1.bf16.msra.mxu0 %v1874
  %2174 = vmatprep.subr.bf16.mxu0 %v1905
  %2175 = vmatpush2.bf16.msra.mxu0 %v1904
  %2176 = vmatprep.subr.bf16.mxu0 %v1903
  %2177 = vmatpush2.bf16.msra.mxu0 %v1902
  %2178 = vmatprep.subr.bf16.mxu0 %v1901
  %2179 = vmatpush2.bf16.msra.mxu0 %v1900
  %2180 = vmatprep.subr.bf16.mxu0 %v1899
  %2181 = vmatpush2.bf16.msra.mxu0 %v1898
  %2182 = vmatprep.subr.bf16.mxu0 %v1897
  %2183 = vmatpush2.bf16.msra.mxu0 %v1896
  %2184 = vmatprep.subr.bf16.mxu0 %v1895
  %2185 = vmatpush2.bf16.msra.mxu0 %v1894
  %2186 = vmatprep.subr.bf16.mxu0 %v1893
  %2187 = vmatpush2.bf16.msra.mxu0 %v1892
  %2188 = vmatprep.subr.bf16.mxu0 %v1891
  %2189 = vmatpush2.bf16.msra.mxu0 %v1890
  %2190 = vmatprep.mubr.bf16.mxu0 %v1457
  %2191 = vmatmul.mubr.bf16.gmra.mxu0 %v1456
  %v2192 = vpop.f32.mrf.mxu0
  %v2193 = vadd.f32 %v2140, %v2192
  %v2194 = vpop.f32.mrf.mxu0
  %v2195 = vadd.f32 %v2142, %v2194
  %v2196 = vpop.f32.mrf.mxu0
  %v2197 = vadd.f32 %v2144, %v2196
  %v2198 = vpop.f32.mrf.mxu0
  %v2199 = vadd.f32 %v2146, %v2198
  %2200 = vmatprep.mubr.bf16.mxu0 %v1465
  %2201 = vmatmul.mubr.bf16.gmra.mxu0 %v1464
  %v2202 = vpop.f32.mrf.mxu0
  %v2203 = vadd.f32 %v2150, %v2202
  %v2204 = vpop.f32.mrf.mxu0
  %v2205 = vadd.f32 %v2152, %v2204
  %v2206 = vpop.f32.mrf.mxu0
  %v2207 = vadd.f32 %v2154, %v2206
  %v2208 = vpop.f32.mrf.mxu0
  %v2209 = vadd.f32 %v2156, %v2208
  %2210 = vdwg.mxu0
  %2211 = vmatprep.subr.bf16.mxu0 %v1921
  %2212 = vmatpush1.bf16.msra.mxu0 %v1920
  %2213 = vmatprep.subr.bf16.mxu0 %v1919
  %2214 = vmatpush1.bf16.msra.mxu0 %v1918
  %2215 = vmatprep.subr.bf16.mxu0 %v1917
  %2216 = vmatpush1.bf16.msra.mxu0 %v1916
  %2217 = vmatprep.subr.bf16.mxu0 %v1915
  %2218 = vmatpush1.bf16.msra.mxu0 %v1914
  %2219 = vmatprep.subr.bf16.mxu0 %v1913
  %2220 = vmatpush1.bf16.msra.mxu0 %v1912
  %2221 = vmatprep.subr.bf16.mxu0 %v1911
  %2222 = vmatpush1.bf16.msra.mxu0 %v1910
  %2223 = vmatprep.subr.bf16.mxu0 %v1909
  %2224 = vmatpush1.bf16.msra.mxu0 %v1908
  %2225 = vmatprep.subr.bf16.mxu0 %v1907
  %2226 = vmatpush1.bf16.msra.mxu0 %v1906
  %2227 = vmatprep.subr.bf16.mxu0 %v1937
  %2228 = vmatpush2.bf16.msra.mxu0 %v1936
  %2229 = vmatprep.subr.bf16.mxu0 %v1935
  %2230 = vmatpush2.bf16.msra.mxu0 %v1934
  %2231 = vmatprep.subr.bf16.mxu0 %v1933
  %2232 = vmatpush2.bf16.msra.mxu0 %v1932
  %2233 = vmatprep.subr.bf16.mxu0 %v1931
  %2234 = vmatpush2.bf16.msra.mxu0 %v1930
  %2235 = vmatprep.subr.bf16.mxu0 %v1929
  %2236 = vmatpush2.bf16.msra.mxu0 %v1928
  %2237 = vmatprep.subr.bf16.mxu0 %v1927
  %2238 = vmatpush2.bf16.msra.mxu0 %v1926
  %2239 = vmatprep.subr.bf16.mxu0 %v1925
  %2240 = vmatpush2.bf16.msra.mxu0 %v1924
  %2241 = vmatprep.subr.bf16.mxu0 %v1923
  %2242 = vmatpush2.bf16.msra.mxu0 %v1922
  %2243 = vmatprep.mubr.bf16.mxu0 %v1459
  %2244 = vmatmul.mubr.bf16.gmra.mxu0 %v1458
  %v2245 = vpop.f32.mrf.mxu0
  %v2246 = vadd.f32 %v2193, %v2245
  %v2247 = vpop.f32.mrf.mxu0
  %v2248 = vadd.f32 %v2195, %v2247
  %v2249 = vpop.f32.mrf.mxu0
  %v2250 = vadd.f32 %v2197, %v2249
  %v2251 = vpop.f32.mrf.mxu0
  %v2252 = vadd.f32 %v2199, %v2251
  %2253 = vmatprep.mubr.bf16.mxu0 %v1467
  %2254 = vmatmul.mubr.bf16.gmra.mxu0 %v1466
  %v2255 = vpop.f32.mrf.mxu0
  %v2256 = vadd.f32 %v2203, %v2255
  %v2257 = vpop.f32.mrf.mxu0
  %v2258 = vadd.f32 %v2205, %v2257
  %v2259 = vpop.f32.mrf.mxu0
  %v2260 = vadd.f32 %v2207, %v2259
  %v2261 = vpop.f32.mrf.mxu0
  %v2262 = vadd.f32 %v2209, %v2261
  %2263 = vdwg.mxu0
  %2264 = vmatprep.subr.bf16.mxu0 %v1953
  %2265 = vmatpush1.bf16.msra.mxu0 %v1952
  %2266 = vmatprep.subr.bf16.mxu0 %v1951
  %2267 = vmatpush1.bf16.msra.mxu0 %v1950
  %2268 = vmatprep.subr.bf16.mxu0 %v1949
  %2269 = vmatpush1.bf16.msra.mxu0 %v1948
  %2270 = vmatprep.subr.bf16.mxu0 %v1947
  %2271 = vmatpush1.bf16.msra.mxu0 %v1946
  %2272 = vmatprep.subr.bf16.mxu0 %v1945
  %2273 = vmatpush1.bf16.msra.mxu0 %v1944
  %2274 = vmatprep.subr.bf16.mxu0 %v1943
  %2275 = vmatpush1.bf16.msra.mxu0 %v1942
  %2276 = vmatprep.subr.bf16.mxu0 %v1941
  %2277 = vmatpush1.bf16.msra.mxu0 %v1940
  %2278 = vmatprep.subr.bf16.mxu0 %v1939
  %2279 = vmatpush1.bf16.msra.mxu0 %v1938
  %2280 = vmatprep.subr.bf16.mxu0 0
  %2281 = vmatpush2.bf16.msra.mxu0 0
  %2282 = vmatprep.subr.bf16.mxu0 0
  %2283 = vmatpush2.bf16.msra.mxu0 0
  %2284 = vmatprep.subr.bf16.mxu0 %v2103
  %2285 = vmatpush2.bf16.msra.mxu0 %v2100
  %2286 = vmatprep.subr.bf16.mxu0 %v1963
  %2287 = vmatpush2.bf16.msra.mxu0 %v1962
  %2288 = vmatprep.subr.bf16.mxu0 %v1961
  %2289 = vmatpush2.bf16.msra.mxu0 %v1960
  %2290 = vmatprep.subr.bf16.mxu0 %v1959
  %2291 = vmatpush2.bf16.msra.mxu0 %v1958
  %2292 = vmatprep.subr.bf16.mxu0 %v1957
  %2293 = vmatpush2.bf16.msra.mxu0 %v1956
  %2294 = vmatprep.subr.bf16.mxu0 %v1955
  %2295 = vmatpush2.bf16.msra.mxu0 %v1954
  %2296 = vmatprep.mubr.bf16.mxu0 %v2090
  %2297 = vmatmul.mubr.bf16.gmra.mxu0 %v1460
  %v2298 = vpop.f32.mrf.mxu0
  %v2299 = vadd.f32 %v2246, %v2298
  %v2300 = vpop.f32.mrf.mxu0
  %v2301 = vadd.f32 %v2248, %v2300
  %v2302 = vpop.f32.mrf.mxu0
  %v2303 = vadd.f32 %v2250, %v2302
  %v2304 = vpop.f32.mrf.mxu0
  %v2305 = vadd.f32 %v2252, %v2304
  %2306 = vmatprep.mubr.bf16.mxu0 %v2093
  %2307 = vmatmul.mubr.bf16.gmra.mxu0 %v1468
  %v2308 = vpop.f32.mrf.mxu0
  %v2309 = vadd.f32 %v2256, %v2308
  %v2310 = vpop.f32.mrf.mxu0
  %v2311 = vadd.f32 %v2258, %v2310
  %v2312 = vpop.f32.mrf.mxu0
  %v2313 = vadd.f32 %v2260, %v2312
  %v2314 = vpop.f32.mrf.mxu0
  %v2315 = vadd.f32 %v2262, %v2314
  %2316 = vdwg.mxu0
  %v2317 = vpack.c.bf16 %v2303, %v2299
  %v2318 = vpack.c.bf16 %v2313, %v2309
  %2321 = vrot.lane.b32.xlu0 %v2317, 127
  %v2322 = vpop.permute.xlu0 %2321
  %2323 = vrot.lane.b32.xlu0 %v2318, 127
  %v2324 = vpop.permute.xlu0 %2323
  %2325 = vrot.lane.b32.xlu0 %v2317, 126
  %v2326 = vpop.permute.xlu0 %2325
  %2327 = vrot.lane.b32.xlu0 %v2318, 126
  %v2328 = vpop.permute.xlu0 %2327
  %v2329 = vpack.c.bf16 %v2305, %v2301
  %v2330 = vpack.c.bf16 %v2315, %v2311
  %2333 = vrot.lane.b32.xlu0 %v2329, 127
  %v2334 = vpop.permute.xlu0 %2333
  %2335 = vrot.lane.b32.xlu0 %v2330, 127
  %v2336 = vpop.permute.xlu0 %2335
  %v2337 = vsel %vm83, %v2322, %v2334
  %v2338 = vsel %vm83, %v2324, %v2336
  %2339 = vrot.lane.b32.xlu0 %v2329, 126
  %v2340 = vpop.permute.xlu0 %2339
  %2341 = vrot.lane.b32.xlu0 %v2330, 126
  %v2342 = vpop.permute.xlu0 %2341
  %v2343 = vsel %vm98, %v2326, %v2340
  %v2344 = vsel %vm98, %v2328, %v2342
  %2345 = vrot.lane.b32.xlu0 %v2337, 126
  %v2346 = vpop.permute.xlu0 %2345
  %2347 = vrot.lane.b32.xlu0 %v2334, 126
  %v2348 = vpop.permute.xlu0 %2347
  %2349 = vrot.lane.b32.xlu0 %v2338, 126
  %v2350 = vpop.permute.xlu0 %2349
  %2351 = vrot.lane.b32.xlu0 %v2336, 126
  %v2352 = vpop.permute.xlu0 %2351
  %2353 = vrot.lane.b32.xlu0 %v2343, 126
  %v2354 = vpop.permute.xlu0 %2353
  %2355 = vrot.lane.b32.xlu0 %v2340, 126
  %v2356 = vpop.permute.xlu0 %2355
  %2357 = vrot.lane.b32.xlu0 %v2344, 126
  %v2358 = vpop.permute.xlu0 %2357
  %2359 = vrot.lane.b32.xlu0 %v2342, 126
  %v2360 = vpop.permute.xlu0 %2359
  %v2361 = vsel %vm98, %v2346, %v2348
  %v2362 = vsel %vm98, %v2350, %v2352
  %v2363 = vsel %vm98, %v2354, %v2356
  %v2364 = vsel %vm98, %v2358, %v2360
  %vm2371 = vcmask 998400
  %v2374 = vsel %vm2371, %v2317, %v2343
  %v2378 = vsel %vm2371, %v2318, %v2344
  %v2382 = vsel %vm2371, %v2322, %v2361
  %v2386 = vsel %vm2371, %v2324, %v2362
  %v2390 = vsel %vm2371, %v2326, %v2363
  %v2394 = vsel %vm2371, %v2328, %v2364
  %v2400 = vunpack.c.l.b16 %v23
  %v2401 = vunpack.c.l.b16 %v24
  %v2402 = vunpack.c.l.b16 %v25
  %v2403 = vunpack.c.l.b16 %v26
  %v2404 = vpack.c.b16 %v2401, %v2400
  %v2405 = vpack.c.b16 %v2403, %v2402
  %v2407 = vsel %vm528, %v2404, 0
  %v2410 = vsel %vm528, %v2405, 0
  %2412 = vmatprep.subr.bf16.mxu0 0
  %2413 = vmatpush1.bf16.msra.mxu0 0
  %2414 = vmatprep.subr.bf16.mxu0 0
  %2415 = vmatpush1.bf16.msra.mxu0 0
  %2416 = vmatprep.subr.bf16.mxu0 %v2360
  %2417 = vmatpush1.bf16.msra.mxu0 %v2394
  %2418 = vmatprep.subr.bf16.mxu0 %v2356
  %2419 = vmatpush1.bf16.msra.mxu0 %v2390
  %2420 = vmatprep.subr.bf16.mxu0 %v2352
  %2421 = vmatpush1.bf16.msra.mxu0 %v2386
  %2422 = vmatprep.subr.bf16.mxu0 %v2348
  %2423 = vmatpush1.bf16.msra.mxu0 %v2382
  %2424 = vmatprep.subr.bf16.mxu0 %v2342
  %2425 = vmatpush1.bf16.msra.mxu0 %v2378
  %2426 = vmatprep.subr.bf16.mxu0 %v2340
  %2427 = vmatpush1.bf16.msra.mxu0 %v2374
  %2428 = vmatprep.subr.bf16.mxu0 0
  %2429 = vmatpush2.bf16.msra.mxu0 0
  %2430 = vmatprep.subr.bf16.mxu0 0
  %2431 = vmatpush2.bf16.msra.mxu0 0
  %2432 = vmatprep.subr.bf16.mxu0 0
  %2433 = vmatpush2.bf16.msra.mxu0 0
  %2434 = vmatprep.subr.bf16.mxu0 0
  %2435 = vmatpush2.bf16.msra.mxu0 0
  %2436 = vmatprep.subr.bf16.mxu0 0
  %2437 = vmatpush2.bf16.msra.mxu0 0
  %2438 = vmatprep.subr.bf16.mxu0 0
  %2439 = vmatpush2.bf16.msra.mxu0 0
  %2440 = vmatprep.subr.bf16.mxu0 0
  %2441 = vmatpush2.bf16.msra.mxu0 0
  %2442 = vmatprep.subr.bf16.mxu0 0
  %2443 = vmatpush2.bf16.msra.mxu0 0
  %2444 = vmatprep.mubr.bf16.mxu0 0
  %2445 = vmatmul.mubr.bf16.gmra.mxu0 %v2407
  %v2446 = vpop.f32.mrf.mxu0
  %v2447 = vadd.f32 0.0, %v2446
  %v2448 = vpop.f32.mrf.mxu0
  %v2449 = vadd.f32 0.0, %v2448
  %v2450 = vpop.f32.mrf.mxu0
  %v2451 = vadd.f32 0.0, %v2450
  %v2452 = vpop.f32.mrf.mxu0
  %v2453 = vadd.f32 0.0, %v2452
  %2454 = vmatprep.mubr.bf16.mxu0 0
  %2455 = vmatmul.mubr.bf16.gmra.mxu0 %v2410
  %v2456 = vpop.f32.mrf.mxu0
  %v2457 = vadd.f32 0.0, %v2456
  %v2458 = vpop.f32.mrf.mxu0
  %v2459 = vadd.f32 0.0, %v2458
  %v2460 = vpop.f32.mrf.mxu0
  %v2461 = vadd.f32 0.0, %v2460
  %v2462 = vpop.f32.mrf.mxu0
  %v2463 = vadd.f32 0.0, %v2462
  %2464 = vdwg.mxu0
  %vm2465 = vcmask 949248
  %v2466 = vsel %vm2465, %v2449, 0.0
  %v2467 = vadd.f32 %v2447, %v2466
  %2468 = vadd.xlane.f32.xlu0 %v2467
  %v2469 = vpop.xlane.xlu0 %2468
  %v2470 = vsel %vm2465, %v2453, 0.0
  %v2471 = vadd.f32 %v2451, %v2470
  %2472 = vadd.xlane.f32.xlu0 %v2471
  %v2473 = vpop.xlane.xlu0 %2472
  %v2474 = vsel %vm2465, %v2459, 0.0
  %v2475 = vadd.f32 %v2457, %v2474
  %2476 = vadd.xlane.f32.xlu0 %v2475
  %v2477 = vpop.xlane.xlu0 %2476
  %v2478 = vsel %vm2465, %v2463, 0.0
  %v2479 = vadd.f32 %v2461, %v2478
  %2480 = vadd.xlane.f32.xlu0 %v2479
  %v2481 = vpop.xlane.xlu0 %2480
  %v2482 = vmul.f32 %v2447, %v2447
  %v2483 = vmul.f32 %v2449, %v2449
  %v2484 = vmul.f32 %v2451, %v2451
  %v2485 = vmul.f32 %v2453, %v2453
  %v2486 = vmul.f32 %v2457, %v2457
  %v2487 = vmul.f32 %v2459, %v2459
  %v2488 = vmul.f32 %v2461, %v2461
  %v2489 = vmul.f32 %v2463, %v2463
  %v2490 = vsel %vm2465, %v2483, 0.0
  %v2491 = vadd.f32 %v2482, %v2490
  %2492 = vadd.xlane.f32.xlu0 %v2491
  %v2493 = vpop.xlane.xlu0 %2492
  %v2494 = vsel %vm2465, %v2485, 0.0
  %v2495 = vadd.f32 %v2484, %v2494
  %2496 = vadd.xlane.f32.xlu0 %v2495
  %v2497 = vpop.xlane.xlu0 %2496
  %v2498 = vsel %vm2465, %v2487, 0.0
  %v2499 = vadd.f32 %v2486, %v2498
  %2500 = vadd.xlane.f32.xlu0 %v2499
  %v2501 = vpop.xlane.xlu0 %2500
  %v2502 = vsel %vm2465, %v2489, 0.0
  %v2503 = vadd.f32 %v2488, %v2502
  %2504 = vadd.xlane.f32.xlu0 %v2503
  %v2505 = vpop.xlane.xlu0 %2504
  %v2506 = vmul.f32 %v2469, 0.0040983604
  %v2507 = vmul.f32 %v2473, 0.0040983604
  %v2508 = vmul.f32 %v2477, 0.0040983604
  %v2509 = vmul.f32 %v2481, 0.0040983604
  %v2510 = vmul.f32 %v2493, 0.0040983604
  %v2511 = vmul.f32 %v2497, 0.0040983604
  %v2512 = vmul.f32 %v2501, 0.0040983604
  %v2513 = vmul.f32 %v2505, 0.0040983604
  %v2514 = vmul.f32 %v2506, %v2506
  %v2515 = vmul.f32 %v2507, %v2507
  %v2516 = vmul.f32 %v2508, %v2508
  %v2517 = vmul.f32 %v2509, %v2509
  %v2518 = vsub.f32 %v2510, %v2514
  %v2519 = vsub.f32 %v2511, %v2515
  %v2520 = vsub.f32 %v2512, %v2516
  %v2521 = vsub.f32 %v2513, %v2517
  %v2522 = vmax.f32 %v2518, 0.0
  %v2523 = vmax.f32 %v2519, 0.0
  %v2524 = vmax.f32 %v2520, 0.0
  %v2525 = vmax.f32 %v2521, 0.0
  %v2526 = vadd.f32 %v2522, 1e-05
  %v2527 = vadd.f32 %v2523, 1e-05
  %v2528 = vadd.f32 %v2524, 1e-05
  %v2529 = vadd.f32 %v2525, 1e-05
  %v2530 = vrsqrt.pop %v2526
  %v2531 = vrsqrt.pop %v2527
  %v2532 = vrsqrt.pop %v2528
  %v2533 = vrsqrt.pop %v2529
  %v2534 = vmul.f32 %v51, %v2530
  %v2535 = vmul.f32 %v52, %v2531
  %v2536 = vmul.f32 %v53, %v2532
  %v2537 = vmul.f32 %v54, %v2533
  %v2538 = vmul.f32 %v2506, %v2534
  %v2539 = vmul.f32 %v2507, %v2535
  %v2540 = vmul.f32 %v2508, %v2536
  %v2541 = vmul.f32 %v2509, %v2537
  %2546 = vrot.lane.b32.xlu0 %v2538, 1
  %v2547 = vpop.permute.xlu0 %2546
  %2548 = vrot.lane.b32.xlu0 %v2539, 1
  %v2549 = vpop.permute.xlu0 %2548
  %2550 = vrot.lane.b32.xlu0 %v2540, 1
  %v2551 = vpop.permute.xlu0 %2550
  %2552 = vrot.lane.b32.xlu0 %v2541, 1
  %v2553 = vpop.permute.xlu0 %2552
  %v2558 = vsub.f32 %v51, %v2547
  %v2559 = vsub.f32 %v52, %v2549
  %v2560 = vsub.f32 %v53, %v2551
  %v2561 = vsub.f32 %v54, %v2553
  %2563 = vset.pattern.permute.xlu0 2
  %2564 = vperm.xlu0 %2563, %v2534
  %v2565 = vpop.permute.xlu0 %2564
  %2568 = vset.pattern.permute.xlu0 2
  %2569 = vperm.xlu0 %2568, %v2535
  %v2570 = vpop.permute.xlu0 %2569
  %2573 = vset.pattern.permute.xlu0 2
  %2574 = vperm.xlu0 %2573, %v2536
  %v2575 = vpop.permute.xlu0 %2574
  %2578 = vset.pattern.permute.xlu0 2
  %2579 = vperm.xlu0 %2578, %v2537
  %v2580 = vpop.permute.xlu0 %2579
  %v2582 = vmul.f32 %v2447, %v2565
  %v2583 = vmul.f32 %v2449, %v2565
  %v2584 = vmul.f32 %v2451, %v2570
  %v2585 = vmul.f32 %v2453, %v2570
  %v2586 = vmul.f32 %v2457, %v2575
  %v2587 = vmul.f32 %v2459, %v2575
  %v2588 = vmul.f32 %v2461, %v2580
  %v2589 = vmul.f32 %v2463, %v2580
  %2591 = vset.pattern.permute.xlu0 3
  %2592 = vperm.xlu0 %2591, %v2558
  %v2593 = vpop.permute.xlu0 %2592
  %2596 = vset.pattern.permute.xlu0 3
  %2597 = vperm.xlu0 %2596, %v2559
  %v2598 = vpop.permute.xlu0 %2597
  %2601 = vset.pattern.permute.xlu0 3
  %2602 = vperm.xlu0 %2601, %v2560
  %v2603 = vpop.permute.xlu0 %2602
  %2606 = vset.pattern.permute.xlu0 3
  %2607 = vperm.xlu0 %2606, %v2561
  %v2608 = vpop.permute.xlu0 %2607
  %v2610 = vadd.f32 %v2582, %v2593
  %v2611 = vadd.f32 %v2583, %v2593
  %v2612 = vadd.f32 %v2584, %v2598
  %v2613 = vadd.f32 %v2585, %v2598
  %v2614 = vadd.f32 %v2586, %v2603
  %v2615 = vadd.f32 %v2587, %v2603
  %v2616 = vadd.f32 %v2588, %v2608
  %v2617 = vadd.f32 %v2589, %v2608
  %v2618 = vmax.f32 %v2610, 0.0
  %v2619 = vmax.f32 %v2611, 0.0
  %v2620 = vmax.f32 %v2612, 0.0
  %v2621 = vmax.f32 %v2613, 0.0
  %v2622 = vmax.f32 %v2614, 0.0
  %v2623 = vmax.f32 %v2615, 0.0
  %v2624 = vmax.f32 %v2616, 0.0
  %v2625 = vmax.f32 %v2617, 0.0
  %2634 = vrot.lane.b32.xlu0 %v2618, 127
  %v2635 = vpop.permute.xlu0 %2634
  %2636 = vrot.lane.b32.xlu0 %v2619, 127
  %v2637 = vpop.permute.xlu0 %2636
  %2638 = vrot.lane.b32.xlu0 %v2620, 127
  %v2639 = vpop.permute.xlu0 %2638
  %2640 = vrot.lane.b32.xlu0 %v2621, 127
  %v2641 = vpop.permute.xlu0 %2640
  %2642 = vrot.lane.b32.xlu0 %v2622, 127
  %v2643 = vpop.permute.xlu0 %2642
  %2644 = vrot.lane.b32.xlu0 %v2623, 127
  %v2645 = vpop.permute.xlu0 %2644
  %2646 = vrot.lane.b32.xlu0 %v2624, 127
  %v2647 = vpop.permute.xlu0 %2646
  %2648 = vrot.lane.b32.xlu0 %v2625, 127
  %v2649 = vpop.permute.xlu0 %2648
  %v2650 = vsel %vm923, %v2635, %v2637
  %v2651 = vsel %vm923, %v2639, %v2641
  %v2652 = vsel %vm923, %v2643, %v2645
  %v2653 = vsel %vm923, %v2647, %v2649
  %v2662 = vmax.f32 %v2618, %v2650
  %v2663 = vmax.f32 %v2619, %v2637
  %v2664 = vmax.f32 %v2620, %v2651
  %v2665 = vmax.f32 %v2621, %v2641
  %v2666 = vmax.f32 %v2622, %v2652
  %v2667 = vmax.f32 %v2623, %v2645
  %v2668 = vmax.f32 %v2624, %v2653
  %v2669 = vmax.f32 %v2625, %v2649
  %2670 = vrot.lane.b32.xlu0 %v2618, 126
  %v2671 = vpop.permute.xlu0 %2670
  %2672 = vrot.lane.b32.xlu0 %v2619, 126
  %v2673 = vpop.permute.xlu0 %2672
  %2674 = vrot.lane.b32.xlu0 %v2620, 126
  %v2675 = vpop.permute.xlu0 %2674
  %2676 = vrot.lane.b32.xlu0 %v2621, 126
  %v2677 = vpop.permute.xlu0 %2676
  %2678 = vrot.lane.b32.xlu0 %v2622, 126
  %v2679 = vpop.permute.xlu0 %2678
  %2680 = vrot.lane.b32.xlu0 %v2623, 126
  %v2681 = vpop.permute.xlu0 %2680
  %2682 = vrot.lane.b32.xlu0 %v2624, 126
  %v2683 = vpop.permute.xlu0 %2682
  %2684 = vrot.lane.b32.xlu0 %v2625, 126
  %v2685 = vpop.permute.xlu0 %2684
  %v2686 = vsel %vm1080, %v2671, %v2673
  %v2687 = vsel %vm1080, %v2675, %v2677
  %v2688 = vsel %vm1080, %v2679, %v2681
  %v2689 = vsel %vm1080, %v2683, %v2685
  %v2698 = vmax.f32 %v2662, %v2686
  %v2699 = vmax.f32 %v2663, %v2673
  %v2700 = vmax.f32 %v2664, %v2687
  %v2701 = vmax.f32 %v2665, %v2677
  %v2702 = vmax.f32 %v2666, %v2688
  %v2703 = vmax.f32 %v2667, %v2681
  %v2704 = vmax.f32 %v2668, %v2689
  %v2705 = vmax.f32 %v2669, %v2685
  %2706 = vrot.lane.b32.xlu0 %v2618, 125
  %v2707 = vpop.permute.xlu0 %2706
  %2708 = vrot.lane.b32.xlu0 %v2619, 125
  %v2709 = vpop.permute.xlu0 %2708
  %2710 = vrot.lane.b32.xlu0 %v2620, 125
  %v2711 = vpop.permute.xlu0 %2710
  %2712 = vrot.lane.b32.xlu0 %v2621, 125
  %v2713 = vpop.permute.xlu0 %2712
  %2714 = vrot.lane.b32.xlu0 %v2622, 125
  %v2715 = vpop.permute.xlu0 %2714
  %2716 = vrot.lane.b32.xlu0 %v2623, 125
  %v2717 = vpop.permute.xlu0 %2716
  %2718 = vrot.lane.b32.xlu0 %v2624, 125
  %v2719 = vpop.permute.xlu0 %2718
  %2720 = vrot.lane.b32.xlu0 %v2625, 125
  %v2721 = vpop.permute.xlu0 %2720
  %v2722 = vsel %vm1237, %v2707, %v2709
  %v2723 = vsel %vm1237, %v2711, %v2713
  %v2724 = vsel %vm1237, %v2715, %v2717
  %v2725 = vsel %vm1237, %v2719, %v2721
  %v2734 = vmax.f32 %v2698, %v2722
  %v2735 = vmax.f32 %v2699, %v2709
  %v2736 = vmax.f32 %v2700, %v2723
  %v2737 = vmax.f32 %v2701, %v2713
  %v2738 = vmax.f32 %v2702, %v2724
  %v2739 = vmax.f32 %v2703, %v2717
  %v2740 = vmax.f32 %v2704, %v2725
  %v2741 = vmax.f32 %v2705, %v2721
  %v2742 = vld [vmem:[%s3 + $0x3e0] sm:$0xf]
  %v2743 = vld [vmem:[%s3 + $0x3e8] sm:$0xf]
  %v2744 = vld [vmem:[%s3 + $0x3f0] sm:$0xf]
  %v2745 = vld [vmem:[%s3 + $0x3f8] sm:$0xf]
  %v2746 = vld [vmem:[%s3 + $0x400] sm:$0xf]
  %v2747 = vld [vmem:[%s3 + $0x408] sm:$0xf]
  %v2748 = vld [vmem:[%s3 + $0x410] sm:$0xf]
  %v2749 = vld [vmem:[%s3 + $0x418] sm:$0xf]
  %v2750 = vld [vmem:[%s3 + $0x420] sm:$0xf]
  %v2751 = vld [vmem:[%s3 + $0x428] sm:$0xf]
  %v2752 = vld [vmem:[%s3 + $0x430] sm:$0xf]
  %v2753 = vld [vmem:[%s3 + $0x438] sm:$0xf]
  %v2754 = vld [vmem:[%s3 + $0x440] sm:$0xf]
  %v2755 = vld [vmem:[%s3 + $0x448] sm:$0xf]
  %v2756 = vld [vmem:[%s3 + $0x450] sm:$0xf]
  %v2757 = vld [vmem:[%s3 + $0x458] sm:$0xf]
  %v2758 = vld [vmem:[%s3 + $0x460] sm:$0xf]
  %v2759 = vld [vmem:[%s3 + $0x468] sm:$0xf]
  %v2760 = vld [vmem:[%s3 + $0x470] sm:$0xf]
  %v2761 = vld [vmem:[%s3 + $0x478] sm:$0xf]
  %v2762 = vld [vmem:[%s3 + $0x480] sm:$0xf]
  %v2763 = vld [vmem:[%s3 + $0x488] sm:$0xf]
  %v2764 = vld [vmem:[%s3 + $0x490] sm:$0xf]
  %v2765 = vld [vmem:[%s3 + $0x498] sm:$0xf]
  %v2766 = vld [vmem:[%s3 + $0x4a0] sm:$0xf]
  %v2767 = vld [vmem:[%s3 + $0x4a8] sm:$0xf]
  %v2768 = vld [vmem:[%s3 + $0x4b0] sm:$0xf]
  %v2769 = vld [vmem:[%s3 + $0x4b8] sm:$0xf]
  %v2770 = vld [vmem:[%s3 + $0x4c0] sm:$0xf]
  %v2771 = vld [vmem:[%s3 + $0x4c8] sm:$0xf]
  %v2772 = vld [vmem:[%s3 + $0x4d0] sm:$0x1]
  %v2773 = vpack.c.bf16 %v2736, %v2734
  %v2774 = vpack.c.bf16 %v2737, %v2735
  %v2775 = vpack.c.bf16 %v2740, %v2738
  %v2776 = vpack.c.bf16 %v2741, %v2739
  %v2808 = vunpack.c.l.b16 %v2742
  %v2809 = vunpack.c.l.b16 %v2743
  %v2810 = vunpack.c.l.b16 %v2744
  %v2811 = vunpack.c.l.b16 %v2745
  %v2812 = vunpack.c.l.b16 %v2746
  %v2813 = vunpack.c.l.b16 %v2747
  %v2814 = vunpack.c.l.b16 %v2748
  %v2815 = vunpack.c.l.b16 %v2749
  %v2816 = vunpack.c.l.b16 %v2750
  %v2817 = vunpack.c.l.b16 %v2751
  %v2818 = vunpack.c.l.b16 %v2752
  %v2819 = vunpack.c.l.b16 %v2753
  %v2820 = vunpack.c.l.b16 %v2754
  %v2821 = vunpack.c.l.b16 %v2755
  %v2822 = vunpack.c.l.b16 %v2756
  %v2823 = vunpack.c.l.b16 %v2757
  %v2824 = vunpack.c.l.b16 %v2758
  %v2825 = vunpack.c.l.b16 %v2759
  %v2826 = vunpack.c.l.b16 %v2760
  %v2827 = vunpack.c.l.b16 %v2761
  %v2828 = vunpack.c.l.b16 %v2762
  %v2829 = vunpack.c.l.b16 %v2763
  %v2830 = vunpack.c.l.b16 %v2764
  %v2831 = vunpack.c.l.b16 %v2765
  %v2832 = vunpack.c.l.b16 %v2766
  %v2833 = vunpack.c.l.b16 %v2767
  %v2834 = vunpack.c.l.b16 %v2768
  %v2835 = vunpack.c.l.b16 %v2769
  %v2836 = vunpack.c.l.b16 %v2770
  %v2837 = vunpack.c.l.b16 %v2771
  %v2838 = vunpack.c.l.b16 %v2772
  %v2839 = vpack.c.b16 %v2809, %v2808
  %v2840 = vpack.c.b16 %v2811, %v2810
  %v2841 = vpack.c.b16 %v2813, %v2812
  %v2842 = vpack.c.b16 %v2815, %v2814
  %v2843 = vpack.c.b16 %v2817, %v2816
  %v2844 = vpack.c.b16 %v2819, %v2818
  %v2845 = vpack.c.b16 %v2821, %v2820
  %v2846 = vpack.c.b16 %v2823, %v2822
  %v2847 = vpack.c.b16 %v2825, %v2824
  %v2848 = vpack.c.b16 %v2827, %v2826
  %v2849 = vpack.c.b16 %v2829, %v2828
  %v2850 = vpack.c.b16 %v2831, %v2830
  %v2851 = vpack.c.b16 %v2833, %v2832
  %v2852 = vpack.c.b16 %v2835, %v2834
  %v2853 = vpack.c.b16 %v2837, %v2836
  %v2854 = vpack.c.b16 %v2838, %v2838
  %vm2870 = vcmask 924672
  %v2872 = vsel %vm2870, %v2774, 0
  %v2875 = vsel %vm2870, %v2776, 0
  %vm2877 = vcmask 1040384
  %v2878 = vsel 0, 4294967295, 65535
  %v2879 = vsel %vm2877, %v2878, 0
  %v2881 = vand.u32 %v2854, %v2879
  %2883 = vmatprep.subr.bf16.mxu0 0
  %2884 = vmatpush1.bf16.msra.mxu0 %v2846
  %2885 = vmatprep.subr.bf16.mxu0 0
  %2886 = vmatpush1.bf16.msra.mxu0 %v2845
  %2887 = vmatprep.subr.bf16.mxu0 0
  %2888 = vmatpush1.bf16.msra.mxu0 %v2844
  %2889 = vmatprep.subr.bf16.mxu0 0
  %2890 = vmatpush1.bf16.msra.mxu0 %v2843
  %2891 = vmatprep.subr.bf16.mxu0 0
  %2892 = vmatpush1.bf16.msra.mxu0 %v2842
  %2893 = vmatprep.subr.bf16.mxu0 0
  %2894 = vmatpush1.bf16.msra.mxu0 %v2841
  %2895 = vmatprep.subr.bf16.mxu0 0
  %2896 = vmatpush1.bf16.msra.mxu0 %v2840
  %2897 = vmatprep.subr.bf16.mxu0 0
  %2898 = vmatpush1.bf16.msra.mxu0 %v2839
  %2899 = vmatprep.subr.bf16.mxu0 0
  %2900 = vmatpush2.bf16.msra.mxu0 %v2881
  %2901 = vmatprep.subr.bf16.mxu0 0
  %2902 = vmatpush2.bf16.msra.mxu0 %v2853
  %2903 = vmatprep.subr.bf16.mxu0 0
  %2904 = vmatpush2.bf16.msra.mxu0 %v2852
  %2905 = vmatprep.subr.bf16.mxu0 0
  %2906 = vmatpush2.bf16.msra.mxu0 %v2851
  %2907 = vmatprep.subr.bf16.mxu0 0
  %2908 = vmatpush2.bf16.msra.mxu0 %v2850
  %2909 = vmatprep.subr.bf16.mxu0 0
  %2910 = vmatpush2.bf16.msra.mxu0 %v2849
  %2911 = vmatprep.subr.bf16.mxu0 0
  %2912 = vmatpush2.bf16.msra.mxu0 %v2848
  %2913 = vmatprep.subr.bf16.mxu0 0
  %2914 = vmatpush2.bf16.msra.mxu0 %v2847
  %2915 = vmatprep.mubr.bf16.mxu0 %v2872
  %2916 = vmatmul.mubr.bf16.gmra.mxu0 %v2773
  %v2917 = vpop.f32.mrf.mxu0
  %v2918 = vadd.f32 0.0, %v2917
  %v2919 = vpop.f32.mrf.mxu0
  %v2920 = vpop.f32.mrf.mxu0
  %v2921 = vadd.f32 0.0, %v2920
  %v2922 = vpop.f32.mrf.mxu0
  %2923 = vmatprep.mubr.bf16.mxu0 %v2875
  %2924 = vmatmul.mubr.bf16.gmra.mxu0 %v2775
  %v2925 = vpop.f32.mrf.mxu0
  %v2926 = vadd.f32 0.0, %v2925
  %v2927 = vpop.f32.mrf.mxu0
  %v2928 = vpop.f32.mrf.mxu0
  %v2929 = vadd.f32 0.0, %v2928
  %v2930 = vpop.f32.mrf.mxu0
  %2931 = vdwg.mxu0
  %v2932 = vpack.c.bf16 %v2921, %v2918
  %v2933 = vpack.c.bf16 %v2929, %v2926
  %2936 = vrot.lane.b32.xlu0 %v2932, 127
  %v2937 = vpop.permute.xlu0 %2936
  %2938 = vrot.lane.b32.xlu0 %v2933, 127
  %v2939 = vpop.permute.xlu0 %2938
  %2940 = vrot.lane.b32.xlu0 %v2932, 126
  %v2941 = vpop.permute.xlu0 %2940
  %2942 = vrot.lane.b32.xlu0 %v2933, 126
  %v2943 = vpop.permute.xlu0 %2942
  %2944 = vrot.lane.b32.xlu0 %v2937, 126
  %v2945 = vpop.permute.xlu0 %2944
  %2946 = vrot.lane.b32.xlu0 %v2939, 126
  %v2947 = vpop.permute.xlu0 %2946
  %2948 = vrot.lane.b32.xlu0 %v2941, 126
  %v2949 = vpop.permute.xlu0 %2948
  %2950 = vrot.lane.b32.xlu0 %v2943, 126
  %v2951 = vpop.permute.xlu0 %2950
  %vm2952 = vcmask 228352
  %v2955 = vsel %vm2952, %v2932, %v2941
  %v2959 = vsel %vm2952, %v2933, %v2943
  %v2963 = vsel %vm2952, %v2937, %v2945
  %v2967 = vsel %vm2952, %v2939, %v2947
  %v2970 = vsel %vm2952, %v2941, %v2949
  %v2973 = vsel %vm2952, %v2943, %v2951
  %v2983 = vunpack.c.l.b16 %v28
  %v2984 = vunpack.c.l.b16 %v29
  %v2985 = vunpack.c.l.b16 %v30
  %v2986 = vunpack.c.l.b16 %v31
  %v2987 = vunpack.c.l.b16 %v32
  %v2988 = vunpack.c.l.b16 %v33
  %v2989 = vunpack.c.l.b16 %v34
  %v2990 = vunpack.c.l.b16 %v35
  %v2991 = vpack.c.b16 %v2984, %v2983
  %v2992 = vpack.c.b16 %v2986, %v2985
  %v2993 = vpack.c.b16 %v2988, %v2987
  %v2994 = vpack.c.b16 %v2990, %v2989
  %v2996 = vsel %vm528, %v2991, 0
  %v2999 = vsel %vm528, %v2992, 0
  %v3002 = vsel %vm528, %v2993, 0
  %v3005 = vsel %vm528, %v2994, 0
  %3007 = vmatprep.subr.bf16.mxu0 0
  %3008 = vmatpush1.bf16.msra.mxu0 0
  %3009 = vmatprep.subr.bf16.mxu0 0
  %3010 = vmatpush1.bf16.msra.mxu0 0
  %3011 = vmatprep.subr.bf16.mxu0 0
  %3012 = vmatpush1.bf16.msra.mxu0 %v2973
  %3013 = vmatprep.subr.bf16.mxu0 0
  %3014 = vmatpush1.bf16.msra.mxu0 %v2970
  %3015 = vmatprep.subr.bf16.mxu0 0
  %3016 = vmatpush1.bf16.msra.mxu0 %v2967
  %3017 = vmatprep.subr.bf16.mxu0 0
  %3018 = vmatpush1.bf16.msra.mxu0 %v2963
  %3019 = vmatprep.subr.bf16.mxu0 0
  %3020 = vmatpush1.bf16.msra.mxu0 %v2959
  %3021 = vmatprep.subr.bf16.mxu0 0
  %3022 = vmatpush1.bf16.msra.mxu0 %v2955
  %3023 = vmatprep.subr.bf16.mxu0 0
  %3024 = vmatpush2.bf16.msra.mxu0 0
  %3025 = vmatprep.subr.bf16.mxu0 0
  %3026 = vmatpush2.bf16.msra.mxu0 0
  %3027 = vmatprep.subr.bf16.mxu0 0
  %3028 = vmatpush2.bf16.msra.mxu0 0
  %3029 = vmatprep.subr.bf16.mxu0 0
  %3030 = vmatpush2.bf16.msra.mxu0 0
  %3031 = vmatprep.subr.bf16.mxu0 0
  %3032 = vmatpush2.bf16.msra.mxu0 0
  %3033 = vmatprep.subr.bf16.mxu0 0
  %3034 = vmatpush2.bf16.msra.mxu0 0
  %3035 = vmatprep.subr.bf16.mxu0 0
  %3036 = vmatpush2.bf16.msra.mxu0 0
  %3037 = vmatprep.subr.bf16.mxu0 0
  %3038 = vmatpush2.bf16.msra.mxu0 0
  %3039 = vmatprep.mubr.bf16.mxu0 0
  %3040 = vmatmul.mubr.bf16.gmra.mxu0 %v2996
  %v3041 = vpop.f32.mrf.mxu0
  %v3042 = vadd.f32 0.0, %v3041
  %v3043 = vpop.f32.mrf.mxu0
  %v3044 = vpop.f32.mrf.mxu0
  %v3045 = vadd.f32 0.0, %v3044
  %v3046 = vpop.f32.mrf.mxu0
  %3047 = vmatprep.mubr.bf16.mxu0 0
  %3048 = vmatmul.mubr.bf16.gmra.mxu0 %v2999
  %v3049 = vpop.f32.mrf.mxu0
  %v3050 = vadd.f32 0.0, %v3049
  %v3051 = vpop.f32.mrf.mxu0
  %v3052 = vpop.f32.mrf.mxu0
  %v3053 = vadd.f32 0.0, %v3052
  %v3054 = vpop.f32.mrf.mxu0
  %3055 = vmatprep.mubr.bf16.mxu0 0
  %3056 = vmatmul.mubr.bf16.gmra.mxu0 %v3002
  %v3057 = vpop.f32.mrf.mxu0
  %v3058 = vadd.f32 0.0, %v3057
  %v3059 = vpop.f32.mrf.mxu0
  %v3060 = vpop.f32.mrf.mxu0
  %v3061 = vadd.f32 0.0, %v3060
  %v3062 = vpop.f32.mrf.mxu0
  %3063 = vmatprep.mubr.bf16.mxu0 0
  %3064 = vmatmul.mubr.bf16.gmra.mxu0 %v3005
  %v3065 = vpop.f32.mrf.mxu0
  %v3066 = vadd.f32 0.0, %v3065
  %v3067 = vpop.f32.mrf.mxu0
  %v3068 = vpop.f32.mrf.mxu0
  %v3069 = vadd.f32 0.0, %v3068
  %v3070 = vpop.f32.mrf.mxu0
  %3071 = vdwg.mxu0
  %vm3072 = vcmask 457728
  %v3073 = vsel %vm3072, %v3042, 0.0
  %3074 = vadd.xlane.f32.xlu0 %v3073
  %v3075 = vpop.xlane.xlu0 %3074
  %v3076 = vsel %vm3072, %v3045, 0.0
  %3077 = vadd.xlane.f32.xlu0 %v3076
  %v3078 = vpop.xlane.xlu0 %3077
  %v3079 = vsel %vm3072, %v3050, 0.0
  %3080 = vadd.xlane.f32.xlu0 %v3079
  %v3081 = vpop.xlane.xlu0 %3080
  %v3082 = vsel %vm3072, %v3053, 0.0
  %3083 = vadd.xlane.f32.xlu0 %v3082
  %v3084 = vpop.xlane.xlu0 %3083
  %v3085 = vsel %vm3072, %v3058, 0.0
  %3086 = vadd.xlane.f32.xlu0 %v3085
  %v3087 = vpop.xlane.xlu0 %3086
  %v3088 = vsel %vm3072, %v3061, 0.0
  %3089 = vadd.xlane.f32.xlu0 %v3088
  %v3090 = vpop.xlane.xlu0 %3089
  %v3091 = vsel %vm3072, %v3066, 0.0
  %3092 = vadd.xlane.f32.xlu0 %v3091
  %v3093 = vpop.xlane.xlu0 %3092
  %v3094 = vsel %vm3072, %v3069, 0.0
  %3095 = vadd.xlane.f32.xlu0 %v3094
  %v3096 = vpop.xlane.xlu0 %3095
  %v3097 = vmul.f32 %v3042, %v3042
  %v3098 = vmul.f32 %v3045, %v3045
  %v3099 = vmul.f32 %v3050, %v3050
  %v3100 = vmul.f32 %v3053, %v3053
  %v3101 = vmul.f32 %v3058, %v3058
  %v3102 = vmul.f32 %v3061, %v3061
  %v3103 = vmul.f32 %v3066, %v3066
  %v3104 = vmul.f32 %v3069, %v3069
  %v3105 = vsel %vm3072, %v3097, 0.0
  %3106 = vadd.xlane.f32.xlu0 %v3105
  %v3107 = vpop.xlane.xlu0 %3106
  %v3108 = vsel %vm3072, %v3098, 0.0
  %3109 = vadd.xlane.f32.xlu0 %v3108
  %v3110 = vpop.xlane.xlu0 %3109
  %v3111 = vsel %vm3072, %v3099, 0.0
  %3112 = vadd.xlane.f32.xlu0 %v3111
  %v3113 = vpop.xlane.xlu0 %3112
  %v3114 = vsel %vm3072, %v3100, 0.0
  %3115 = vadd.xlane.f32.xlu0 %v3114
  %v3116 = vpop.xlane.xlu0 %3115
  %v3117 = vsel %vm3072, %v3101, 0.0
  %3118 = vadd.xlane.f32.xlu0 %v3117
  %v3119 = vpop.xlane.xlu0 %3118
  %v3120 = vsel %vm3072, %v3102, 0.0
  %3121 = vadd.xlane.f32.xlu0 %v3120
  %v3122 = vpop.xlane.xlu0 %3121
  %v3123 = vsel %vm3072, %v3103, 0.0
  %3124 = vadd.xlane.f32.xlu0 %v3123
  %v3125 = vpop.xlane.xlu0 %3124
  %v3126 = vsel %vm3072, %v3104, 0.0
  %3127 = vadd.xlane.f32.xlu0 %v3126
  %v3128 = vpop.xlane.xlu0 %3127
  %v3129 = vmul.f32 %v3075, 0.017857144
  %v3130 = vmul.f32 %v3078, 0.017857144
  %v3131 = vmul.f32 %v3081, 0.017857144
  %v3132 = vmul.f32 %v3084, 0.017857144
  %v3133 = vmul.f32 %v3087, 0.017857144
  %v3134 = vmul.f32 %v3090, 0.017857144
  %v3135 = vmul.f32 %v3093, 0.017857144
  %v3136 = vmul.f32 %v3096, 0.017857144
  %v3137 = vmul.f32 %v3107, 0.017857144
  %v3138 = vmul.f32 %v3110, 0.017857144
  %v3139 = vmul.f32 %v3113, 0.017857144
  %v3140 = vmul.f32 %v3116, 0.017857144
  %v3141 = vmul.f32 %v3119, 0.017857144
  %v3142 = vmul.f32 %v3122, 0.017857144
  %v3143 = vmul.f32 %v3125, 0.017857144
  %v3144 = vmul.f32 %v3128, 0.017857144
  %v3145 = vmul.f32 %v3129, %v3129
  %v3146 = vmul.f32 %v3130, %v3130
  %v3147 = vmul.f32 %v3131, %v3131
  %v3148 = vmul.f32 %v3132, %v3132
  %v3149 = vmul.f32 %v3133, %v3133
  %v3150 = vmul.f32 %v3134, %v3134
  %v3151 = vmul.f32 %v3135, %v3135
  %v3152 = vmul.f32 %v3136, %v3136
  %v3153 = vsub.f32 %v3137, %v3145
  %v3154 = vsub.f32 %v3138, %v3146
  %v3155 = vsub.f32 %v3139, %v3147
  %v3156 = vsub.f32 %v3140, %v3148
  %v3157 = vsub.f32 %v3141, %v3149
  %v3158 = vsub.f32 %v3142, %v3150
  %v3159 = vsub.f32 %v3143, %v3151
  %v3160 = vsub.f32 %v3144, %v3152
  %v3161 = vmax.f32 %v3153, 0.0
  %v3162 = vmax.f32 %v3154, 0.0
  %v3163 = vmax.f32 %v3155, 0.0
  %v3164 = vmax.f32 %v3156, 0.0
  %v3165 = vmax.f32 %v3157, 0.0
  %v3166 = vmax.f32 %v3158, 0.0
  %v3167 = vmax.f32 %v3159, 0.0
  %v3168 = vmax.f32 %v3160, 0.0
  %v3169 = vadd.f32 %v3161, 1e-05
  %v3170 = vadd.f32 %v3162, 1e-05
  %v3171 = vadd.f32 %v3163, 1e-05
  %v3172 = vadd.f32 %v3164, 1e-05
  %v3173 = vadd.f32 %v3165, 1e-05
  %v3174 = vadd.f32 %v3166, 1e-05
  %v3175 = vadd.f32 %v3167, 1e-05
  %v3176 = vadd.f32 %v3168, 1e-05
  %v3177 = vrsqrt.pop %v3169
  %v3178 = vrsqrt.pop %v3170
  %v3179 = vrsqrt.pop %v3171
  %v3180 = vrsqrt.pop %v3172
  %v3181 = vrsqrt.pop %v3173
  %v3182 = vrsqrt.pop %v3174
  %v3183 = vrsqrt.pop %v3175
  %v3184 = vrsqrt.pop %v3176
  %v3185 = vmul.f32 %v51, %v3177
  %v3186 = vmul.f32 %v52, %v3178
  %v3187 = vmul.f32 %v53, %v3179
  %v3188 = vmul.f32 %v54, %v3180
  %v3189 = vmul.f32 %v55, %v3181
  %v3190 = vmul.f32 %v56, %v3182
  %v3191 = vmul.f32 %v57, %v3183
  %v3192 = vmul.f32 %v58, %v3184
  %v3193 = vmul.f32 %v3129, %v3185
  %v3194 = vmul.f32 %v3130, %v3186
  %v3195 = vmul.f32 %v3131, %v3187
  %v3196 = vmul.f32 %v3132, %v3188
  %v3197 = vmul.f32 %v3133, %v3189
  %v3198 = vmul.f32 %v3134, %v3190
  %v3199 = vmul.f32 %v3135, %v3191
  %v3200 = vmul.f32 %v3136, %v3192
  %3209 = vrot.lane.b32.xlu0 %v3193, 1
  %v3210 = vpop.permute.xlu0 %3209
  %3211 = vrot.lane.b32.xlu0 %v3194, 1
  %v3212 = vpop.permute.xlu0 %3211
  %3213 = vrot.lane.b32.xlu0 %v3195, 1
  %v3214 = vpop.permute.xlu0 %3213
  %3215 = vrot.lane.b32.xlu0 %v3196, 1
  %v3216 = vpop.permute.xlu0 %3215
  %3217 = vrot.lane.b32.xlu0 %v3197, 1
  %v3218 = vpop.permute.xlu0 %3217
  %3219 = vrot.lane.b32.xlu0 %v3198, 1
  %v3220 = vpop.permute.xlu0 %3219
  %3221 = vrot.lane.b32.xlu0 %v3199, 1
  %v3222 = vpop.permute.xlu0 %3221
  %3223 = vrot.lane.b32.xlu0 %v3200, 1
  %v3224 = vpop.permute.xlu0 %3223
  %v3233 = vsub.f32 %v51, %v3210
  %v3234 = vsub.f32 %v52, %v3212
  %v3235 = vsub.f32 %v53, %v3214
  %v3236 = vsub.f32 %v54, %v3216
  %v3237 = vsub.f32 %v55, %v3218
  %v3238 = vsub.f32 %v56, %v3220
  %v3239 = vsub.f32 %v57, %v3222
  %v3240 = vsub.f32 %v58, %v3224
  %3242 = vset.pattern.permute.xlu0 4
  %3243 = vperm.xlu0 %3242, %v3185
  %v3244 = vpop.permute.xlu0 %3243
  %3247 = vset.pattern.permute.xlu0 4
  %3248 = vperm.xlu0 %3247, %v3186
  %v3249 = vpop.permute.xlu0 %3248
  %3252 = vset.pattern.permute.xlu0 4
  %3253 = vperm.xlu0 %3252, %v3187
  %v3254 = vpop.permute.xlu0 %3253
  %3257 = vset.pattern.permute.xlu0 4
  %3258 = vperm.xlu0 %3257, %v3188
  %v3259 = vpop.permute.xlu0 %3258
  %3262 = vset.pattern.permute.xlu0 4
  %3263 = vperm.xlu0 %3262, %v3189
  %v3264 = vpop.permute.xlu0 %3263
  %3267 = vset.pattern.permute.xlu0 4
  %3268 = vperm.xlu0 %3267, %v3190
  %v3269 = vpop.permute.xlu0 %3268
  %3272 = vset.pattern.permute.xlu0 4
  %3273 = vperm.xlu0 %3272, %v3191
  %v3274 = vpop.permute.xlu0 %3273
  %3277 = vset.pattern.permute.xlu0 4
  %3278 = vperm.xlu0 %3277, %v3192
  %v3279 = vpop.permute.xlu0 %3278
  %v3281 = vmul.f32 %v3042, %v3244
  %v3282 = vmul.f32 %v3045, %v3249
  %v3283 = vmul.f32 %v3050, %v3254
  %v3284 = vmul.f32 %v3053, %v3259
  %v3285 = vmul.f32 %v3058, %v3264
  %v3286 = vmul.f32 %v3061, %v3269
  %v3287 = vmul.f32 %v3066, %v3274
  %v3288 = vmul.f32 %v3069, %v3279
  %3290 = vset.pattern.permute.xlu0 5
  %3291 = vperm.xlu0 %3290, %v3233
  %v3292 = vpop.permute.xlu0 %3291
  %3295 = vset.pattern.permute.xlu0 5
  %3296 = vperm.xlu0 %3295, %v3234
  %v3297 = vpop.permute.xlu0 %3296
  %3300 = vset.pattern.permute.xlu0 5
  %3301 = vperm.xlu0 %3300, %v3235
  %v3302 = vpop.permute.xlu0 %3301
  %3305 = vset.pattern.permute.xlu0 5
  %3306 = vperm.xlu0 %3305, %v3236
  %v3307 = vpop.permute.xlu0 %3306
  %3310 = vset.pattern.permute.xlu0 5
  %3311 = vperm.xlu0 %3310, %v3237
  %v3312 = vpop.permute.xlu0 %3311
  %3315 = vset.pattern.permute.xlu0 5
  %3316 = vperm.xlu0 %3315, %v3238
  %v3317 = vpop.permute.xlu0 %3316
  %3320 = vset.pattern.permute.xlu0 5
  %3321 = vperm.xlu0 %3320, %v3239
  %v3322 = vpop.permute.xlu0 %3321
  %3325 = vset.pattern.permute.xlu0 5
  %3326 = vperm.xlu0 %3325, %v3240
  %v3327 = vpop.permute.xlu0 %3326
  %v3329 = vadd.f32 %v3281, %v3292
  %v3330 = vadd.f32 %v3282, %v3297
  %v3331 = vadd.f32 %v3283, %v3302
  %v3332 = vadd.f32 %v3284, %v3307
  %v3333 = vadd.f32 %v3285, %v3312
  %v3334 = vadd.f32 %v3286, %v3317
  %v3335 = vadd.f32 %v3287, %v3322
  %v3336 = vadd.f32 %v3288, %v3327
  %v3337 = vmax.f32 %v3329, 0.0
  %v3338 = vmax.f32 %v3330, 0.0
  %v3339 = vmax.f32 %v3331, 0.0
  %v3340 = vmax.f32 %v3332, 0.0
  %v3341 = vmax.f32 %v3333, 0.0
  %v3342 = vmax.f32 %v3334, 0.0
  %v3343 = vmax.f32 %v3335, 0.0
  %v3344 = vmax.f32 %v3336, 0.0
  %3353 = vrot.lane.b32.xlu0 %v3337, 127
  %v3354 = vpop.permute.xlu0 %3353
  %3355 = vrot.lane.b32.xlu0 %v3338, 127
  %v3356 = vpop.permute.xlu0 %3355
  %3357 = vrot.lane.b32.xlu0 %v3339, 127
  %v3358 = vpop.permute.xlu0 %3357
  %3359 = vrot.lane.b32.xlu0 %v3340, 127
  %v3360 = vpop.permute.xlu0 %3359
  %3361 = vrot.lane.b32.xlu0 %v3341, 127
  %v3362 = vpop.permute.xlu0 %3361
  %3363 = vrot.lane.b32.xlu0 %v3342, 127
  %v3364 = vpop.permute.xlu0 %3363
  %3365 = vrot.lane.b32.xlu0 %v3343, 127
  %v3366 = vpop.permute.xlu0 %3365
  %3367 = vrot.lane.b32.xlu0 %v3344, 127
  %v3368 = vpop.permute.xlu0 %3367
  %v3377 = vmax.f32 %v3337, %v3354
  %v3378 = vmax.f32 %v3338, %v3356
  %v3379 = vmax.f32 %v3339, %v3358
  %v3380 = vmax.f32 %v3340, %v3360
  %v3381 = vmax.f32 %v3341, %v3362
  %v3382 = vmax.f32 %v3342, %v3364
  %v3383 = vmax.f32 %v3343, %v3366
  %v3384 = vmax.f32 %v3344, %v3368
  %3385 = vrot.lane.b32.xlu0 %v3337, 126
  %v3386 = vpop.permute.xlu0 %3385
  %3387 = vrot.lane.b32.xlu0 %v3338, 126
  %v3388 = vpop.permute.xlu0 %3387
  %3389 = vrot.lane.b32.xlu0 %v3339, 126
  %v3390 = vpop.permute.xlu0 %3389
  %3391 = vrot.lane.b32.xlu0 %v3340, 126
  %v3392 = vpop.permute.xlu0 %3391
  %3393 = vrot.lane.b32.xlu0 %v3341, 126
  %v3394 = vpop.permute.xlu0 %3393
  %3395 = vrot.lane.b32.xlu0 %v3342, 126
  %v3396 = vpop.permute.xlu0 %3395
  %3397 = vrot.lane.b32.xlu0 %v3343, 126
  %v3398 = vpop.permute.xlu0 %3397
  %3399 = vrot.lane.b32.xlu0 %v3344, 126
  %v3400 = vpop.permute.xlu0 %3399
  %v3409 = vmax.f32 %v3377, %v3386
  %v3410 = vmax.f32 %v3378, %v3388
  %v3411 = vmax.f32 %v3379, %v3390
  %v3412 = vmax.f32 %v3380, %v3392
  %v3413 = vmax.f32 %v3381, %v3394
  %v3414 = vmax.f32 %v3382, %v3396
  %v3415 = vmax.f32 %v3383, %v3398
  %v3416 = vmax.f32 %v3384, %v3400
  %3417 = vrot.lane.b32.xlu0 %v3337, 125
  %v3418 = vpop.permute.xlu0 %3417
  %3419 = vrot.lane.b32.xlu0 %v3338, 125
  %v3420 = vpop.permute.xlu0 %3419
  %3421 = vrot.lane.b32.xlu0 %v3339, 125
  %v3422 = vpop.permute.xlu0 %3421
  %3423 = vrot.lane.b32.xlu0 %v3340, 125
  %v3424 = vpop.permute.xlu0 %3423
  %3425 = vrot.lane.b32.xlu0 %v3341, 125
  %v3426 = vpop.permute.xlu0 %3425
  %3427 = vrot.lane.b32.xlu0 %v3342, 125
  %v3428 = vpop.permute.xlu0 %3427
  %3429 = vrot.lane.b32.xlu0 %v3343, 125
  %v3430 = vpop.permute.xlu0 %3429
  %3431 = vrot.lane.b32.xlu0 %v3344, 125
  %v3432 = vpop.permute.xlu0 %3431
  %v3441 = vmax.f32 %v3409, %v3418
  %v3442 = vmax.f32 %v3410, %v3420
  %v3443 = vmax.f32 %v3411, %v3422
  %v3444 = vmax.f32 %v3412, %v3424
  %v3445 = vmax.f32 %v3413, %v3426
  %v3446 = vmax.f32 %v3414, %v3428
  %v3447 = vmax.f32 %v3415, %v3430
  %v3448 = vmax.f32 %v3416, %v3432
  %v3449 = vld [vmem:[%s3 + $0x4d8] sm:$0xf]
  %v3450 = vld [vmem:[%s3 + $0x4e0] sm:$0xf]
  %v3451 = vld [vmem:[%s3 + $0x4e8] sm:$0xf]
  %v3452 = vld [vmem:[%s3 + $0x4f0] sm:$0xf]
  %v3453 = vld [vmem:[%s3 + $0x4f8] sm:$0xf]
  %v3454 = vld [vmem:[%s3 + $0x500] sm:$0xf]
  %v3455 = vld [vmem:[%s3 + $0x508] sm:$0x7]
  %v3456 = vpack.c.bf16 %v3442, %v3441
  %v3457 = vpack.c.bf16 %v3444, %v3443
  %v3458 = vpack.c.bf16 %v3446, %v3445
  %v3459 = vpack.c.bf16 %v3448, %v3447
  %v3467 = vunpack.c.l.b16 %v3449
  %v3468 = vunpack.c.l.b16 %v3450
  %v3469 = vunpack.c.l.b16 %v3451
  %v3470 = vunpack.c.l.b16 %v3452
  %v3471 = vunpack.c.l.b16 %v3453
  %v3472 = vunpack.c.l.b16 %v3454
  %v3473 = vunpack.c.l.b16 %v3455
  %v3474 = vpack.c.b16 %v3468, %v3467
  %v3475 = vpack.c.b16 %v3470, %v3469
  %v3476 = vpack.c.b16 %v3472, %v3471
  %v3477 = vpack.c.b16 %v3473, %v3473
  %vm3481 = vcmask 433152
  %v3483 = vsel %vm3481, %v3456, 0
  %v3486 = vsel %vm3481, %v3457, 0
  %v3489 = vsel %vm3481, %v3458, 0
  %v3492 = vsel %vm3481, %v3459, 0
  %vm3494 = vcmask 1041408
  %vm3495 = vcmask 1042432
  %v3496 = vsel %vm3494, 4294967295, 65535
  %v3497 = vsel %vm3495, %v3496, 0
  %v3499 = vand.u32 %v3477, %v3497
  %3501 = vmatprep.subr.bf16.mxu0 0
  %3502 = vmatpush1.bf16.msra.mxu0 0
  %3503 = vmatprep.subr.bf16.mxu0 0
  %3504 = vmatpush1.bf16.msra.mxu0 0
  %3505 = vmatprep.subr.bf16.mxu0 0
  %3506 = vmatpush1.bf16.msra.mxu0 0
  %3507 = vmatprep.subr.bf16.mxu0 0
  %3508 = vmatpush1.bf16.msra.mxu0 0
  %3509 = vmatprep.subr.bf16.mxu0 0
  %3510 = vmatpush1.bf16.msra.mxu0 %v3499
  %3511 = vmatprep.subr.bf16.mxu0 0
  %3512 = vmatpush1.bf16.msra.mxu0 %v3476
  %3513 = vmatprep.subr.bf16.mxu0 0
  %3514 = vmatpush1.bf16.msra.mxu0 %v3475
  %3515 = vmatprep.subr.bf16.mxu0 0
  %3516 = vmatpush1.bf16.msra.mxu0 %v3474
  %3517 = vmatprep.subr.bf16.mxu0 0
  %3518 = vmatpush2.bf16.msra.mxu0 0
  %3519 = vmatprep.subr.bf16.mxu0 0
  %3520 = vmatpush2.bf16.msra.mxu0 0
  %3521 = vmatprep.subr.bf16.mxu0 0
  %3522 = vmatpush2.bf16.msra.mxu0 0
  %3523 = vmatprep.subr.bf16.mxu0 0
  %3524 = vmatpush2.bf16.msra.mxu0 0
  %3525 = vmatprep.subr.bf16.mxu0 0
  %3526 = vmatpush2.bf16.msra.mxu0 0
  %3527 = vmatprep.subr.bf16.mxu0 0
  %3528 = vmatpush2.bf16.msra.mxu0 0
  %3529 = vmatprep.subr.bf16.mxu0 0
  %3530 = vmatpush2.bf16.msra.mxu0 0
  %3531 = vmatprep.subr.bf16.mxu0 0
  %3532 = vmatpush2.bf16.msra.mxu0 0
  %3533 = vmatprep.mubr.bf16.mxu0 0
  %3534 = vmatmul.mubr.bf16.gmra.mxu0 %v3483
  %v3535 = vpop.f32.mrf.mxu0
  %v3536 = vadd.f32 0.0, %v3535
  %v3537 = vpop.f32.mrf.mxu0
  %v3538 = vpop.f32.mrf.mxu0
  %v3539 = vadd.f32 0.0, %v3538
  %v3540 = vpop.f32.mrf.mxu0
  %3541 = vmatprep.mubr.bf16.mxu0 0
  %3542 = vmatmul.mubr.bf16.gmra.mxu0 %v3486
  %v3543 = vpop.f32.mrf.mxu0
  %v3544 = vadd.f32 0.0, %v3543
  %v3545 = vpop.f32.mrf.mxu0
  %v3546 = vpop.f32.mrf.mxu0
  %v3547 = vadd.f32 0.0, %v3546
  %v3548 = vpop.f32.mrf.mxu0
  %3549 = vmatprep.mubr.bf16.mxu0 0
  %3550 = vmatmul.mubr.bf16.gmra.mxu0 %v3489
  %v3551 = vpop.f32.mrf.mxu0
  %v3552 = vadd.f32 0.0, %v3551
  %v3553 = vpop.f32.mrf.mxu0
  %v3554 = vpop.f32.mrf.mxu0
  %v3555 = vadd.f32 0.0, %v3554
  %v3556 = vpop.f32.mrf.mxu0
  %3557 = vmatprep.mubr.bf16.mxu0 0
  %3558 = vmatmul.mubr.bf16.gmra.mxu0 %v3492
  %v3559 = vpop.f32.mrf.mxu0
  %v3560 = vadd.f32 0.0, %v3559
  %v3561 = vpop.f32.mrf.mxu0
  %v3562 = vpop.f32.mrf.mxu0
  %v3563 = vadd.f32 0.0, %v3562
  %v3564 = vpop.f32.mrf.mxu0
  %3565 = vdwg.mxu0
  %v3566 = vpack.c.bf16 %v3539, %v3536
  %v3567 = vpack.c.bf16 %v3547, %v3544
  %v3568 = vpack.c.bf16 %v3555, %v3552
  %v3569 = vpack.c.bf16 %v3563, %v3560
  %3574 = vrot.lane.b32.xlu0 %v3566, 127
  %v3575 = vpop.permute.xlu0 %3574
  %3576 = vrot.lane.b32.xlu0 %v3567, 127
  %v3577 = vpop.permute.xlu0 %3576
  %3578 = vrot.lane.b32.xlu0 %v3568, 127
  %v3579 = vpop.permute.xlu0 %3578
  %3580 = vrot.lane.b32.xlu0 %v3569, 127
  %v3581 = vpop.permute.xlu0 %3580
  %3582 = vrot.lane.b32.xlu0 %v3566, 126
  %v3583 = vpop.permute.xlu0 %3582
  %3584 = vrot.lane.b32.xlu0 %v3567, 126
  %v3585 = vpop.permute.xlu0 %3584
  %3586 = vrot.lane.b32.xlu0 %v3568, 126
  %v3587 = vpop.permute.xlu0 %3586
  %3588 = vrot.lane.b32.xlu0 %v3569, 126
  %v3589 = vpop.permute.xlu0 %3588
  %3590 = vrot.lane.b32.xlu0 %v3575, 126
  %v3591 = vpop.permute.xlu0 %3590
  %3592 = vrot.lane.b32.xlu0 %v3577, 126
  %v3593 = vpop.permute.xlu0 %3592
  %3594 = vrot.lane.b32.xlu0 %v3579, 126
  %v3595 = vpop.permute.xlu0 %3594
  %3596 = vrot.lane.b32.xlu0 %v3581, 126
  %v3597 = vpop.permute.xlu0 %3596
  %3598 = vrot.lane.b32.xlu0 %v3583, 126
  %v3599 = vpop.permute.xlu0 %3598
  %3600 = vrot.lane.b32.xlu0 %v3585, 126
  %v3601 = vpop.permute.xlu0 %3600
  %3602 = vrot.lane.b32.xlu0 %v3587, 126
  %v3603 = vpop.permute.xlu0 %3602
  %3604 = vrot.lane.b32.xlu0 %v3589, 126
  %v3605 = vpop.permute.xlu0 %3604
  %vm3606 = vcmask 39936
  %v3609 = vsel %vm3606, %v3566, %v3583
  %v3613 = vsel %vm3606, %v3567, %v3585
  %v3617 = vsel %vm3606, %v3568, %v3587
  %v3621 = vsel %vm3606, %v3569, %v3589
  %v3625 = vsel %vm3606, %v3575, %v3591
  %v3629 = vsel %vm3606, %v3577, %v3593
  %v3633 = vsel %vm3606, %v3579, %v3595
  %v3637 = vsel %vm3606, %v3581, %v3597
  %v3640 = vsel %vm3606, %v3583, %v3599
  %v3643 = vsel %vm3606, %v3585, %v3601
  %v3646 = vsel %vm3606, %v3587, %v3603
  %v3649 = vsel %vm3606, %v3589, %v3605
  %v3659 = vunpack.c.l.b16 %v37
  %v3660 = vunpack.c.h.b16 %v37
  %v3661 = vunpack.c.l.b16 %v38
  %v3662 = vunpack.c.h.b16 %v38
  %v3663 = vunpack.c.l.b16 %v39
  %v3664 = vunpack.c.h.b16 %v39
  %v3665 = vunpack.c.l.b16 %v40
  %v3666 = vunpack.c.h.b16 %v40
  %v3667 = vunpack.c.l.b16 %v41
  %v3668 = vunpack.c.h.b16 %v41
  %v3669 = vunpack.c.l.b16 %v42
  %v3670 = vunpack.c.h.b16 %v42
  %v3671 = vunpack.c.l.b16 %v43
  %v3672 = vunpack.c.h.b16 %v43
  %v3673 = vunpack.c.l.b16 %v44
  %v3674 = vunpack.c.h.b16 %v44
  %v3675 = vpack.c.b16 %v3661, %v3659
  %v3676 = vpack.c.b16 %v3662, %v3660
  %v3677 = vpack.c.b16 %v3665, %v3663
  %v3678 = vpack.c.b16 %v3666, %v3664
  %v3679 = vpack.c.b16 %v3669, %v3667
  %v3680 = vpack.c.b16 %v3670, %v3668
  %v3681 = vpack.c.b16 %v3673, %v3671
  %v3682 = vpack.c.b16 %v3674, %v3672
  %vm3687 = vcmask 523264
  %v3689 = vsel %vm3687, %v3676, 0
  %v3692 = vsel %vm3687, %v3678, 0
  %v3695 = vsel %vm3687, %v3680, 0
  %v3698 = vsel %vm3687, %v3682, 0
  %3700 = vmatprep.subr.bf16.mxu0 0
  %3701 = vmatpush1.bf16.msra.mxu0 %v3637
  %3702 = vmatprep.subr.bf16.mxu0 0
  %3703 = vmatpush1.bf16.msra.mxu0 %v3633
  %3704 = vmatprep.subr.bf16.mxu0 0
  %3705 = vmatpush1.bf16.msra.mxu0 %v3629
  %3706 = vmatprep.subr.bf16.mxu0 0
  %3707 = vmatpush1.bf16.msra.mxu0 %v3625
  %3708 = vmatprep.subr.bf16.mxu0 0
  %3709 = vmatpush1.bf16.msra.mxu0 %v3621
  %3710 = vmatprep.subr.bf16.mxu0 0
  %3711 = vmatpush1.bf16.msra.mxu0 %v3617
  %3712 = vmatprep.subr.bf16.mxu0 0
  %3713 = vmatpush1.bf16.msra.mxu0 %v3613
  %3714 = vmatprep.subr.bf16.mxu0 0
  %3715 = vmatpush1.bf16.msra.mxu0 %v3609
  %3716 = vmatprep.subr.bf16.mxu0 0
  %3717 = vmatpush2.bf16.msra.mxu0 0
  %3718 = vmatprep.subr.bf16.mxu0 0
  %3719 = vmatpush2.bf16.msra.mxu0 0
  %3720 = vmatprep.subr.bf16.mxu0 0
  %3721 = vmatpush2.bf16.msra.mxu0 0
  %3722 = vmatprep.subr.bf16.mxu0 0
  %3723 = vmatpush2.bf16.msra.mxu0 0
  %3724 = vmatprep.subr.bf16.mxu0 0
  %3725 = vmatpush2.bf16.msra.mxu0 %v3649
  %3726 = vmatprep.subr.bf16.mxu0 0
  %3727 = vmatpush2.bf16.msra.mxu0 %v3646
  %3728 = vmatprep.subr.bf16.mxu0 0
  %3729 = vmatpush2.bf16.msra.mxu0 %v3643
  %3730 = vmatprep.subr.bf16.mxu0 0
  %3731 = vmatpush2.bf16.msra.mxu0 %v3640
  %3732 = vmatprep.mubr.bf16.mxu0 %v3689
  %3733 = vmatmul.mubr.bf16.gmra.mxu0 %v3675
  %v3734 = vpop.f32.mrf.mxu0
  %v3735 = vadd.f32 0.0, %v3734
  %v3736 = vpop.f32.mrf.mxu0
  %v3737 = vpop.f32.mrf.mxu0
  %v3738 = vadd.f32 0.0, %v3737
  %v3739 = vpop.f32.mrf.mxu0
  %3740 = vmatprep.mubr.bf16.mxu0 %v3692
  %3741 = vmatmul.mubr.bf16.gmra.mxu0 %v3677
  %v3742 = vpop.f32.mrf.mxu0
  %v3743 = vadd.f32 0.0, %v3742
  %v3744 = vpop.f32.mrf.mxu0
  %v3745 = vpop.f32.mrf.mxu0
  %v3746 = vadd.f32 0.0, %v3745
  %v3747 = vpop.f32.mrf.mxu0
  %3748 = vmatprep.mubr.bf16.mxu0 %v3695
  %3749 = vmatmul.mubr.bf16.gmra.mxu0 %v3679
  %v3750 = vpop.f32.mrf.mxu0
  %v3751 = vadd.f32 0.0, %v3750
  %v3752 = vpop.f32.mrf.mxu0
  %v3753 = vpop.f32.mrf.mxu0
  %v3754 = vadd.f32 0.0, %v3753
  %v3755 = vpop.f32.mrf.mxu0
  %3756 = vmatprep.mubr.bf16.mxu0 %v3698
  %3757 = vmatmul.mubr.bf16.gmra.mxu0 %v3681
  %v3758 = vpop.f32.mrf.mxu0
  %v3759 = vadd.f32 0.0, %v3758
  %v3760 = vpop.f32.mrf.mxu0
  %v3761 = vpop.f32.mrf.mxu0
  %v3762 = vadd.f32 0.0, %v3761
  %v3763 = vpop.f32.mrf.mxu0
  %3764 = vdwg.mxu0
  %vm3765 = vcmask 80896
  %v3766 = vsel %vm3765, %v3735, 0.0
  %3767 = vadd.xlane.f32.xlu0 %v3766
  %v3768 = vpop.xlane.xlu0 %3767
  %v3769 = vsel %vm3765, %v3738, 0.0
  %3770 = vadd.xlane.f32.xlu0 %v3769
  %v3771 = vpop.xlane.xlu0 %3770
  %v3772 = vsel %vm3765, %v3743, 0.0
  %3773 = vadd.xlane.f32.xlu0 %v3772
  %v3774 = vpop.xlane.xlu0 %3773
  %v3775 = vsel %vm3765, %v3746, 0.0
  %3776 = vadd.xlane.f32.xlu0 %v3775
  %v3777 = vpop.xlane.xlu0 %3776
  %v3778 = vsel %vm3765, %v3751, 0.0
  %3779 = vadd.xlane.f32.xlu0 %v3778
  %v3780 = vpop.xlane.xlu0 %3779
  %v3781 = vsel %vm3765, %v3754, 0.0
  %3782 = vadd.xlane.f32.xlu0 %v3781
  %v3783 = vpop.xlane.xlu0 %3782
  %v3784 = vsel %vm3765, %v3759, 0.0
  %3785 = vadd.xlane.f32.xlu0 %v3784
  %v3786 = vpop.xlane.xlu0 %3785
  %v3787 = vsel %vm3765, %v3762, 0.0
  %3788 = vadd.xlane.f32.xlu0 %v3787
  %v3789 = vpop.xlane.xlu0 %3788
  %v3790 = vmul.f32 %v3735, %v3735
  %v3791 = vmul.f32 %v3738, %v3738
  %v3792 = vmul.f32 %v3743, %v3743
  %v3793 = vmul.f32 %v3746, %v3746
  %v3794 = vmul.f32 %v3751, %v3751
  %v3795 = vmul.f32 %v3754, %v3754
  %v3796 = vmul.f32 %v3759, %v3759
  %v3797 = vmul.f32 %v3762, %v3762
  %v3798 = vsel %vm3765, %v3790, 0.0
  %3799 = vadd.xlane.f32.xlu0 %v3798
  %v3800 = vpop.xlane.xlu0 %3799
  %v3801 = vsel %vm3765, %v3791, 0.0
  %3802 = vadd.xlane.f32.xlu0 %v3801
  %v3803 = vpop.xlane.xlu0 %3802
  %v3804 = vsel %vm3765, %v3792, 0.0
  %3805 = vadd.xlane.f32.xlu0 %v3804
  %v3806 = vpop.xlane.xlu0 %3805
  %v3807 = vsel %vm3765, %v3793, 0.0
  %3808 = vadd.xlane.f32.xlu0 %v3807
  %v3809 = vpop.xlane.xlu0 %3808
  %v3810 = vsel %vm3765, %v3794, 0.0
  %3811 = vadd.xlane.f32.xlu0 %v3810
  %v3812 = vpop.xlane.xlu0 %3811
  %v3813 = vsel %vm3765, %v3795, 0.0
  %3814 = vadd.xlane.f32.xlu0 %v3813
  %v3815 = vpop.xlane.xlu0 %3814
  %v3816 = vsel %vm3765, %v3796, 0.0
  %3817 = vadd.xlane.f32.xlu0 %v3816
  %v3818 = vpop.xlane.xlu0 %3817
  %v3819 = vsel %vm3765, %v3797, 0.0
  %3820 = vadd.xlane.f32.xlu0 %v3819
  %v3821 = vpop.xlane.xlu0 %3820
  %v3822 = vmul.f32 %v3768, 0.1
  %v3823 = vmul.f32 %v3771, 0.1
  %v3824 = vmul.f32 %v3774, 0.1
  %v3825 = vmul.f32 %v3777, 0.1
  %v3826 = vmul.f32 %v3780, 0.1
  %v3827 = vmul.f32 %v3783, 0.1
  %v3828 = vmul.f32 %v3786, 0.1
  %v3829 = vmul.f32 %v3789, 0.1
  %v3830 = vmul.f32 %v3800, 0.1
  %v3831 = vmul.f32 %v3803, 0.1
  %v3832 = vmul.f32 %v3806, 0.1
  %v3833 = vmul.f32 %v3809, 0.1
  %v3834 = vmul.f32 %v3812, 0.1
  %v3835 = vmul.f32 %v3815, 0.1
  %v3836 = vmul.f32 %v3818, 0.1
  %v3837 = vmul.f32 %v3821, 0.1
  %v3838 = vmul.f32 %v3822, %v3822
  %v3839 = vmul.f32 %v3823, %v3823
  %v3840 = vmul.f32 %v3824, %v3824
  %v3841 = vmul.f32 %v3825, %v3825
  %v3842 = vmul.f32 %v3826, %v3826
  %v3843 = vmul.f32 %v3827, %v3827
  %v3844 = vmul.f32 %v3828, %v3828
  %v3845 = vmul.f32 %v3829, %v3829
  %v3846 = vsub.f32 %v3830, %v3838
  %v3847 = vsub.f32 %v3831, %v3839
  %v3848 = vsub.f32 %v3832, %v3840
  %v3849 = vsub.f32 %v3833, %v3841
  %v3850 = vsub.f32 %v3834, %v3842
  %v3851 = vsub.f32 %v3835, %v3843
  %v3852 = vsub.f32 %v3836, %v3844
  %v3853 = vsub.f32 %v3837, %v3845
  %v3854 = vmax.f32 %v3846, 0.0
  %v3855 = vmax.f32 %v3847, 0.0
  %v3856 = vmax.f32 %v3848, 0.0
  %v3857 = vmax.f32 %v3849, 0.0
  %v3858 = vmax.f32 %v3850, 0.0
  %v3859 = vmax.f32 %v3851, 0.0
  %v3860 = vmax.f32 %v3852, 0.0
  %v3861 = vmax.f32 %v3853, 0.0
  %v3862 = vadd.f32 %v3854, 1e-05
  %v3863 = vadd.f32 %v3855, 1e-05
  %v3864 = vadd.f32 %v3856, 1e-05
  %v3865 = vadd.f32 %v3857, 1e-05
  %v3866 = vadd.f32 %v3858, 1e-05
  %v3867 = vadd.f32 %v3859, 1e-05
  %v3868 = vadd.f32 %v3860, 1e-05
  %v3869 = vadd.f32 %v3861, 1e-05
  %v3870 = vrsqrt.pop %v3862
  %v3871 = vrsqrt.pop %v3863
  %v3872 = vrsqrt.pop %v3864
  %v3873 = vrsqrt.pop %v3865
  %v3874 = vrsqrt.pop %v3866
  %v3875 = vrsqrt.pop %v3867
  %v3876 = vrsqrt.pop %v3868
  %v3877 = vrsqrt.pop %v3869
  %v3878 = vmul.f32 %v51, %v3870
  %v3879 = vmul.f32 %v52, %v3871
  %v3880 = vmul.f32 %v53, %v3872
  %v3881 = vmul.f32 %v54, %v3873
  %v3882 = vmul.f32 %v55, %v3874
  %v3883 = vmul.f32 %v56, %v3875
  %v3884 = vmul.f32 %v57, %v3876
  %v3885 = vmul.f32 %v58, %v3877
  %v3886 = vmul.f32 %v3822, %v3878
  %v3887 = vmul.f32 %v3823, %v3879
  %v3888 = vmul.f32 %v3824, %v3880
  %v3889 = vmul.f32 %v3825, %v3881
  %v3890 = vmul.f32 %v3826, %v3882
  %v3891 = vmul.f32 %v3827, %v3883
  %v3892 = vmul.f32 %v3828, %v3884
  %v3893 = vmul.f32 %v3829, %v3885
  %3902 = vrot.lane.b32.xlu0 %v3886, 1
  %v3903 = vpop.permute.xlu0 %3902
  %3904 = vrot.lane.b32.xlu0 %v3887, 1
  %v3905 = vpop.permute.xlu0 %3904
  %3906 = vrot.lane.b32.xlu0 %v3888, 1
  %v3907 = vpop.permute.xlu0 %3906
  %3908 = vrot.lane.b32.xlu0 %v3889, 1
  %v3909 = vpop.permute.xlu0 %3908
  %3910 = vrot.lane.b32.xlu0 %v3890, 1
  %v3911 = vpop.permute.xlu0 %3910
  %3912 = vrot.lane.b32.xlu0 %v3891, 1
  %v3913 = vpop.permute.xlu0 %3912
  %3914 = vrot.lane.b32.xlu0 %v3892, 1
  %v3915 = vpop.permute.xlu0 %3914
  %3916 = vrot.lane.b32.xlu0 %v3893, 1
  %v3917 = vpop.permute.xlu0 %3916
  %v3926 = vsub.f32 %v51, %v3903
  %v3927 = vsub.f32 %v52, %v3905
  %v3928 = vsub.f32 %v53, %v3907
  %v3929 = vsub.f32 %v54, %v3909
  %v3930 = vsub.f32 %v55, %v3911
  %v3931 = vsub.f32 %v56, %v3913
  %v3932 = vsub.f32 %v57, %v3915
  %v3933 = vsub.f32 %v58, %v3917
  %3935 = vset.pattern.permute.xlu0 6
  %3936 = vperm.xlu0 %3935, %v3878
  %v3937 = vpop.permute.xlu0 %3936
  %3940 = vset.pattern.permute.xlu0 6
  %3941 = vperm.xlu0 %3940, %v3879
  %v3942 = vpop.permute.xlu0 %3941
  %3945 = vset.pattern.permute.xlu0 6
  %3946 = vperm.xlu0 %3945, %v3880
  %v3947 = vpop.permute.xlu0 %3946
  %3950 = vset.pattern.permute.xlu0 6
  %3951 = vperm.xlu0 %3950, %v3881
  %v3952 = vpop.permute.xlu0 %3951
  %3955 = vset.pattern.permute.xlu0 6
  %3956 = vperm.xlu0 %3955, %v3882
  %v3957 = vpop.permute.xlu0 %3956
  %3960 = vset.pattern.permute.xlu0 6
  %3961 = vperm.xlu0 %3960, %v3883
  %v3962 = vpop.permute.xlu0 %3961
  %3965 = vset.pattern.permute.xlu0 6
  %3966 = vperm.xlu0 %3965, %v3884
  %v3967 = vpop.permute.xlu0 %3966
  %3970 = vset.pattern.permute.xlu0 6
  %3971 = vperm.xlu0 %3970, %v3885
  %v3972 = vpop.permute.xlu0 %3971
  %v3974 = vmul.f32 %v3735, %v3937
  %v3975 = vmul.f32 %v3738, %v3942
  %v3976 = vmul.f32 %v3743, %v3947
  %v3977 = vmul.f32 %v3746, %v3952
  %v3978 = vmul.f32 %v3751, %v3957
  %v3979 = vmul.f32 %v3754, %v3962
  %v3980 = vmul.f32 %v3759, %v3967
  %v3981 = vmul.f32 %v3762, %v3972
  %3983 = vset.pattern.permute.xlu0 7
  %3984 = vperm.xlu0 %3983, %v3926
  %v3985 = vpop.permute.xlu0 %3984
  %3988 = vset.pattern.permute.xlu0 7
  %3989 = vperm.xlu0 %3988, %v3927
  %v3990 = vpop.permute.xlu0 %3989
  %3993 = vset.pattern.permute.xlu0 7
  %3994 = vperm.xlu0 %3993, %v3928
  %v3995 = vpop.permute.xlu0 %3994
  %3998 = vset.pattern.permute.xlu0 7
  %3999 = vperm.xlu0 %3998, %v3929
  %v4000 = vpop.permute.xlu0 %3999
  %4003 = vset.pattern.permute.xlu0 7
  %4004 = vperm.xlu0 %4003, %v3930
  %v4005 = vpop.permute.xlu0 %4004
  %4008 = vset.pattern.permute.xlu0 7
  %4009 = vperm.xlu0 %4008, %v3931
  %v4010 = vpop.permute.xlu0 %4009
  %4013 = vset.pattern.permute.xlu0 7
  %4014 = vperm.xlu0 %4013, %v3932
  %v4015 = vpop.permute.xlu0 %4014
  %4018 = vset.pattern.permute.xlu0 7
  %4019 = vperm.xlu0 %4018, %v3933
  %v4020 = vpop.permute.xlu0 %4019
  %v4022 = vadd.f32 %v3974, %v3985
  %v4023 = vadd.f32 %v3975, %v3990
  %v4024 = vadd.f32 %v3976, %v3995
  %v4025 = vadd.f32 %v3977, %v4000
  %v4026 = vadd.f32 %v3978, %v4005
  %v4027 = vadd.f32 %v3979, %v4010
  %v4028 = vadd.f32 %v3980, %v4015
  %v4029 = vadd.f32 %v3981, %v4020
  %v4030 = vmax.f32 %v4022, 0.0
  %v4031 = vmax.f32 %v4023, 0.0
  %v4032 = vmax.f32 %v4024, 0.0
  %v4033 = vmax.f32 %v4025, 0.0
  %v4034 = vmax.f32 %v4026, 0.0
  %v4035 = vmax.f32 %v4027, 0.0
  %v4036 = vmax.f32 %v4028, 0.0
  %v4037 = vmax.f32 %v4029, 0.0
  %4046 = vrot.lane.b32.xlu0 %v4030, 127
  %v4047 = vpop.permute.xlu0 %4046
  %4048 = vrot.lane.b32.xlu0 %v4031, 127
  %v4049 = vpop.permute.xlu0 %4048
  %4050 = vrot.lane.b32.xlu0 %v4032, 127
  %v4051 = vpop.permute.xlu0 %4050
  %4052 = vrot.lane.b32.xlu0 %v4033, 127
  %v4053 = vpop.permute.xlu0 %4052
  %4054 = vrot.lane.b32.xlu0 %v4034, 127
  %v4055 = vpop.permute.xlu0 %4054
  %4056 = vrot.lane.b32.xlu0 %v4035, 127
  %v4057 = vpop.permute.xlu0 %4056
  %4058 = vrot.lane.b32.xlu0 %v4036, 127
  %v4059 = vpop.permute.xlu0 %4058
  %4060 = vrot.lane.b32.xlu0 %v4037, 127
  %v4061 = vpop.permute.xlu0 %4060
  %v4070 = vmax.f32 %v4030, %v4047
  %v4071 = vmax.f32 %v4031, %v4049
  %v4072 = vmax.f32 %v4032, %v4051
  %v4073 = vmax.f32 %v4033, %v4053
  %v4074 = vmax.f32 %v4034, %v4055
  %v4075 = vmax.f32 %v4035, %v4057
  %v4076 = vmax.f32 %v4036, %v4059
  %v4077 = vmax.f32 %v4037, %v4061
  %4078 = vrot.lane.b32.xlu0 %v4030, 126
  %v4079 = vpop.permute.xlu0 %4078
  %4080 = vrot.lane.b32.xlu0 %v4031, 126
  %v4081 = vpop.permute.xlu0 %4080
  %4082 = vrot.lane.b32.xlu0 %v4032, 126
  %v4083 = vpop.permute.xlu0 %4082
  %4084 = vrot.lane.b32.xlu0 %v4033, 126
  %v4085 = vpop.permute.xlu0 %4084
  %4086 = vrot.lane.b32.xlu0 %v4034, 126
  %v4087 = vpop.permute.xlu0 %4086
  %4088 = vrot.lane.b32.xlu0 %v4035, 126
  %v4089 = vpop.permute.xlu0 %4088
  %4090 = vrot.lane.b32.xlu0 %v4036, 126
  %v4091 = vpop.permute.xlu0 %4090
  %4092 = vrot.lane.b32.xlu0 %v4037, 126
  %v4093 = vpop.permute.xlu0 %4092
  %v4102 = vmax.f32 %v4070, %v4079
  %v4103 = vmax.f32 %v4071, %v4081
  %v4104 = vmax.f32 %v4072, %v4083
  %v4105 = vmax.f32 %v4073, %v4085
  %v4106 = vmax.f32 %v4074, %v4087
  %v4107 = vmax.f32 %v4075, %v4089
  %v4108 = vmax.f32 %v4076, %v4091
  %v4109 = vmax.f32 %v4077, %v4093
  %4110 = vrot.lane.b32.xlu0 %v4030, 125
  %v4111 = vpop.permute.xlu0 %4110
  %4112 = vrot.lane.b32.xlu0 %v4031, 125
  %v4113 = vpop.permute.xlu0 %4112
  %4114 = vrot.lane.b32.xlu0 %v4032, 125
  %v4115 = vpop.permute.xlu0 %4114
  %4116 = vrot.lane.b32.xlu0 %v4033, 125
  %v4117 = vpop.permute.xlu0 %4116
  %4118 = vrot.lane.b32.xlu0 %v4034, 125
  %v4119 = vpop.permute.xlu0 %4118
  %4120 = vrot.lane.b32.xlu0 %v4035, 125
  %v4121 = vpop.permute.xlu0 %4120
  %4122 = vrot.lane.b32.xlu0 %v4036, 125
  %v4123 = vpop.permute.xlu0 %4122
  %4124 = vrot.lane.b32.xlu0 %v4037, 125
  %v4125 = vpop.permute.xlu0 %4124
  %v4134 = vmax.f32 %v4102, %v4111
  %v4135 = vmax.f32 %v4103, %v4113
  %v4136 = vmax.f32 %v4104, %v4115
  %v4137 = vmax.f32 %v4105, %v4117
  %v4138 = vmax.f32 %v4106, %v4119
  %v4139 = vmax.f32 %v4107, %v4121
  %v4140 = vmax.f32 %v4108, %v4123
  %v4141 = vmax.f32 %v4109, %v4125
  %v4142 = vld [vmem:[%s3 + $0x510] sm:$0xf]
  %v4143 = vpack.c.bf16 %v4135, %v4134
  %v4144 = vpack.c.bf16 %v4137, %v4136
  %v4145 = vpack.c.bf16 %v4139, %v4138
  %v4146 = vpack.c.bf16 %v4141, %v4140
  %vm4147 = vcmask 56320
  %v4149 = vsel %vm4147, %v4143, 0
  %v4152 = vsel %vm4147, %v4144, 0
  %v4155 = vsel %vm4147, %v4145, 0
  %v4158 = vsel %vm4147, %v4146, 0
  %vm4160 = vcmask 1043456
  %v4161 = vsel %vm3495, 4294967295, 65535
  %v4162 = vsel %vm4160, %v4161, 0
  %v4164 = vand.u32 %v4142, %v4162
  %4166 = vmatprep.subr.bf16.mxu0 0
  %4167 = vmatpush1.bf16.msra.mxu0 0
  %4168 = vmatprep.subr.bf16.mxu0 0
  %4169 = vmatpush1.bf16.msra.mxu0 0
  %4170 = vmatprep.subr.bf16.mxu0 0
  %4171 = vmatpush1.bf16.msra.mxu0 0
  %4172 = vmatprep.subr.bf16.mxu0 0
  %4173 = vmatpush1.bf16.msra.mxu0 0
  %4174 = vmatprep.subr.bf16.mxu0 0
  %4175 = vmatpush1.bf16.msra.mxu0 0
  %4176 = vmatprep.subr.bf16.mxu0 0
  %4177 = vmatpush1.bf16.msra.mxu0 0
  %4178 = vmatprep.subr.bf16.mxu0 0
  %4179 = vmatpush1.bf16.msra.mxu0 0
  %4180 = vmatprep.subr.bf16.mxu0 0
  %4181 = vmatpush1.bf16.msra.mxu0 %v4164
  %4182 = vmatprep.subr.bf16.mxu0 0
  %4183 = vmatpush2.bf16.msra.mxu0 0
  %4184 = vmatprep.subr.bf16.mxu0 0
  %4185 = vmatpush2.bf16.msra.mxu0 0
  %4186 = vmatprep.subr.bf16.mxu0 0
  %4187 = vmatpush2.bf16.msra.mxu0 0
  %4188 = vmatprep.subr.bf16.mxu0 0
  %4189 = vmatpush2.bf16.msra.mxu0 0
  %4190 = vmatprep.subr.bf16.mxu0 0
  %4191 = vmatpush2.bf16.msra.mxu0 0
  %4192 = vmatprep.subr.bf16.mxu0 0
  %4193 = vmatpush2.bf16.msra.mxu0 0
  %4194 = vmatprep.subr.bf16.mxu0 0
  %4195 = vmatpush2.bf16.msra.mxu0 0
  %4196 = vmatprep.subr.bf16.mxu0 0
  %4197 = vmatpush2.bf16.msra.mxu0 0
  %4198 = vmatprep.mubr.bf16.mxu0 0
  %4199 = vmatmul.mubr.bf16.gmra.mxu0 %v4149
  %v4200 = vpop.f32.mrf.mxu0
  %v4201 = vadd.f32 0.0, %v4200
  %v4202 = vpop.f32.mrf.mxu0
  %v4203 = vpop.f32.mrf.mxu0
  %v4204 = vadd.f32 0.0, %v4203
  %v4205 = vpop.f32.mrf.mxu0
  %4206 = vmatprep.mubr.bf16.mxu0 0
  %4207 = vmatmul.mubr.bf16.gmra.mxu0 %v4152
  %v4208 = vpop.f32.mrf.mxu0
  %v4209 = vadd.f32 0.0, %v4208
  %v4210 = vpop.f32.mrf.mxu0
  %v4211 = vpop.f32.mrf.mxu0
  %v4212 = vadd.f32 0.0, %v4211
  %v4213 = vpop.f32.mrf.mxu0
  %4214 = vmatprep.mubr.bf16.mxu0 0
  %4215 = vmatmul.mubr.bf16.gmra.mxu0 %v4155
  %v4216 = vpop.f32.mrf.mxu0
  %v4217 = vadd.f32 0.0, %v4216
  %v4218 = vpop.f32.mrf.mxu0
  %v4219 = vpop.f32.mrf.mxu0
  %v4220 = vadd.f32 0.0, %v4219
  %v4221 = vpop.f32.mrf.mxu0
  %4222 = vmatprep.mubr.bf16.mxu0 0
  %4223 = vmatmul.mubr.bf16.gmra.mxu0 %v4158
  %v4224 = vpop.f32.mrf.mxu0
  %v4225 = vadd.f32 0.0, %v4224
  %v4226 = vpop.f32.mrf.mxu0
  %v4227 = vpop.f32.mrf.mxu0
  %v4228 = vadd.f32 0.0, %v4227
  %v4229 = vpop.f32.mrf.mxu0
  %4230 = vdwg.mxu0
  %v4231 = vadd.f32 %v4201, 0.0
  %v4232 = vadd.f32 %v4204, 0.0
  %v4233 = vadd.f32 %v4209, 0.0
  %v4234 = vadd.f32 %v4212, 0.0
  %v4235 = vadd.f32 %v4217, 0.0
  %v4236 = vadd.f32 %v4220, 0.0
  %v4237 = vadd.f32 %v4225, 0.0
  %v4238 = vadd.f32 %v4228, 0.0
  %v4239 = vpack.c.bf16 %v4232, %v4231
  %v4240 = vpack.c.bf16 %v4234, %v4233
  %v4241 = vpack.c.bf16 %v4236, %v4235
  %v4242 = vpack.c.bf16 %v4238, %v4237
  %4244 = vset.pattern.permute.xlu0 8
  %4245 = vperm.xlu0 %4244, %v51
  %v4246 = vpop.permute.xlu0 %4245
  %4249 = vset.pattern.permute.xlu0 8
  %4250 = vperm.xlu0 %4249, %v52
  %v4251 = vpop.permute.xlu0 %4250
  %4254 = vset.pattern.permute.xlu0 8
  %4255 = vperm.xlu0 %4254, %v53
  %v4256 = vpop.permute.xlu0 %4255
  %4259 = vset.pattern.permute.xlu0 8
  %4260 = vperm.xlu0 %4259, %v54
  %v4261 = vpop.permute.xlu0 %4260
  %4264 = vset.pattern.permute.xlu0 8
  %4265 = vperm.xlu0 %4264, %v55
  %v4266 = vpop.permute.xlu0 %4265
  %v4273 = vunpack.c.l.b16 %v46
  %v4274 = vunpack.c.l.b16 %v47
  %v4275 = vunpack.c.l.b16 %v48
  %v4276 = vunpack.c.l.b16 %v49
  %v4277 = vunpack.c.l.b16 %v50
  %v4278 = vpack.c.b16 %v4274, %v4273
  %v4279 = vpack.c.b16 %v4276, %v4275
  %v4280 = vpack.c.b16 %v4277, %v4277
  %v4282 = vsel %vm3687, %v4278, 0
  %v4285 = vsel %vm3687, %v4279, 0
  %v4288 = vsel %vm3687, %v4280, 0
  %4290 = vmatprep.subr.bf16.mxu0 0
  %4291 = vmatpush1.bf16.msra.mxu0 0
  %4292 = vmatprep.subr.bf16.mxu0 0
  %4293 = vmatpush1.bf16.msra.mxu0 0
  %4294 = vmatprep.subr.bf16.mxu0 0
  %4295 = vmatpush1.bf16.msra.mxu0 0
  %4296 = vmatprep.subr.bf16.mxu0 0
  %4297 = vmatpush1.bf16.msra.mxu0 0
  %4298 = vmatprep.subr.bf16.mxu0 0
  %4299 = vmatpush1.bf16.msra.mxu0 %v4242
  %4300 = vmatprep.subr.bf16.mxu0 0
  %4301 = vmatpush1.bf16.msra.mxu0 %v4241
  %4302 = vmatprep.subr.bf16.mxu0 0
  %4303 = vmatpush1.bf16.msra.mxu0 %v4240
  %4304 = vmatprep.subr.bf16.mxu0 0
  %4305 = vmatpush1.bf16.msra.mxu0 %v4239
  %4306 = vmatprep.subr.bf16.mxu0 0
  %4307 = vmatpush2.bf16.msra.mxu0 0
  %4308 = vmatprep.subr.bf16.mxu0 0
  %4309 = vmatpush2.bf16.msra.mxu0 0
  %4310 = vmatprep.subr.bf16.mxu0 0
  %4311 = vmatpush2.bf16.msra.mxu0 0
  %4312 = vmatprep.subr.bf16.mxu0 0
  %4313 = vmatpush2.bf16.msra.mxu0 0
  %4314 = vmatprep.subr.bf16.mxu0 0
  %4315 = vmatpush2.bf16.msra.mxu0 0
  %4316 = vmatprep.subr.bf16.mxu0 0
  %4317 = vmatpush2.bf16.msra.mxu0 0
  %4318 = vmatprep.subr.bf16.mxu0 0
  %4319 = vmatpush2.bf16.msra.mxu0 0
  %4320 = vmatprep.subr.bf16.mxu0 0
  %4321 = vmatpush2.bf16.msra.mxu0 0
  %4322 = vmatprep.mubr.bf16.mxu0 0
  %4323 = vmatmul.mubr.bf16.gmra.mxu0 %v4282
  %v4324 = vpop.f32.mrf.mxu0
  %v4325 = vadd.f32 %v4246, %v4324
  %v4326 = vpop.f32.mrf.mxu0
  %v4327 = vpop.f32.mrf.mxu0
  %v4328 = vadd.f32 %v4251, %v4327
  %v4329 = vpop.f32.mrf.mxu0
  %4330 = vmatprep.mubr.bf16.mxu0 0
  %4331 = vmatmul.mubr.bf16.gmra.mxu0 %v4285
  %v4332 = vpop.f32.mrf.mxu0
  %v4333 = vadd.f32 %v4256, %v4332
  %v4334 = vpop.f32.mrf.mxu0
  %v4335 = vpop.f32.mrf.mxu0
  %v4336 = vadd.f32 %v4261, %v4335
  %v4337 = vpop.f32.mrf.mxu0
  %4338 = vmatprep.mubr.bf16.mxu0 0
  %4339 = vmatmul.mubr.bf16.gmra.mxu0 %v4288
  %v4340 = vpop.f32.mrf.mxu0
  %v4341 = vadd.f32 %v4266, %v4340
  %v4342 = vpop.f32.mrf.mxu0
  %v4343 = vpop.f32.mrf.mxu0
  %v4344 = vpop.f32.mrf.mxu0
  %4345 = vdwg.mxu0
  %vm4346 = vcmask 15360
  %v4347 = vsel %vm4346, %v4325, -inf
  %v4348 = vsel %vm4346, %v4328, -inf
  %v4349 = vsel %vm4346, %v4333, -inf
  %v4350 = vsel %vm4346, %v4336, -inf
  %vm4351 = vcmask 10240
  %v4352 = vsel %vm4351, %v4341, -inf
  %v4353 = vmax.f32 %v4347, %v4352
  %v4354 = vmax.f32 %v4353, %v4348
  %v4355 = vmax.f32 %v4349, %v4350
  %v4356 = vmax.f32 %v4354, %v4355
  %v4357 = vrot.slane %v4356, 4
  %v4358 = vmax.f32 %v4356, %v4357
  %v4359 = vrot.slane %v4358, 2
  %v4360 = vmax.f32 %v4358, %v4359
  %v4361 = vrot.slane %v4360, 1
  %v4362 = vmax.f32 %v4360, %v4361
  %v4363 = vsub.f32 %v4325, %v4362
  %v4364 = vsub.f32 %v4328, %v4362
  %v4365 = vsub.f32 %v4333, %v4362
  %v4366 = vsub.f32 %v4336, %v4362
  %v4367 = vsub.f32 %v4341, %v4362
  %v4368 = vmul.f32 %v4363, 1.442695
  %v4369 = vpow.pop %v4368
  %v4370 = vmul.f32 %v4364, 1.442695
  %v4371 = vpow.pop %v4370
  %v4372 = vmul.f32 %v4365, 1.442695
  %v4373 = vpow.pop %v4372
  %v4374 = vmul.f32 %v4366, 1.442695
  %v4375 = vpow.pop %v4374
  %v4376 = vmul.f32 %v4367, 1.442695
  %v4377 = vpow.pop %v4376
  %v4378 = vsel %vm4346, %v4369, 0.0
  %v4379 = vsel %vm4346, %v4371, 0.0
  %v4380 = vadd.f32 %v4378, %v4379
  %v4381 = vsel %vm4346, %v4373, 0.0
  %v4382 = vadd.f32 %v4380, %v4381
  %v4383 = vsel %vm4346, %v4375, 0.0
  %v4384 = vadd.f32 %v4382, %v4383
  %v4385 = vsel %vm4351, %v4377, 0.0
  %v4386 = vadd.f32 %v4384, %v4385
  %v4387 = vrot.slane %v4386, 4
  %v4388 = vadd.f32 %v4386, %v4387
  %v4389 = vrot.slane %v4388, 2
  %v4390 = vadd.f32 %v4388, %v4389
  %v4391 = vrot.slane %v4390, 1
  %v4392 = vadd.f32 %v4390, %v4391
  %v4393 = vlog2.pop %v4392
  %v4394 = vmul.f32 %v4393, 0.6931472
  %v4395 = vadd.f32 %v4362, %v4394
  %v4396 = vsub.f32 %v4325, %v4395
  %v4397 = vsub.f32 %v4328, %v4395
  %v4398 = vsub.f32 %v4333, %v4395
  %v4399 = vsub.f32 %v4336, %v4395
  %v4400 = vsub.f32 %v4341, %v4395
  %4401 = vst.msk [vmem:[%s4] sm:$0xff] %vm4346, %v4396
  %4402 = vst.msk [vmem:[%s4 + $0x8] sm:$0xff] %vm4346, %v4397
  %4403 = vst.msk [vmem:[%s4 + $0x10] sm:$0xff] %vm4346, %v4398
  %4404 = vst.msk [vmem:[%s4 + $0x18] sm:$0xff] %vm4346, %v4399
  %4405 = vst.msk [vmem:[%s4 + $0x20] sm:$0x7] %vm4351, %v4400
  // Predicated region
  $region18: #{m5_forward.1} parent=0 // pred_check
    _
  $region19: #{m5_forward.1} parent=0 // pred_check_branch
    %4407 = sbr.rel (0) target = $region21
  $region20: #{m5_forward.1} parent=0 // pred_region
    _
  $region21: #{m5_forward.1} parent=0 // pred_fallthru
    _
  // Predicated region
  $region22: #{m5_forward.1} parent=0 // pred_check
    _
  $region23: #{m5_forward.1} parent=0 // pred_check_branch
    %4409 = sbr.rel (0) target = $region25
  $region24: #{m5_forward.1} parent=0 // pred_region
    _
  $region25: #{m5_forward.1} parent=0 // pred_fallthru
    _

</llo_original>
